<compile_context>
chip_gen: v7x
topology: tpu7x:2x2x1
jax: 0.10.0
libtpu: 0.0.40
codegen_flags: <defaults>
</compile_context>

<pallas_src>
import jax
import jax.numpy as jnp
from jax.experimental import pallas as pl
from jax.experimental.pallas import tpu as pltpu

EPS = 1e-5
TILE_M_MAX = 4096  # rows per grid step (sweep 2048/4096); clamped to the problem size below


def _round_up(v, m):
    return ((v + m - 1) // m) * m


def _stats_kernel(xc_ref, w_ref, part_ref):
    # xc_ref: (tile_m, 128) bf16 patches; w_ref: (128, 128) bf16 packed weights.
    # part_ref: (1, 2, 128) f32 per-tile partials: row 0 = column sums, row 1 = column sumsq.
    acc = jnp.dot(xc_ref[...], w_ref[...], preferred_element_type=jnp.float32)
    part_ref[0, 0:1, :] = jnp.sum(acc, axis=0, keepdims=True)
    part_ref[0, 1:2, :] = jnp.sum(acc * acc, axis=0, keepdims=True)


def _norm_kernel(xc_ref, w_ref, scale_ref, shift_ref, o_ref):
    # Recompute the cheap GEMM, fused BN affine + ReLU; lane-dense (tile_m, 128) bf16 store.
    acc = jnp.dot(xc_ref[...], w_ref[...], preferred_element_type=jnp.float32)
    o_ref[...] = jnp.maximum(acc * scale_ref[...] + shift_ref[...], 0.0).astype(o_ref.dtype)


def up_conv_forward(x, w, b, gamma, beta):
    """x: (N, Cin, D, H, W) f32; w: (Cout, Cin, 3, 3, 3) f32; b/gamma/beta: (Cout,) f32.

    Returns (N, Cout, 2D, 2H, 2W) f32, matching Upsample(2)->Conv3d->BatchNorm3d(train)->ReLU.
    The conv bias `b` is a mathematical no-op under the following BatchNorm (its mean
    subtraction cancels it exactly), so it is accepted but unused.
    """
    n, cin, d, h, w_sp = x.shape
    cout = w.shape[0]
    # Packing limits of this kernel (K = 27*Cin <= 128, 8 parities x 16 padded channels = 128).
    assert 27 * cin <= 128 and cout <= 16  # TODO(synk): generalize packing for larger channels

    # ---- fold the 2x nearest upsample into per-parity effective 2x2x2 weights ----------
    # B[p, k, g]: for output parity p, conv tap k maps to original-grid offset g-1.
    B = jnp.array(
        [[[1., 0., 0.], [0., 1., 0.], [0., 1., 0.]],   # parity 0: taps hit offsets {-1, 0, 0}
         [[0., 1., 0.], [0., 1., 0.], [0., 0., 1.]]],  # parity 1: taps hit offsets {0, 0, +1}
        dtype=jnp.float32)
    # wb[gd, gh, gw, ci, pd, ph, pw, co]
    wb = jnp.einsum('oiabc,xad,ybe,zcf->defixyzo', w, B, B, B)
    wb = wb.reshape(27 * cin, 8, cout)
    wb = jnp.pad(wb, ((0, 128 - 27 * cin), (0, 0), (0, 16 - cout)))  # pad K->128, Cout->16
    wmat = wb.reshape(128, 128).astype(jnp.bfloat16)                 # col = parity*16 + channel

    # ---- im2col on the ORIGINAL (un-upsampled) grid: 3x3x3 window, K padded to 128 ------
    xcl = jnp.transpose(x, (0, 2, 3, 4, 1))                           # (N, D, H, W, Cin)
    xp = jnp.pad(xcl, ((0, 0), (1, 1), (1, 1), (1, 1), (0, 0)))
    views = [xp[:, gd:gd + d, gh:gh + h, gw:gw + w_sp, :]
             for gd in range(3) for gh in range(3) for gw in range(3)]
    m = n * d * h * w_sp
    xcol = jnp.stack(views, axis=4).reshape(m, 27 * cin)

    tile_m = min(TILE_M_MAX, _round_up(m, 8))
    m_pad = _round_up(m, tile_m)
    xcol = jnp.pad(xcol, ((0, m_pad - m), (0, 128 - 27 * cin))).astype(jnp.bfloat16)
    n_tiles = m_pad // tile_m

    # ---- pass 1: GEMM + per-tile column sum/sumsq partials (fully parallel grid) ---------
    parts = pl.pallas_call(
        _stats_kernel,
        out_shape=jax.ShapeDtypeStruct((n_tiles, 2, 128), jnp.float32),
        grid=(n_tiles,),
        in_specs=[pl.BlockSpec((tile_m, 128), lambda t: (t, 0)),
                  pl.BlockSpec((128, 128), lambda t: (0, 0))],
        out_specs=pl.BlockSpec((1, 2, 128), lambda t: (t, 0, 0)),
        compiler_params=pltpu.CompilerParams(dimension_semantics=("parallel",)),
    )(xcol, wmat)

    # ---- fold parity-column partials into per-channel BN scale/shift (tiny glue) --------
    stats = jnp.sum(parts, axis=0)                       # (2, 128), global over all M tiles
    cnt = 8.0 * m                                        # elements per channel over (N,2D,2H,2W)
    ch_sum = stats[0].reshape(8, 16).sum(axis=0)[:cout]
    ch_sumsq = stats[1].reshape(8, 16).sum(axis=0)[:cout]
    mean = ch_sum / cnt
    var = ch_sumsq / cnt - mean * mean                   # biased variance (PyTorch training mode)
    inv = gamma * jax.lax.rsqrt(var + EPS)
    shift = beta - mean * inv
    scale_col = jnp.tile(jnp.pad(inv, (0, 16 - cout)), 8).reshape(1, 128)
    shift_col = jnp.tile(jnp.pad(shift, (0, 16 - cout)), 8).reshape(1, 128)

    # ---- pass 2: GEMM (recompute) + BN affine + ReLU, lane-dense bf16 output -------------
    out_mat = pl.pallas_call(
        _norm_kernel,
        out_shape=jax.ShapeDtypeStruct((m_pad, 128), jnp.bfloat16),
        grid=(n_tiles,),
        in_specs=[pl.BlockSpec((tile_m, 128), lambda t: (t, 0)),
                  pl.BlockSpec((128, 128), lambda t: (0, 0)),
                  pl.BlockSpec((1, 128), lambda t: (0, 0)),
                  pl.BlockSpec((1, 128), lambda t: (0, 0))],
        out_specs=pl.BlockSpec((tile_m, 128), lambda t: (t, 0)),
        compiler_params=pltpu.CompilerParams(dimension_semantics=("parallel",)),
    )(xcol, wmat, scale_col, shift_col)

    # ---- scatter parity columns back onto the 2x upsampled NCDHW grid --------------------
    out = out_mat[:m].reshape(n, d, h, w_sp, 8, 16)[..., :cout]
    out = out.reshape(n, d, h, w_sp, 2, 2, 2, cout)
    out = jnp.transpose(out, (0, 7, 1, 4, 2, 5, 3, 6))   # (N, Cout, D, 2, H, 2, W, 2)
    return out.reshape(n, cout, 2 * d, 2 * h, 2 * w_sp).astype(jnp.float32)


def _reference(x, w, b, gamma, beta):
    """Pure-JAX f32 reference: repeat-upsample -> im2col conv3d -> batchnorm(train) -> relu."""
    n, cin, d, h, w_sp = x.shape
    cout = w.shape[0]
    xu = jnp.repeat(jnp.repeat(jnp.repeat(x, 2, axis=2), 2, axis=3), 2, axis=4)
    do, ho, wo = 2 * d, 2 * h, 2 * w_sp
    xcl = jnp.transpose(xu, (0, 2, 3, 4, 1))
    xpd = jnp.pad(xcl, ((0, 0), (1, 1), (1, 1), (1, 1), (0, 0)))
    pats = [xpd[:, a:a + do, bb:bb + ho, c:c + wo, :]
            for a in range(3) for bb in range(3) for c in range(3)]
    xcol = jnp.stack(pats, axis=4).reshape(n * do * ho * wo, 27 * cin)
    wm = jnp.transpose(w, (2, 3, 4, 1, 0)).reshape(27 * cin, cout)
    y = xcol @ wm + b
    mu = y.mean(axis=0)
    var = y.var(axis=0)
    y = (y - mu) * jax.lax.rsqrt(var + EPS) * gamma + beta
    y = jnp.maximum(y, 0.0).reshape(n, do, ho, wo, cout)
    return jnp.transpose(y, (0, 4, 1, 2, 3))


if __name__ == "__main__":
    key = jax.random.PRNGKey(0)
    kx, kw, kb = jax.random.split(key, 3)

    N, CH_IN, CH_OUT = 2, 4, 8
    D = H = W = 8

    x = jax.random.normal(kx, (N, CH_IN, D, H, W), dtype=jnp.float32)

    # nn.Conv3d default init: U(-s, s) with s = 1/sqrt(fan_in); BatchNorm3d: weight=1, bias=0.
    fan_in = CH_IN * 3 * 3 * 3
    s = 1.0 / float(fan_in) ** 0.5
    w = jax.random.uniform(kw, (CH_OUT, CH_IN, 3, 3, 3), jnp.float32, -s, s)
    b = jax.random.uniform(kb, (CH_OUT,), jnp.float32, -s, s)
    gamma = jnp.ones((CH_OUT,), jnp.float32)
    beta = jnp.zeros((CH_OUT,), jnp.float32)

    y = jax.jit(up_conv_forward)(x, w, b, gamma, beta)
    jax.block_until_ready(y)

    assert y.shape == (N, CH_OUT, 2 * D, 2 * H, 2 * W), y.shape
    assert y.dtype == jnp.float32
    assert bool(jnp.all(y >= 0.0))  # ReLU output

    y_ref = jax.jit(_reference)(x, w, b, gamma, beta)
    rel = float(jnp.linalg.norm(y - y_ref) / jnp.linalg.norm(y_ref))
    assert rel < 0.05, rel  # bf16 GEMM inputs / bf16 pass-2 store, f32 accumulation & epilogue

    print("KERNEL_OK")
</pallas_src>

<mosaic_0001>
module attributes {stable_mosaic.version = 11 : i64} {
  func.func @_stats_kernel(%arg0: i32, %arg1: memref<1024x128xbf16, #tpu.memory_space<vmem>>, %arg2: memref<128x128xbf16, #tpu.memory_space<vmem>>, %arg3: memref<1x2x128xf32, #tpu.memory_space<vmem>>) attributes {dimension_semantics = [#tpu.dimension_semantics<parallel>], iteration_bounds = array<i64: 1>, scalar_prefetch = 0 : i64, scratch_operands = 0 : i64, tpu.core_type = #tpu.core_type<tc>, window_params = [{transform_indices = @transform_0, window_bounds = array<i64: 1024, 128>}, {pipeline_mode = #tpu.pipeline_mode<synchronous>, transform_indices = @transform_1, window_bounds = array<i64: 128, 128>}, {transform_indices = @transform_2, window_bounds = array<i64: 1, 2, 128>}]} {
    %c0 = arith.constant 0 : index
    %c0_0 = arith.constant 0 : index
    %0 = vector.load %arg1[%c0, %c0_0] : memref<1024x128xbf16, #tpu.memory_space<vmem>>, vector<1024x128xbf16>
    %c0_1 = arith.constant 0 : index
    %c0_2 = arith.constant 0 : index
    %1 = vector.load %arg2[%c0_1, %c0_2] : memref<128x128xbf16, #tpu.memory_space<vmem>>, vector<128x128xbf16>
    %cst = arith.constant dense<0.000000e+00> : vector<1024x128xf32>
    %2 = tpu.matmul %0, %1, %cst {dimension_numbers = #tpu.dot_dimension_numbers<[1], [0], [0], [1], [0, 0, 1, 1], [], []>} : vector<1024x128xbf16>, vector<128x128xbf16>, vector<1024x128xf32> -> vector<1024x128xf32>
    %cst_3 = arith.constant dense<0.000000e+00> : vector<128xf32>
    %3 = vector.multi_reduction <add>, %2, %cst_3 [0] : vector<1024x128xf32> to vector<128xf32>
    %4 = vector.shape_cast %3 : vector<128xf32> to vector<1x128xf32>
    %c0_4 = arith.constant 0 : index
    %c0_5 = arith.constant 0 : index
    %c0_6 = arith.constant 0 : index
    %5 = vector.load %arg3[%c0_4, %c0_5, %c0_6] : memref<1x2x128xf32, #tpu.memory_space<vmem>>, vector<1x1x128xf32>
    %6 = vector.shape_cast %5 : vector<1x1x128xf32> to vector<1x128xf32>
    %7 = vector.shape_cast %4 : vector<1x128xf32> to vector<1x1x128xf32>
    tpu.vector_store %arg3[%c0_4, %c0_5, %c0_6], %7 {strides = array<i32>} : memref<1x2x128xf32, #tpu.memory_space<vmem>>, vector<1x1x128xf32>,
    %8 = arith.mulf %2, %2 : vector<1024x128xf32>
    %cst_7 = arith.constant dense<0.000000e+00> : vector<128xf32>
    %9 = vector.multi_reduction <add>, %8, %cst_7 [0] : vector<1024x128xf32> to vector<128xf32>
    %10 = vector.shape_cast %9 : vector<128xf32> to vector<1x128xf32>
    %c0_8 = arith.constant 0 : index
    %c1 = arith.constant 1 : index
    %c0_9 = arith.constant 0 : index
    %11 = vector.load %arg3[%c0_8, %c1, %c0_9] : memref<1x2x128xf32, #tpu.memory_space<vmem>>, vector<1x1x128xf32>
    %12 = vector.shape_cast %11 : vector<1x1x128xf32> to vector<1x128xf32>
    %13 = vector.shape_cast %10 : vector<1x128xf32> to vector<1x1x128xf32>
    tpu.vector_store %arg3[%c0_8, %c1, %c0_9], %13 {strides = array<i32>} : memref<1x2x128xf32, #tpu.memory_space<vmem>>, vector<1x1x128xf32>,
    return
  }
  func.func @transform_0(%arg0: i32) -> (i32, i32) {
    %c0_i32 = arith.constant 0 : i32
    %c0_i32_0 = arith.constant 0 : i32
    return %arg0, %c0_i32 : i32, i32
  }
  func.func @transform_1(%arg0: i32) -> (i32, i32) {
    %c0_i32 = arith.constant 0 : i32
    %c0_i32_0 = arith.constant 0 : i32
    %c0_i32_1 = arith.constant 0 : i32
    return %c0_i32, %c0_i32_0 : i32, i32
  }
  func.func @transform_2(%arg0: i32) -> (i32, i32, i32) {
    %c0_i32 = arith.constant 0 : i32
    %c0_i32_0 = arith.constant 0 : i32
    %c0_i32_1 = arith.constant 0 : i32
    return %arg0, %c0_i32, %c0_i32_0 : i32, i32, i32
  }
}

module attributes {stable_mosaic.version = 11 : i64} {
  func.func @_norm_kernel(%arg0: i32, %arg1: memref<1024x128xbf16, #tpu.memory_space<vmem>>, %arg2: memref<128x128xbf16, #tpu.memory_space<vmem>>, %arg3: memref<1x128xf32, #tpu.memory_space<vmem>>, %arg4: memref<1x128xf32, #tpu.memory_space<vmem>>, %arg5: memref<1024x128xbf16, #tpu.memory_space<vmem>>) attributes {dimension_semantics = [#tpu.dimension_semantics<parallel>], iteration_bounds = array<i64: 1>, scalar_prefetch = 0 : i64, scratch_operands = 0 : i64, tpu.core_type = #tpu.core_type<tc>, window_params = [{transform_indices = @transform_0, window_bounds = array<i64: 1024, 128>}, {pipeline_mode = #tpu.pipeline_mode<synchronous>, transform_indices = @transform_1, window_bounds = array<i64: 128, 128>}, {pipeline_mode = #tpu.pipeline_mode<synchronous>, transform_indices = @transform_2, window_bounds = array<i64: 1, 128>}, {pipeline_mode = #tpu.pipeline_mode<synchronous>, transform_indices = @transform_3, window_bounds = array<i64: 1, 128>}, {transform_indices = @transform_4, window_bounds = array<i64: 1024, 128>}]} {
    %c0 = arith.constant 0 : index
    %c0_0 = arith.constant 0 : index
    %0 = vector.load %arg1[%c0, %c0_0] : memref<1024x128xbf16, #tpu.memory_space<vmem>>, vector<1024x128xbf16>
    %c0_1 = arith.constant 0 : index
    %c0_2 = arith.constant 0 : index
    %1 = vector.load %arg2[%c0_1, %c0_2] : memref<128x128xbf16, #tpu.memory_space<vmem>>, vector<128x128xbf16>
    %cst = arith.constant dense<0.000000e+00> : vector<1024x128xf32>
    %2 = tpu.matmul %0, %1, %cst {dimension_numbers = #tpu.dot_dimension_numbers<[1], [0], [0], [1], [0, 0, 1, 1], [], []>} : vector<1024x128xbf16>, vector<128x128xbf16>, vector<1024x128xf32> -> vector<1024x128xf32>
    %c0_3 = arith.constant 0 : index
    %c0_4 = arith.constant 0 : index
    %3 = vector.load %arg3[%c0_3, %c0_4] : memref<1x128xf32, #tpu.memory_space<vmem>>, vector<1x128xf32>
    %4 = vector.broadcast %3 : vector<1x128xf32> to vector<1024x128xf32>
    %5 = arith.mulf %2, %4 : vector<1024x128xf32>
    %c0_5 = arith.constant 0 : index
    %c0_6 = arith.constant 0 : index
    %6 = vector.load %arg4[%c0_5, %c0_6] : memref<1x128xf32, #tpu.memory_space<vmem>>, vector<1x128xf32>
    %7 = vector.broadcast %6 : vector<1x128xf32> to vector<1024x128xf32>
    %8 = arith.addf %5, %7 : vector<1024x128xf32>
    %cst_7 = arith.constant 0.000000e+00 : f32
    %9 = vector.broadcast %cst_7 : f32 to vector<1024x128xf32>
    %10 = arith.maximumf %8, %9 : vector<1024x128xf32>
    %11 = arith.truncf %10 : vector<1024x128xf32> to vector<1024x128xbf16>
    %c0_8 = arith.constant 0 : index
    %c0_9 = arith.constant 0 : index
    %12 = vector.load %arg5[%c0_8, %c0_9] : memref<1024x128xbf16, #tpu.memory_space<vmem>>, vector<1024x128xbf16>
    tpu.vector_store %arg5[%c0_8, %c0_9], %11 {strides = array<i32>} : memref<1024x128xbf16, #tpu.memory_space<vmem>>, vector<1024x128xbf16>,
    return
  }
  func.func @transform_0(%arg0: i32) -> (i32, i32) {
    %c0_i32 = arith.constant 0 : i32
    %c0_i32_0 = arith.constant 0 : i32
    return %arg0, %c0_i32 : i32, i32
  }
  func.func @transform_1(%arg0: i32) -> (i32, i32) {
    %c0_i32 = arith.constant 0 : i32
    %c0_i32_0 = arith.constant 0 : i32
    %c0_i32_1 = arith.constant 0 : i32
    return %c0_i32, %c0_i32_0 : i32, i32
  }
  func.func @transform_2(%arg0: i32) -> (i32, i32) {
    %c0_i32 = arith.constant 0 : i32
    %c0_i32_0 = arith.constant 0 : i32
    %c0_i32_1 = arith.constant 0 : i32
    return %c0_i32, %c0_i32_0 : i32, i32
  }
  func.func @transform_3(%arg0: i32) -> (i32, i32) {
    %c0_i32 = arith.constant 0 : i32
    %c0_i32_0 = arith.constant 0 : i32
    %c0_i32_1 = arith.constant 0 : i32
    return %c0_i32, %c0_i32_0 : i32, i32
  }
  func.func @transform_4(%arg0: i32) -> (i32, i32) {
    %c0_i32 = arith.constant 0 : i32
    %c0_i32_0 = arith.constant 0 : i32
    return %arg0, %c0_i32 : i32, i32
  }
}

</mosaic_0001>

<llo_original>
// kernel: squeeze.2
$region0: #{squeeze.2}
  %s0 = inlined_call_operand.vmem [shape: f32[128], index: 0, kind: input, shape index: {}]
  %s1 = inlined_call_operand.vmem [shape: f32[8,16], index: 1, kind: output, shape index: {}]
  $region1: #{squeeze.2} parent=0
    #allocation0 [shape = 'u8[4096]{0}', space=vmem, size = 0x1000, scoped, tag = 'scoped mem for input reshape']
    %s3 = sshllo.u32 0, 1
    %v4 = vld [vmem:[%s0] sm:%s3]
    %5 = vst [vmem:[#allocation0] sm:%s3] %v4
    %v6 = vld [vmem:[#allocation0] sm:$0x1]
    %vm7 = vcmask 130048
    %8 = vst.msk [vmem:[%s1] sm:$0x1] %vm7, %v6
    %v9 = vld [vmem:[#allocation0] sm:$0x1]
    %10 = vrot.lane.b32.xlu0 %v9, 112
    %v11 = vpop.permute.xlu0 %10
    %vm12 = vcmask 130048
    %s13 = scalar_lea.vmem %s1, 1
    %14 = vst.msk [vmem:[%s13] sm:$0x1] %vm12, %v11
    %v15 = vld [vmem:[#allocation0] sm:$0x1]
    %16 = vrot.lane.b32.xlu0 %v15, 96
    %v17 = vpop.permute.xlu0 %16
    %vm18 = vcmask 130048
    %s19 = scalar_lea.vmem %s1, 2
    %20 = vst.msk [vmem:[%s19] sm:$0x1] %vm18, %v17
    %v21 = vld [vmem:[#allocation0] sm:$0x1]
    %22 = vrot.lane.b32.xlu0 %v21, 80
    %v23 = vpop.permute.xlu0 %22
    %vm24 = vcmask 130048
    %s25 = scalar_lea.vmem %s1, 3
    %26 = vst.msk [vmem:[%s25] sm:$0x1] %vm24, %v23
    %v27 = vld [vmem:[#allocation0] sm:$0x1]
    %28 = vrot.lane.b32.xlu0 %v27, 64
    %v29 = vpop.permute.xlu0 %28
    %vm30 = vcmask 130048
    %s31 = scalar_lea.vmem %s1, 4
    %32 = vst.msk [vmem:[%s31] sm:$0x1] %vm30, %v29
    %v33 = vld [vmem:[#allocation0] sm:$0x1]
    %34 = vrot.lane.b32.xlu0 %v33, 48
    %v35 = vpop.permute.xlu0 %34
    %vm36 = vcmask 130048
    %s37 = scalar_lea.vmem %s1, 5
    %38 = vst.msk [vmem:[%s37] sm:$0x1] %vm36, %v35
    %v39 = vld [vmem:[#allocation0] sm:$0x1]
    %40 = vrot.lane.b32.xlu0 %v39, 32
    %v41 = vpop.permute.xlu0 %40
    %vm42 = vcmask 130048
    %s43 = scalar_lea.vmem %s1, 6
    %44 = vst.msk [vmem:[%s43] sm:$0x1] %vm42, %v41
    %v45 = vld [vmem:[#allocation0] sm:$0x1]
    %46 = vrot.lane.b32.xlu0 %v45, 16
    %v47 = vpop.permute.xlu0 %46
    %vm48 = vcmask 130048
    %s49 = scalar_lea.vmem %s1, 7
    %50 = vst.msk [vmem:[%s49] sm:$0x1] %vm48, %v47

// kernel: tile.13
$region0: #{tile.13}
  #allocation0 [shape = 's32[1]{0}', space=sflag, size = 0x4, scoped, tag = 'scoped memory for tile.13']
  %s0 = inlined_call_operand.vmem [shape: f32[16], index: 0, kind: input, shape index: {}]
  %s1 = inlined_call_operand.vmem [shape: f32[8,16], index: 1, kind: output, shape index: {}]
  // Predicated region
  $region2: #{tile.13} parent=0 // pred_check
    _
  $region3: #{tile.13} parent=0 // pred_check_branch
    %3 = sbr.rel (0) target = $region5
  $region4: #{tile.13} parent=0 // pred_region
    _
  $region5: #{tile.13} parent=0 // pred_fallthru
    _
  %v4 = vld [vmem:[%s0] ss:$0 sm:$0xff]
  %5 = vst [vmem:[%s1] sm:$0xff] %v4

// kernel: tile.14
$region0: #{tile.14}
  %s0 = inlined_call_operand.vmem [shape: f32[8,16], index: 0, kind: input, shape index: {}]
  %s1 = inlined_call_operand.vmem [shape: f32[1,128], index: 1, kind: output, shape index: {}]
  $region1: #{tile.14} parent=0
    #allocation0 [shape = 'u8[4096]{0}', space=vmem, size = 0x1000, scoped, tag = 'scoped mem for output reshape']
    %v2 = vld [vmem:[%s0] sm:$0x1]
    %vm3 = vcmask 130048
    %4 = vst.msk [vmem:[#allocation0] sm:$0x1] %vm3, %v2
    %s5 = scalar_lea.vmem %s0, 7
    %v6 = vld [vmem:[%s5] sm:$0x1]
    %7 = vrot.lane.b32.xlu0 %v6, 112
    %v8 = vpop.permute.xlu0 %7
    %vm9 = vcmask 1048448
    %10 = vst.msk [vmem:[#allocation0] sm:$0x1] %vm9, %v8
    %s11 = scalar_lea.vmem %s0, 6
    %v12 = vld [vmem:[%s11] sm:$0x1]
    %13 = vrot.lane.b32.xlu0 %v12, 96
    %v14 = vpop.permute.xlu0 %13
    %vm15 = vcmask 917248
    %16 = vst.msk [vmem:[#allocation0] sm:$0x1] %vm15, %v14
    %s17 = scalar_lea.vmem %s0, 5
    %v18 = vld [vmem:[%s17] sm:$0x1]
    %19 = vrot.lane.b32.xlu0 %v18, 80
    %v20 = vpop.permute.xlu0 %19
    %vm21 = vcmask 786048
    %22 = vst.msk [vmem:[#allocation0] sm:$0x1] %vm21, %v20
    %s23 = scalar_lea.vmem %s0, 4
    %v24 = vld [vmem:[%s23] sm:$0x1]
    %25 = vrot.lane.b32.xlu0 %v24, 64
    %v26 = vpop.permute.xlu0 %25
    %vm27 = vcmask 654848
    %28 = vst.msk [vmem:[#allocation0] sm:$0x1] %vm27, %v26
    %s29 = scalar_lea.vmem %s0, 3
    %v30 = vld [vmem:[%s29] sm:$0x1]
    %31 = vrot.lane.b32.xlu0 %v30, 48
    %v32 = vpop.permute.xlu0 %31
    %vm33 = vcmask 523648
    %34 = vst.msk [vmem:[#allocation0] sm:$0x1] %vm33, %v32
    %s35 = scalar_lea.vmem %s0, 2
    %v36 = vld [vmem:[%s35] sm:$0x1]
    %37 = vrot.lane.b32.xlu0 %v36, 32
    %v38 = vpop.permute.xlu0 %37
    %vm39 = vcmask 392448
    %40 = vst.msk [vmem:[#allocation0] sm:$0x1] %vm39, %v38
    %s41 = scalar_lea.vmem %s0, 1
    %v42 = vld [vmem:[%s41] sm:$0x1]
    %43 = vrot.lane.b32.xlu0 %v42, 16
    %v44 = vpop.permute.xlu0 %43
    %vm45 = vcmask 261248
    %46 = vst.msk [vmem:[#allocation0] sm:$0x1] %vm45, %v44
    %s48 = sshllo.u32 0, 1
    %v50 = vld [vmem:[#allocation0] sm:%s48]
    %s51 = sshllo.u32 0, 1
    %52 = vst [vmem:[%s1] sm:%s51] %v50

// kernel: up_conv_forward.2
$region0: #{up_conv_forward.2}
  #allocation0 [shape = 'u32[]', space=smem, size = 0x4, offset = 0x4, fixed_abs, tag = 'smem constant byte address 0x4 - core index']
  #allocation1 [shape = 'u32[144,128]{1,0:T(1,128)}', space=vmem, size = 0x12000, scoped, tag = 'internal scratch']
  %s0 = inlined_call_operand.vmem [shape: bf16[1024,128], index: 0, kind: input, shape index: {}]
  %s1 = inlined_call_operand.vmem [shape: bf16[128,128], index: 1, kind: input, shape index: {}]
  %s2 = inlined_call_operand.vmem [shape: f32[1,2,128], index: 2, kind: output, shape index: {}]
  %s3 = sld [smem:[#allocation0]]
  $region18: #{up_conv_forward.2} parent=0
    _
  %s5 = ssub.s32 1, %s3
  %s6 = scalar_select 0, %s5, %s3
  // Predicated region
  $region2: #{up_conv_forward.2} parent=0 // pred_check
    _
  $region3: #{up_conv_forward.2} parent=0 // pred_check_branch
    %8 = sbr.rel (0) target = $region5
  $region4: #{up_conv_forward.2} parent=0 // pred_region
    _
  $region5: #{up_conv_forward.2} parent=0 // pred_fallthru
    _
  // Predicated region
  $region6: #{up_conv_forward.2} parent=0 // pred_check
    _
  $region7: #{up_conv_forward.2} parent=0 // pred_check_branch
    %10 = sbr.rel (0) target = $region9
  $region8: #{up_conv_forward.2} parent=0 // pred_region
    _
  $region9: #{up_conv_forward.2} parent=0 // pred_fallthru
    _
  %v12 = vld [vmem:[%s0] sm:$0xf]
  %v13 = vld [vmem:[%s0 + $0x4] sm:$0xf]
  %v14 = vld [vmem:[%s0 + $0x8] sm:$0xf]
  %v15 = vld [vmem:[%s0 + $0xc] sm:$0xf]
  %v16 = vld [vmem:[%s0 + $0x10] sm:$0xf]
  %v17 = vld [vmem:[%s0 + $0x14] sm:$0xf]
  %v18 = vld [vmem:[%s0 + $0x18] sm:$0xf]
  %v19 = vld [vmem:[%s0 + $0x1c] sm:$0xf]
  %v20 = vld [vmem:[%s0 + $0x20] sm:$0xf]
  %v21 = vld [vmem:[%s0 + $0x24] sm:$0xf]
  %v22 = vld [vmem:[%s0 + $0x28] sm:$0xf]
  %v23 = vld [vmem:[%s0 + $0x2c] sm:$0xf]
  %v24 = vld [vmem:[%s0 + $0x30] sm:$0xf]
  %v25 = vld [vmem:[%s0 + $0x34] sm:$0xf]
  %v26 = vld [vmem:[%s0 + $0x38] sm:$0xf]
  %v27 = vld [vmem:[%s0 + $0x3c] sm:$0xf]
  %v28 = vld [vmem:[%s0 + $0x40] sm:$0xf]
  %v29 = vld [vmem:[%s0 + $0x44] sm:$0xf]
  %v30 = vld [vmem:[%s0 + $0x48] sm:$0xf]
  %v31 = vld [vmem:[%s0 + $0x4c] sm:$0xf]
  %v32 = vld [vmem:[%s0 + $0x50] sm:$0xf]
  %v33 = vld [vmem:[%s0 + $0x54] sm:$0xf]
  %v34 = vld [vmem:[%s0 + $0x58] sm:$0xf]
  %v35 = vld [vmem:[%s0 + $0x5c] sm:$0xf]
  %v36 = vld [vmem:[%s0 + $0x60] sm:$0xf]
  %v37 = vld [vmem:[%s0 + $0x64] sm:$0xf]
  %v38 = vld [vmem:[%s0 + $0x68] sm:$0xf]
  %v39 = vld [vmem:[%s0 + $0x6c] sm:$0xf]
  %v40 = vld [vmem:[%s0 + $0x70] sm:$0xf]
  %v41 = vld [vmem:[%s0 + $0x74] sm:$0xf]
  %v42 = vld [vmem:[%s0 + $0x78] sm:$0xf]
  %v43 = vld [vmem:[%s0 + $0x7c] sm:$0xf]
  %v44 = vld [vmem:[%s0 + $0x80] sm:$0xf]
  %v45 = vld [vmem:[%s0 + $0x84] sm:$0xf]
  %v46 = vld [vmem:[%s0 + $0x88] sm:$0xf]
  %v47 = vld [vmem:[%s0 + $0x8c] sm:$0xf]
  %v48 = vld [vmem:[%s0 + $0x90] sm:$0xf]
  %v49 = vld [vmem:[%s0 + $0x94] sm:$0xf]
  %v50 = vld [vmem:[%s0 + $0x98] sm:$0xf]
  %v51 = vld [vmem:[%s0 + $0x9c] sm:$0xf]
  %v52 = vld [vmem:[%s0 + $0xa0] sm:$0xf]
  %v53 = vld [vmem:[%s0 + $0xa4] sm:$0xf]
  %v54 = vld [vmem:[%s0 + $0xa8] sm:$0xf]
  %v55 = vld [vmem:[%s0 + $0xac] sm:$0xf]
  %v56 = vld [vmem:[%s0 + $0xb0] sm:$0xf]
  %v57 = vld [vmem:[%s0 + $0xb4] sm:$0xf]
  %v58 = vld [vmem:[%s0 + $0xb8] sm:$0xf]
  %v59 = vld [vmem:[%s0 + $0xbc] sm:$0xf]
  %v60 = vld [vmem:[%s0 + $0xc0] sm:$0xf]
  %v61 = vld [vmem:[%s0 + $0xc4] sm:$0xf]
  %v62 = vld [vmem:[%s0 + $0xc8] sm:$0xf]
  %v63 = vld [vmem:[%s0 + $0xcc] sm:$0xf]
  %v64 = vld [vmem:[%s0 + $0xd0] sm:$0xf]
  %v65 = vld [vmem:[%s0 + $0xd4] sm:$0xf]
  %v66 = vld [vmem:[%s0 + $0xd8] sm:$0xf]
  %v67 = vld [vmem:[%s0 + $0xdc] sm:$0xf]
  %v68 = vld [vmem:[%s0 + $0xe0] sm:$0xf]
  %v69 = vld [vmem:[%s0 + $0xe4] sm:$0xf]
  %v70 = vld [vmem:[%s0 + $0xe8] sm:$0xf]
  %v71 = vld [vmem:[%s0 + $0xec] sm:$0xf]
  %v72 = vld [vmem:[%s0 + $0xf0] sm:$0xf]
  %v73 = vld [vmem:[%s0 + $0xf4] sm:$0xf]
  %v74 = vld [vmem:[%s0 + $0xf8] sm:$0xf]
  %v75 = vld [vmem:[%s0 + $0xfc] sm:$0xf]
  %v76 = vld [vmem:[%s0 + $0x100] sm:$0xf]
  %v77 = vld [vmem:[%s0 + $0x104] sm:$0xf]
  %v78 = vld [vmem:[%s0 + $0x108] sm:$0xf]
  %v79 = vld [vmem:[%s0 + $0x10c] sm:$0xf]
  %v80 = vld [vmem:[%s0 + $0x110] sm:$0xf]
  %v81 = vld [vmem:[%s0 + $0x114] sm:$0xf]
  %v82 = vld [vmem:[%s0 + $0x118] sm:$0xf]
  %v83 = vld [vmem:[%s0 + $0x11c] sm:$0xf]
  %v84 = vld [vmem:[%s0 + $0x120] sm:$0xf]
  %v85 = vld [vmem:[%s0 + $0x124] sm:$0xf]
  %v86 = vld [vmem:[%s0 + $0x128] sm:$0xf]
  %v87 = vld [vmem:[%s0 + $0x12c] sm:$0xf]
  %v88 = vld [vmem:[%s0 + $0x130] sm:$0xf]
  %v89 = vld [vmem:[%s0 + $0x134] sm:$0xf]
  %v90 = vld [vmem:[%s0 + $0x138] sm:$0xf]
  %v91 = vld [vmem:[%s0 + $0x13c] sm:$0xf]
  %v92 = vld [vmem:[%s0 + $0x140] sm:$0xf]
  %v93 = vld [vmem:[%s0 + $0x144] sm:$0xf]
  %v94 = vld [vmem:[%s0 + $0x148] sm:$0xf]
  %v95 = vld [vmem:[%s0 + $0x14c] sm:$0xf]
  %v96 = vld [vmem:[%s0 + $0x150] sm:$0xf]
  %v97 = vld [vmem:[%s0 + $0x154] sm:$0xf]
  %v98 = vld [vmem:[%s0 + $0x158] sm:$0xf]
  %v99 = vld [vmem:[%s0 + $0x15c] sm:$0xf]
  %v100 = vld [vmem:[%s0 + $0x160] sm:$0xf]
  %v101 = vld [vmem:[%s0 + $0x164] sm:$0xf]
  %v102 = vld [vmem:[%s0 + $0x168] sm:$0xf]
  %v103 = vld [vmem:[%s0 + $0x16c] sm:$0xf]
  %v104 = vld [vmem:[%s0 + $0x170] sm:$0xf]
  %v105 = vld [vmem:[%s0 + $0x174] sm:$0xf]
  %v106 = vld [vmem:[%s0 + $0x178] sm:$0xf]
  %v107 = vld [vmem:[%s0 + $0x17c] sm:$0xf]
  %v108 = vld [vmem:[%s0 + $0x180] sm:$0xf]
  %v109 = vld [vmem:[%s0 + $0x184] sm:$0xf]
  %v110 = vld [vmem:[%s0 + $0x188] sm:$0xf]
  %v111 = vld [vmem:[%s0 + $0x18c] sm:$0xf]
  %v112 = vld [vmem:[%s0 + $0x190] sm:$0xf]
  %v113 = vld [vmem:[%s0 + $0x194] sm:$0xf]
  %v114 = vld [vmem:[%s0 + $0x198] sm:$0xf]
  %v115 = vld [vmem:[%s0 + $0x19c] sm:$0xf]
  %v116 = vld [vmem:[%s0 + $0x1a0] sm:$0xf]
  %v117 = vld [vmem:[%s0 + $0x1a4] sm:$0xf]
  %v118 = vld [vmem:[%s0 + $0x1a8] sm:$0xf]
  %v119 = vld [vmem:[%s0 + $0x1ac] sm:$0xf]
  %v120 = vld [vmem:[%s0 + $0x1b0] sm:$0xf]
  %v121 = vld [vmem:[%s0 + $0x1b4] sm:$0xf]
  %v122 = vld [vmem:[%s0 + $0x1b8] sm:$0xf]
  %v123 = vld [vmem:[%s0 + $0x1bc] sm:$0xf]
  %v124 = vld [vmem:[%s0 + $0x1c0] sm:$0xf]
  %v125 = vld [vmem:[%s0 + $0x1c4] sm:$0xf]
  %v126 = vld [vmem:[%s0 + $0x1c8] sm:$0xf]
  %v127 = vld [vmem:[%s0 + $0x1cc] sm:$0xf]
  %v128 = vld [vmem:[%s0 + $0x1d0] sm:$0xf]
  %v129 = vld [vmem:[%s0 + $0x1d4] sm:$0xf]
  %v130 = vld [vmem:[%s0 + $0x1d8] sm:$0xf]
  %v131 = vld [vmem:[%s0 + $0x1dc] sm:$0xf]
  %v132 = vld [vmem:[%s0 + $0x1e0] sm:$0xf]
  %v133 = vld [vmem:[%s0 + $0x1e4] sm:$0xf]
  %v134 = vld [vmem:[%s0 + $0x1e8] sm:$0xf]
  %v135 = vld [vmem:[%s0 + $0x1ec] sm:$0xf]
  %v136 = vld [vmem:[%s0 + $0x1f0] sm:$0xf]
  %v137 = vld [vmem:[%s0 + $0x1f4] sm:$0xf]
  %v138 = vld [vmem:[%s0 + $0x1f8] sm:$0xf]
  %v139 = vld [vmem:[%s0 + $0x1fc] sm:$0xf]
  %v140 = vld [vmem:[%s1] sm:$0xf]
  %v141 = vld [vmem:[%s1 + $0x4] sm:$0xf]
  %v142 = vld [vmem:[%s1 + $0x8] sm:$0xf]
  %v143 = vld [vmem:[%s1 + $0xc] sm:$0xf]
  %v144 = vld [vmem:[%s1 + $0x10] sm:$0xf]
  %v145 = vld [vmem:[%s1 + $0x14] sm:$0xf]
  %v146 = vld [vmem:[%s1 + $0x18] sm:$0xf]
  %v147 = vld [vmem:[%s1 + $0x1c] sm:$0xf]
  %v148 = vld [vmem:[%s1 + $0x20] sm:$0xf]
  %v149 = vld [vmem:[%s1 + $0x24] sm:$0xf]
  %v150 = vld [vmem:[%s1 + $0x28] sm:$0xf]
  %v151 = vld [vmem:[%s1 + $0x2c] sm:$0xf]
  %v152 = vld [vmem:[%s1 + $0x30] sm:$0xf]
  %v153 = vld [vmem:[%s1 + $0x34] sm:$0xf]
  %v154 = vld [vmem:[%s1 + $0x38] sm:$0xf]
  %v155 = vld [vmem:[%s1 + $0x3c] sm:$0xf]
  %v284 = vunpack.c.l.b16 %v12
  %v285 = vunpack.c.l.b16 %v13
  %v286 = vunpack.c.l.b16 %v14
  %v287 = vunpack.c.l.b16 %v15
  %v288 = vunpack.c.l.b16 %v16
  %v289 = vunpack.c.l.b16 %v17
  %v290 = vunpack.c.l.b16 %v18
  %v291 = vunpack.c.l.b16 %v19
  %v292 = vunpack.c.l.b16 %v20
  %v293 = vunpack.c.l.b16 %v21
  %v294 = vunpack.c.l.b16 %v22
  %v295 = vunpack.c.l.b16 %v23
  %v296 = vunpack.c.l.b16 %v24
  %v297 = vunpack.c.l.b16 %v25
  %v298 = vunpack.c.l.b16 %v26
  %v299 = vunpack.c.l.b16 %v27
  %v300 = vunpack.c.l.b16 %v28
  %v301 = vunpack.c.l.b16 %v29
  %v302 = vunpack.c.l.b16 %v30
  %v303 = vunpack.c.l.b16 %v31
  %v304 = vunpack.c.l.b16 %v32
  %v305 = vunpack.c.l.b16 %v33
  %v306 = vunpack.c.l.b16 %v34
  %v307 = vunpack.c.l.b16 %v35
  %v308 = vunpack.c.l.b16 %v36
  %v309 = vunpack.c.l.b16 %v37
  %v310 = vunpack.c.l.b16 %v38
  %v311 = vunpack.c.l.b16 %v39
  %v312 = vunpack.c.l.b16 %v40
  %v313 = vunpack.c.l.b16 %v41
  %v314 = vunpack.c.l.b16 %v42
  %v315 = vunpack.c.l.b16 %v43
  %v316 = vunpack.c.l.b16 %v44
  %v317 = vunpack.c.l.b16 %v45
  %v318 = vunpack.c.l.b16 %v46
  %v319 = vunpack.c.l.b16 %v47
  %v320 = vunpack.c.l.b16 %v48
  %v321 = vunpack.c.l.b16 %v49
  %v322 = vunpack.c.l.b16 %v50
  %v323 = vunpack.c.l.b16 %v51
  %v324 = vunpack.c.l.b16 %v52
  %v325 = vunpack.c.l.b16 %v53
  %v326 = vunpack.c.l.b16 %v54
  %v327 = vunpack.c.l.b16 %v55
  %v328 = vunpack.c.l.b16 %v56
  %v329 = vunpack.c.l.b16 %v57
  %v330 = vunpack.c.l.b16 %v58
  %v331 = vunpack.c.l.b16 %v59
  %v332 = vunpack.c.l.b16 %v60
  %v333 = vunpack.c.l.b16 %v61
  %v334 = vunpack.c.l.b16 %v62
  %v335 = vunpack.c.l.b16 %v63
  %v336 = vunpack.c.l.b16 %v64
  %v337 = vunpack.c.l.b16 %v65
  %v338 = vunpack.c.l.b16 %v66
  %v339 = vunpack.c.l.b16 %v67
  %v340 = vunpack.c.l.b16 %v68
  %v341 = vunpack.c.l.b16 %v69
  %v342 = vunpack.c.l.b16 %v70
  %v343 = vunpack.c.l.b16 %v71
  %v344 = vunpack.c.l.b16 %v72
  %v345 = vunpack.c.l.b16 %v73
  %v346 = vunpack.c.l.b16 %v74
  %v347 = vunpack.c.l.b16 %v75
  %v348 = vunpack.c.l.b16 %v76
  %v349 = vunpack.c.l.b16 %v77
  %v350 = vunpack.c.l.b16 %v78
  %v351 = vunpack.c.l.b16 %v79
  %v352 = vunpack.c.l.b16 %v80
  %v353 = vunpack.c.l.b16 %v81
  %v354 = vunpack.c.l.b16 %v82
  %v355 = vunpack.c.l.b16 %v83
  %v356 = vunpack.c.l.b16 %v84
  %v357 = vunpack.c.l.b16 %v85
  %v358 = vunpack.c.l.b16 %v86
  %v359 = vunpack.c.l.b16 %v87
  %v360 = vunpack.c.l.b16 %v88
  %v361 = vunpack.c.l.b16 %v89
  %v362 = vunpack.c.l.b16 %v90
  %v363 = vunpack.c.l.b16 %v91
  %v364 = vunpack.c.l.b16 %v92
  %v365 = vunpack.c.l.b16 %v93
  %v366 = vunpack.c.l.b16 %v94
  %v367 = vunpack.c.l.b16 %v95
  %v368 = vunpack.c.l.b16 %v96
  %v369 = vunpack.c.l.b16 %v97
  %v370 = vunpack.c.l.b16 %v98
  %v371 = vunpack.c.l.b16 %v99
  %v372 = vunpack.c.l.b16 %v100
  %v373 = vunpack.c.l.b16 %v101
  %v374 = vunpack.c.l.b16 %v102
  %v375 = vunpack.c.l.b16 %v103
  %v376 = vunpack.c.l.b16 %v104
  %v377 = vunpack.c.l.b16 %v105
  %v378 = vunpack.c.l.b16 %v106
  %v379 = vunpack.c.l.b16 %v107
  %v380 = vunpack.c.l.b16 %v108
  %v381 = vunpack.c.l.b16 %v109
  %v382 = vunpack.c.l.b16 %v110
  %v383 = vunpack.c.l.b16 %v111
  %v384 = vunpack.c.l.b16 %v112
  %v385 = vunpack.c.l.b16 %v113
  %v386 = vunpack.c.l.b16 %v114
  %v387 = vunpack.c.l.b16 %v115
  %v388 = vunpack.c.l.b16 %v116
  %v389 = vunpack.c.l.b16 %v117
  %v390 = vunpack.c.l.b16 %v118
  %v391 = vunpack.c.l.b16 %v119
  %v392 = vunpack.c.l.b16 %v120
  %v393 = vunpack.c.l.b16 %v121
  %v394 = vunpack.c.l.b16 %v122
  %v395 = vunpack.c.l.b16 %v123
  %v396 = vunpack.c.l.b16 %v124
  %v397 = vunpack.c.l.b16 %v125
  %v398 = vunpack.c.l.b16 %v126
  %v399 = vunpack.c.l.b16 %v127
  %v400 = vunpack.c.l.b16 %v128
  %v401 = vunpack.c.l.b16 %v129
  %v402 = vunpack.c.l.b16 %v130
  %v403 = vunpack.c.l.b16 %v131
  %v404 = vunpack.c.l.b16 %v132
  %v405 = vunpack.c.l.b16 %v133
  %v406 = vunpack.c.l.b16 %v134
  %v407 = vunpack.c.l.b16 %v135
  %v408 = vunpack.c.l.b16 %v136
  %v409 = vunpack.c.l.b16 %v137
  %v410 = vunpack.c.l.b16 %v138
  %v411 = vunpack.c.l.b16 %v139
  %v412 = vpack.c.b16 %v285, %v284
  %v413 = vpack.c.b16 %v287, %v286
  %v414 = vpack.c.b16 %v289, %v288
  %v415 = vpack.c.b16 %v291, %v290
  %v416 = vpack.c.b16 %v293, %v292
  %v417 = vpack.c.b16 %v295, %v294
  %v418 = vpack.c.b16 %v297, %v296
  %v419 = vpack.c.b16 %v299, %v298
  %v420 = vpack.c.b16 %v301, %v300
  %v421 = vpack.c.b16 %v303, %v302
  %v422 = vpack.c.b16 %v305, %v304
  %v423 = vpack.c.b16 %v307, %v306
  %v424 = vpack.c.b16 %v309, %v308
  %v425 = vpack.c.b16 %v311, %v310
  %v426 = vpack.c.b16 %v313, %v312
  %v427 = vpack.c.b16 %v315, %v314
  %v428 = vpack.c.b16 %v317, %v316
  %v429 = vpack.c.b16 %v319, %v318
  %v430 = vpack.c.b16 %v321, %v320
  %v431 = vpack.c.b16 %v323, %v322
  %v432 = vpack.c.b16 %v325, %v324
  %v433 = vpack.c.b16 %v327, %v326
  %v434 = vpack.c.b16 %v329, %v328
  %v435 = vpack.c.b16 %v331, %v330
  %v436 = vpack.c.b16 %v333, %v332
  %v437 = vpack.c.b16 %v335, %v334
  %v438 = vpack.c.b16 %v337, %v336
  %v439 = vpack.c.b16 %v339, %v338
  %v440 = vpack.c.b16 %v341, %v340
  %v441 = vpack.c.b16 %v343, %v342
  %v442 = vpack.c.b16 %v345, %v344
  %v443 = vpack.c.b16 %v347, %v346
  %v444 = vpack.c.b16 %v349, %v348
  %v445 = vpack.c.b16 %v351, %v350
  %v446 = vpack.c.b16 %v353, %v352
  %v447 = vpack.c.b16 %v355, %v354
  %v448 = vpack.c.b16 %v357, %v356
  %v449 = vpack.c.b16 %v359, %v358
  %v450 = vpack.c.b16 %v361, %v360
  %v451 = vpack.c.b16 %v363, %v362
  %v452 = vpack.c.b16 %v365, %v364
  %v453 = vpack.c.b16 %v367, %v366
  %v454 = vpack.c.b16 %v369, %v368
  %v455 = vpack.c.b16 %v371, %v370
  %v456 = vpack.c.b16 %v373, %v372
  %v457 = vpack.c.b16 %v375, %v374
  %v458 = vpack.c.b16 %v377, %v376
  %v459 = vpack.c.b16 %v379, %v378
  %v460 = vpack.c.b16 %v381, %v380
  %v461 = vpack.c.b16 %v383, %v382
  %v462 = vpack.c.b16 %v385, %v384
  %v463 = vpack.c.b16 %v387, %v386
  %v464 = vpack.c.b16 %v389, %v388
  %v465 = vpack.c.b16 %v391, %v390
  %v466 = vpack.c.b16 %v393, %v392
  %v467 = vpack.c.b16 %v395, %v394
  %v468 = vpack.c.b16 %v397, %v396
  %v469 = vpack.c.b16 %v399, %v398
  %v470 = vpack.c.b16 %v401, %v400
  %v471 = vpack.c.b16 %v403, %v402
  %v472 = vpack.c.b16 %v405, %v404
  %v473 = vpack.c.b16 %v407, %v406
  %v474 = vpack.c.b16 %v409, %v408
  %v475 = vpack.c.b16 %v411, %v410
  %v556 = vunpack.c.l.b16 %v140
  %v557 = vunpack.c.l.b16 %v141
  %v558 = vunpack.c.l.b16 %v142
  %v559 = vunpack.c.l.b16 %v143
  %v560 = vunpack.c.l.b16 %v144
  %v561 = vunpack.c.l.b16 %v145
  %v562 = vunpack.c.l.b16 %v146
  %v563 = vunpack.c.l.b16 %v147
  %v564 = vunpack.c.l.b16 %v148
  %v565 = vunpack.c.l.b16 %v149
  %v566 = vunpack.c.l.b16 %v150
  %v567 = vunpack.c.l.b16 %v151
  %v568 = vunpack.c.l.b16 %v152
  %v569 = vunpack.c.l.b16 %v153
  %v570 = vunpack.c.l.b16 %v154
  %v571 = vunpack.c.l.b16 %v155
  %v572 = vpack.c.b16 %v557, %v556
  %v573 = vpack.c.b16 %v559, %v558
  %v574 = vpack.c.b16 %v561, %v560
  %v575 = vpack.c.b16 %v563, %v562
  %v576 = vpack.c.b16 %v565, %v564
  %v577 = vpack.c.b16 %v567, %v566
  %v578 = vpack.c.b16 %v569, %v568
  %v579 = vpack.c.b16 %v571, %v570
  %588 = vmatprep.subr.bf16.mxu0 0
  %589 = vmatpush1.bf16.msra.mxu0 %v572
  %590 = vmatprep.subr.bf16.mxu0 0
  %591 = vmatpush1.bf16.msra.mxu0 %v573
  %592 = vmatprep.subr.bf16.mxu0 0
  %593 = vmatpush1.bf16.msra.mxu0 %v574
  %594 = vmatprep.subr.bf16.mxu0 0
  %595 = vmatpush1.bf16.msra.mxu0 %v575
  %596 = vmatprep.subr.bf16.mxu0 0
  %597 = vmatpush1.bf16.msra.mxu0 %v576
  %598 = vmatprep.subr.bf16.mxu0 0
  %599 = vmatpush1.bf16.msra.mxu0 %v577
  %600 = vmatprep.subr.bf16.mxu0 0
  %601 = vmatpush1.bf16.msra.mxu0 %v578
  %602 = vmatprep.subr.bf16.mxu0 0
  %603 = vmatpush1.bf16.msra.mxu0 %v579
  %604 = vmatprep.subr.bf16.mxu0 0
  %605 = vmatpush1.bf16.msra.mxu0 0
  %606 = vmatprep.subr.bf16.mxu0 0
  %607 = vmatpush1.bf16.msra.mxu0 0
  %608 = vmatprep.subr.bf16.mxu0 0
  %609 = vmatpush1.bf16.msra.mxu0 0
  %610 = vmatprep.subr.bf16.mxu0 0
  %611 = vmatpush1.bf16.msra.mxu0 0
  %612 = vmatprep.subr.bf16.mxu0 0
  %613 = vmatpush1.bf16.msra.mxu0 0
  %614 = vmatprep.subr.bf16.mxu0 0
  %615 = vmatpush1.bf16.msra.mxu0 0
  %616 = vmatprep.subr.bf16.mxu0 0
  %617 = vmatpush1.bf16.msra.mxu0 0
  %618 = vmatprep.subr.bf16.mxu0 0
  %619 = vmatpush1.bf16.msra.mxu0 0
  %620 = vmatprep.mubr.bf16.mxu0 0
  %621 = vmatmul.mubr.bf16.gmra.mrb[0].mxu0 %v412
  %v622 = vpop.f32.mrb[0].mxu0
  %v623 = vadd.f32 0.0, %v622
  %v624 = vpop.f32.mrb[0].mxu0
  %v625 = vpop.f32.mrb[0].mxu0
  %v626 = vadd.f32 0.0, %v625
  %v627 = vpop.f32.mrb[0].mxu0
  %628 = vmatprep.mubr.bf16.mxu0 0
  %629 = vmatmul.mubr.bf16.gmra.mrb[0].mxu0 %v413
  %v630 = vpop.f32.mrb[0].mxu0
  %v631 = vadd.f32 0.0, %v630
  %v632 = vpop.f32.mrb[0].mxu0
  %v633 = vpop.f32.mrb[0].mxu0
  %v634 = vadd.f32 0.0, %v633
  %v635 = vpop.f32.mrb[0].mxu0
  %636 = vmatprep.mubr.bf16.mxu0 0
  %637 = vmatmul.mubr.bf16.gmra.mrb[0].mxu0 %v414
  %v638 = vpop.f32.mrb[0].mxu0
  %v639 = vadd.f32 0.0, %v638
  %v640 = vpop.f32.mrb[0].mxu0
  %v641 = vpop.f32.mrb[0].mxu0
  %v642 = vadd.f32 0.0, %v641
  %v643 = vpop.f32.mrb[0].mxu0
  %644 = vmatprep.mubr.bf16.mxu0 0
  %645 = vmatmul.mubr.bf16.gmra.mrb[0].mxu0 %v415
  %v646 = vpop.f32.mrb[0].mxu0
  %v647 = vadd.f32 0.0, %v646
  %v648 = vpop.f32.mrb[0].mxu0
  %v649 = vpop.f32.mrb[0].mxu0
  %v650 = vadd.f32 0.0, %v649
  %v651 = vpop.f32.mrb[0].mxu0
  %652 = vmatprep.mubr.bf16.mxu0 0
  %653 = vmatmul.mubr.bf16.gmra.mrb[0].mxu0 %v416
  %v654 = vpop.f32.mrb[0].mxu0
  %v655 = vadd.f32 0.0, %v654
  %v656 = vpop.f32.mrb[0].mxu0
  %v657 = vpop.f32.mrb[0].mxu0
  %v658 = vadd.f32 0.0, %v657
  %v659 = vpop.f32.mrb[0].mxu0
  %660 = vmatprep.mubr.bf16.mxu0 0
  %661 = vmatmul.mubr.bf16.gmra.mrb[0].mxu0 %v417
  %v662 = vpop.f32.mrb[0].mxu0
  %v663 = vadd.f32 0.0, %v662
  %v664 = vpop.f32.mrb[0].mxu0
  %v665 = vpop.f32.mrb[0].mxu0
  %v666 = vadd.f32 0.0, %v665
  %v667 = vpop.f32.mrb[0].mxu0
  %668 = vmatprep.mubr.bf16.mxu0 0
  %669 = vmatmul.mubr.bf16.gmra.mrb[0].mxu0 %v418
  %v670 = vpop.f32.mrb[0].mxu0
  %v671 = vadd.f32 0.0, %v670
  %v672 = vpop.f32.mrb[0].mxu0
  %v673 = vpop.f32.mrb[0].mxu0
  %v674 = vadd.f32 0.0, %v673
  %v675 = vpop.f32.mrb[0].mxu0
  %676 = vmatprep.mubr.bf16.mxu0 0
  %677 = vmatmul.mubr.bf16.gmra.mrb[0].mxu0 %v419
  %v678 = vpop.f32.mrb[0].mxu0
  %v679 = vadd.f32 0.0, %v678
  %v680 = vpop.f32.mrb[0].mxu0
  %v681 = vpop.f32.mrb[0].mxu0
  %v682 = vadd.f32 0.0, %v681
  %v683 = vpop.f32.mrb[0].mxu0
  %684 = vmatprep.mubr.bf16.mxu0 0
  %685 = vmatmul.mubr.bf16.gmra.mrb[0].mxu0 %v420
  %v686 = vpop.f32.mrb[0].mxu0
  %v687 = vadd.f32 0.0, %v686
  %v688 = vpop.f32.mrb[0].mxu0
  %v689 = vpop.f32.mrb[0].mxu0
  %v690 = vadd.f32 0.0, %v689
  %v691 = vpop.f32.mrb[0].mxu0
  %692 = vmatprep.mubr.bf16.mxu0 0
  %693 = vmatmul.mubr.bf16.gmra.mrb[0].mxu0 %v421
  %v694 = vpop.f32.mrb[0].mxu0
  %v695 = vadd.f32 0.0, %v694
  %v696 = vpop.f32.mrb[0].mxu0
  %v697 = vpop.f32.mrb[0].mxu0
  %v698 = vadd.f32 0.0, %v697
  %v699 = vpop.f32.mrb[0].mxu0
  %700 = vmatprep.mubr.bf16.mxu0 0
  %701 = vmatmul.mubr.bf16.gmra.mrb[0].mxu0 %v422
  %v702 = vpop.f32.mrb[0].mxu0
  %v703 = vadd.f32 0.0, %v702
  %v704 = vpop.f32.mrb[0].mxu0
  %v705 = vpop.f32.mrb[0].mxu0
  %v706 = vadd.f32 0.0, %v705
  %v707 = vpop.f32.mrb[0].mxu0
  %708 = vmatprep.mubr.bf16.mxu0 0
  %709 = vmatmul.mubr.bf16.gmra.mrb[0].mxu0 %v423
  %v710 = vpop.f32.mrb[0].mxu0
  %v711 = vadd.f32 0.0, %v710
  %v712 = vpop.f32.mrb[0].mxu0
  %v713 = vpop.f32.mrb[0].mxu0
  %v714 = vadd.f32 0.0, %v713
  %v715 = vpop.f32.mrb[0].mxu0
  %716 = vmatprep.mubr.bf16.mxu0 0
  %717 = vmatmul.mubr.bf16.gmra.mrb[0].mxu0 %v424
  %v718 = vpop.f32.mrb[0].mxu0
  %v719 = vadd.f32 0.0, %v718
  %v720 = vpop.f32.mrb[0].mxu0
  %v721 = vpop.f32.mrb[0].mxu0
  %v722 = vadd.f32 0.0, %v721
  %v723 = vpop.f32.mrb[0].mxu0
  %724 = vmatprep.mubr.bf16.mxu0 0
  %725 = vmatmul.mubr.bf16.gmra.mrb[0].mxu0 %v425
  %v726 = vpop.f32.mrb[0].mxu0
  %v727 = vadd.f32 0.0, %v726
  %v728 = vpop.f32.mrb[0].mxu0
  %v729 = vpop.f32.mrb[0].mxu0
  %v730 = vadd.f32 0.0, %v729
  %v731 = vpop.f32.mrb[0].mxu0
  %732 = vmatprep.mubr.bf16.mxu0 0
  %733 = vmatmul.mubr.bf16.gmra.mrb[0].mxu0 %v426
  %v734 = vpop.f32.mrb[0].mxu0
  %v735 = vadd.f32 0.0, %v734
  %v736 = vpop.f32.mrb[0].mxu0
  %v737 = vpop.f32.mrb[0].mxu0
  %v738 = vadd.f32 0.0, %v737
  %v739 = vpop.f32.mrb[0].mxu0
  %740 = vmatprep.mubr.bf16.mxu0 0
  %741 = vmatmul.mubr.bf16.gmra.mrb[0].mxu0 %v427
  %v742 = vpop.f32.mrb[0].mxu0
  %v743 = vadd.f32 0.0, %v742
  %v744 = vpop.f32.mrb[0].mxu0
  %v745 = vpop.f32.mrb[0].mxu0
  %v746 = vadd.f32 0.0, %v745
  %v747 = vpop.f32.mrb[0].mxu0
  %748 = vmatprep.mubr.bf16.mxu0 0
  %749 = vmatmul.mubr.bf16.gmra.mrb[0].mxu0 %v428
  %v750 = vpop.f32.mrb[0].mxu0
  %v751 = vadd.f32 0.0, %v750
  %v752 = vpop.f32.mrb[0].mxu0
  %v753 = vpop.f32.mrb[0].mxu0
  %v754 = vadd.f32 0.0, %v753
  %v755 = vpop.f32.mrb[0].mxu0
  %756 = vmatprep.mubr.bf16.mxu0 0
  %757 = vmatmul.mubr.bf16.gmra.mrb[0].mxu0 %v429
  %v758 = vpop.f32.mrb[0].mxu0
  %v759 = vadd.f32 0.0, %v758
  %v760 = vpop.f32.mrb[0].mxu0
  %v761 = vpop.f32.mrb[0].mxu0
  %v762 = vadd.f32 0.0, %v761
  %v763 = vpop.f32.mrb[0].mxu0
  %764 = vmatprep.mubr.bf16.mxu0 0
  %765 = vmatmul.mubr.bf16.gmra.mrb[0].mxu0 %v430
  %v766 = vpop.f32.mrb[0].mxu0
  %v767 = vadd.f32 0.0, %v766
  %v768 = vpop.f32.mrb[0].mxu0
  %v769 = vpop.f32.mrb[0].mxu0
  %v770 = vadd.f32 0.0, %v769
  %v771 = vpop.f32.mrb[0].mxu0
  %772 = vmatprep.mubr.bf16.mxu0 0
  %773 = vmatmul.mubr.bf16.gmra.mrb[0].mxu0 %v431
  %v774 = vpop.f32.mrb[0].mxu0
  %v775 = vadd.f32 0.0, %v774
  %v776 = vpop.f32.mrb[0].mxu0
  %v777 = vpop.f32.mrb[0].mxu0
  %v778 = vadd.f32 0.0, %v777
  %v779 = vpop.f32.mrb[0].mxu0
  %780 = vmatprep.mubr.bf16.mxu0 0
  %781 = vmatmul.mubr.bf16.gmra.mrb[0].mxu0 %v432
  %v782 = vpop.f32.mrb[0].mxu0
  %v783 = vadd.f32 0.0, %v782
  %v784 = vpop.f32.mrb[0].mxu0
  %v785 = vpop.f32.mrb[0].mxu0
  %v786 = vadd.f32 0.0, %v785
  %v787 = vpop.f32.mrb[0].mxu0
  %788 = vmatprep.mubr.bf16.mxu0 0
  %789 = vmatmul.mubr.bf16.gmra.mrb[0].mxu0 %v433
  %v790 = vpop.f32.mrb[0].mxu0
  %v791 = vadd.f32 0.0, %v790
  %v792 = vpop.f32.mrb[0].mxu0
  %v793 = vpop.f32.mrb[0].mxu0
  %v794 = vadd.f32 0.0, %v793
  %v795 = vpop.f32.mrb[0].mxu0
  %796 = vmatprep.mubr.bf16.mxu0 0
  %797 = vmatmul.mubr.bf16.gmra.mrb[0].mxu0 %v434
  %v798 = vpop.f32.mrb[0].mxu0
  %v799 = vadd.f32 0.0, %v798
  %v800 = vpop.f32.mrb[0].mxu0
  %v801 = vpop.f32.mrb[0].mxu0
  %v802 = vadd.f32 0.0, %v801
  %v803 = vpop.f32.mrb[0].mxu0
  %804 = vmatprep.mubr.bf16.mxu0 0
  %805 = vmatmul.mubr.bf16.gmra.mrb[0].mxu0 %v435
  %v806 = vpop.f32.mrb[0].mxu0
  %v807 = vadd.f32 0.0, %v806
  %v808 = vpop.f32.mrb[0].mxu0
  %v809 = vpop.f32.mrb[0].mxu0
  %v810 = vadd.f32 0.0, %v809
  %v811 = vpop.f32.mrb[0].mxu0
  %812 = vmatprep.mubr.bf16.mxu0 0
  %813 = vmatmul.mubr.bf16.gmra.mrb[0].mxu0 %v436
  %v814 = vpop.f32.mrb[0].mxu0
  %v815 = vadd.f32 0.0, %v814
  %v816 = vpop.f32.mrb[0].mxu0
  %v817 = vpop.f32.mrb[0].mxu0
  %v818 = vadd.f32 0.0, %v817
  %v819 = vpop.f32.mrb[0].mxu0
  %820 = vmatprep.mubr.bf16.mxu0 0
  %821 = vmatmul.mubr.bf16.gmra.mrb[0].mxu0 %v437
  %v822 = vpop.f32.mrb[0].mxu0
  %v823 = vadd.f32 0.0, %v822
  %v824 = vpop.f32.mrb[0].mxu0
  %v825 = vpop.f32.mrb[0].mxu0
  %v826 = vadd.f32 0.0, %v825
  %v827 = vpop.f32.mrb[0].mxu0
  %828 = vmatprep.mubr.bf16.mxu0 0
  %829 = vmatmul.mubr.bf16.gmra.mrb[0].mxu0 %v438
  %v830 = vpop.f32.mrb[0].mxu0
  %v831 = vadd.f32 0.0, %v830
  %v832 = vpop.f32.mrb[0].mxu0
  %v833 = vpop.f32.mrb[0].mxu0
  %v834 = vadd.f32 0.0, %v833
  %v835 = vpop.f32.mrb[0].mxu0
  %836 = vmatprep.mubr.bf16.mxu0 0
  %837 = vmatmul.mubr.bf16.gmra.mrb[0].mxu0 %v439
  %v838 = vpop.f32.mrb[0].mxu0
  %v839 = vadd.f32 0.0, %v838
  %v840 = vpop.f32.mrb[0].mxu0
  %v841 = vpop.f32.mrb[0].mxu0
  %v842 = vadd.f32 0.0, %v841
  %v843 = vpop.f32.mrb[0].mxu0
  %844 = vmatprep.mubr.bf16.mxu0 0
  %845 = vmatmul.mubr.bf16.gmra.mrb[0].mxu0 %v440
  %v846 = vpop.f32.mrb[0].mxu0
  %v847 = vadd.f32 0.0, %v846
  %v848 = vpop.f32.mrb[0].mxu0
  %v849 = vpop.f32.mrb[0].mxu0
  %v850 = vadd.f32 0.0, %v849
  %v851 = vpop.f32.mrb[0].mxu0
  %852 = vmatprep.mubr.bf16.mxu0 0
  %853 = vmatmul.mubr.bf16.gmra.mrb[0].mxu0 %v441
  %v854 = vpop.f32.mrb[0].mxu0
  %v855 = vadd.f32 0.0, %v854
  %v856 = vpop.f32.mrb[0].mxu0
  %v857 = vpop.f32.mrb[0].mxu0
  %v858 = vadd.f32 0.0, %v857
  %v859 = vpop.f32.mrb[0].mxu0
  %860 = vmatprep.mubr.bf16.mxu0 0
  %861 = vmatmul.mubr.bf16.gmra.mrb[0].mxu0 %v442
  %v862 = vpop.f32.mrb[0].mxu0
  %v863 = vadd.f32 0.0, %v862
  %v864 = vpop.f32.mrb[0].mxu0
  %v865 = vpop.f32.mrb[0].mxu0
  %v866 = vadd.f32 0.0, %v865
  %v867 = vpop.f32.mrb[0].mxu0
  %868 = vmatprep.mubr.bf16.mxu0 0
  %869 = vmatmul.mubr.bf16.gmra.mrb[0].mxu0 %v443
  %v870 = vpop.f32.mrb[0].mxu0
  %v871 = vadd.f32 0.0, %v870
  %v872 = vpop.f32.mrb[0].mxu0
  %v873 = vpop.f32.mrb[0].mxu0
  %v874 = vadd.f32 0.0, %v873
  %v875 = vpop.f32.mrb[0].mxu0
  %876 = vmatprep.mubr.bf16.mxu0 0
  %877 = vmatmul.mubr.bf16.gmra.mrb[0].mxu0 %v444
  %v878 = vpop.f32.mrb[0].mxu0
  %v879 = vadd.f32 0.0, %v878
  %v880 = vpop.f32.mrb[0].mxu0
  %v881 = vpop.f32.mrb[0].mxu0
  %v882 = vadd.f32 0.0, %v881
  %v883 = vpop.f32.mrb[0].mxu0
  %884 = vmatprep.mubr.bf16.mxu0 0
  %885 = vmatmul.mubr.bf16.gmra.mrb[0].mxu0 %v445
  %v886 = vpop.f32.mrb[0].mxu0
  %v887 = vadd.f32 0.0, %v886
  %v888 = vpop.f32.mrb[0].mxu0
  %v889 = vpop.f32.mrb[0].mxu0
  %v890 = vadd.f32 0.0, %v889
  %v891 = vpop.f32.mrb[0].mxu0
  %892 = vmatprep.mubr.bf16.mxu0 0
  %893 = vmatmul.mubr.bf16.gmra.mrb[0].mxu0 %v446
  %v894 = vpop.f32.mrb[0].mxu0
  %v895 = vadd.f32 0.0, %v894
  %v896 = vpop.f32.mrb[0].mxu0
  %v897 = vpop.f32.mrb[0].mxu0
  %v898 = vadd.f32 0.0, %v897
  %v899 = vpop.f32.mrb[0].mxu0
  %900 = vmatprep.mubr.bf16.mxu0 0
  %901 = vmatmul.mubr.bf16.gmra.mrb[0].mxu0 %v447
  %v902 = vpop.f32.mrb[0].mxu0
  %v903 = vadd.f32 0.0, %v902
  %v904 = vpop.f32.mrb[0].mxu0
  %v905 = vpop.f32.mrb[0].mxu0
  %v906 = vadd.f32 0.0, %v905
  %v907 = vpop.f32.mrb[0].mxu0
  %908 = vmatprep.mubr.bf16.mxu0 0
  %909 = vmatmul.mubr.bf16.gmra.mrb[0].mxu0 %v448
  %v910 = vpop.f32.mrb[0].mxu0
  %v911 = vadd.f32 0.0, %v910
  %v912 = vpop.f32.mrb[0].mxu0
  %v913 = vpop.f32.mrb[0].mxu0
  %v914 = vadd.f32 0.0, %v913
  %v915 = vpop.f32.mrb[0].mxu0
  %916 = vmatprep.mubr.bf16.mxu0 0
  %917 = vmatmul.mubr.bf16.gmra.mrb[0].mxu0 %v449
  %v918 = vpop.f32.mrb[0].mxu0
  %v919 = vadd.f32 0.0, %v918
  %v920 = vpop.f32.mrb[0].mxu0
  %v921 = vpop.f32.mrb[0].mxu0
  %v922 = vadd.f32 0.0, %v921
  %v923 = vpop.f32.mrb[0].mxu0
  %924 = vmatprep.mubr.bf16.mxu0 0
  %925 = vmatmul.mubr.bf16.gmra.mrb[0].mxu0 %v450
  %v926 = vpop.f32.mrb[0].mxu0
  %v927 = vadd.f32 0.0, %v926
  %v928 = vpop.f32.mrb[0].mxu0
  %v929 = vpop.f32.mrb[0].mxu0
  %v930 = vadd.f32 0.0, %v929
  %v931 = vpop.f32.mrb[0].mxu0
  %932 = vmatprep.mubr.bf16.mxu0 0
  %933 = vmatmul.mubr.bf16.gmra.mrb[0].mxu0 %v451
  %v934 = vpop.f32.mrb[0].mxu0
  %v935 = vadd.f32 0.0, %v934
  %v936 = vpop.f32.mrb[0].mxu0
  %v937 = vpop.f32.mrb[0].mxu0
  %v938 = vadd.f32 0.0, %v937
  %v939 = vpop.f32.mrb[0].mxu0
  %940 = vmatprep.mubr.bf16.mxu0 0
  %941 = vmatmul.mubr.bf16.gmra.mrb[0].mxu0 %v452
  %v942 = vpop.f32.mrb[0].mxu0
  %v943 = vadd.f32 0.0, %v942
  %v944 = vpop.f32.mrb[0].mxu0
  %v945 = vpop.f32.mrb[0].mxu0
  %v946 = vadd.f32 0.0, %v945
  %v947 = vpop.f32.mrb[0].mxu0
  %948 = vmatprep.mubr.bf16.mxu0 0
  %949 = vmatmul.mubr.bf16.gmra.mrb[0].mxu0 %v453
  %v950 = vpop.f32.mrb[0].mxu0
  %v951 = vadd.f32 0.0, %v950
  %v952 = vpop.f32.mrb[0].mxu0
  %v953 = vpop.f32.mrb[0].mxu0
  %v954 = vadd.f32 0.0, %v953
  %v955 = vpop.f32.mrb[0].mxu0
  %956 = vmatprep.mubr.bf16.mxu0 0
  %957 = vmatmul.mubr.bf16.gmra.mrb[0].mxu0 %v454
  %v958 = vpop.f32.mrb[0].mxu0
  %v959 = vadd.f32 0.0, %v958
  %v960 = vpop.f32.mrb[0].mxu0
  %v961 = vpop.f32.mrb[0].mxu0
  %v962 = vadd.f32 0.0, %v961
  %v963 = vpop.f32.mrb[0].mxu0
  %964 = vmatprep.mubr.bf16.mxu0 0
  %965 = vmatmul.mubr.bf16.gmra.mrb[0].mxu0 %v455
  %v966 = vpop.f32.mrb[0].mxu0
  %v967 = vadd.f32 0.0, %v966
  %v968 = vpop.f32.mrb[0].mxu0
  %v969 = vpop.f32.mrb[0].mxu0
  %v970 = vadd.f32 0.0, %v969
  %v971 = vpop.f32.mrb[0].mxu0
  %972 = vmatprep.mubr.bf16.mxu0 0
  %973 = vmatmul.mubr.bf16.gmra.mrb[0].mxu0 %v456
  %v974 = vpop.f32.mrb[0].mxu0
  %v975 = vadd.f32 0.0, %v974
  %v976 = vpop.f32.mrb[0].mxu0
  %v977 = vpop.f32.mrb[0].mxu0
  %v978 = vadd.f32 0.0, %v977
  %v979 = vpop.f32.mrb[0].mxu0
  %980 = vmatprep.mubr.bf16.mxu0 0
  %981 = vmatmul.mubr.bf16.gmra.mrb[0].mxu0 %v457
  %v982 = vpop.f32.mrb[0].mxu0
  %v983 = vadd.f32 0.0, %v982
  %v984 = vpop.f32.mrb[0].mxu0
  %v985 = vpop.f32.mrb[0].mxu0
  %v986 = vadd.f32 0.0, %v985
  %v987 = vpop.f32.mrb[0].mxu0
  %988 = vmatprep.mubr.bf16.mxu0 0
  %989 = vmatmul.mubr.bf16.gmra.mrb[0].mxu0 %v458
  %v990 = vpop.f32.mrb[0].mxu0
  %v991 = vadd.f32 0.0, %v990
  %v992 = vpop.f32.mrb[0].mxu0
  %v993 = vpop.f32.mrb[0].mxu0
  %v994 = vadd.f32 0.0, %v993
  %v995 = vpop.f32.mrb[0].mxu0
  %996 = vmatprep.mubr.bf16.mxu0 0
  %997 = vmatmul.mubr.bf16.gmra.mrb[0].mxu0 %v459
  %v998 = vpop.f32.mrb[0].mxu0
  %v999 = vadd.f32 0.0, %v998
  %v1000 = vpop.f32.mrb[0].mxu0
  %v1001 = vpop.f32.mrb[0].mxu0
  %v1002 = vadd.f32 0.0, %v1001
  %v1003 = vpop.f32.mrb[0].mxu0
  %1004 = vmatprep.mubr.bf16.mxu0 0
  %1005 = vmatmul.mubr.bf16.gmra.mrb[0].mxu0 %v460
  %v1006 = vpop.f32.mrb[0].mxu0
  %v1007 = vadd.f32 0.0, %v1006
  %v1008 = vpop.f32.mrb[0].mxu0
  %v1009 = vpop.f32.mrb[0].mxu0
  %v1010 = vadd.f32 0.0, %v1009
  %v1011 = vpop.f32.mrb[0].mxu0
  %1012 = vmatprep.mubr.bf16.mxu0 0
  %1013 = vmatmul.mubr.bf16.gmra.mrb[0].mxu0 %v461
  %v1014 = vpop.f32.mrb[0].mxu0
  %v1015 = vadd.f32 0.0, %v1014
  %v1016 = vpop.f32.mrb[0].mxu0
  %v1017 = vpop.f32.mrb[0].mxu0
  %v1018 = vadd.f32 0.0, %v1017
  %v1019 = vpop.f32.mrb[0].mxu0
  %1020 = vmatprep.mubr.bf16.mxu0 0
  %1021 = vmatmul.mubr.bf16.gmra.mrb[0].mxu0 %v462
  %v1022 = vpop.f32.mrb[0].mxu0
  %v1023 = vadd.f32 0.0, %v1022
  %v1024 = vpop.f32.mrb[0].mxu0
  %v1025 = vpop.f32.mrb[0].mxu0
  %v1026 = vadd.f32 0.0, %v1025
  %v1027 = vpop.f32.mrb[0].mxu0
  %1028 = vmatprep.mubr.bf16.mxu0 0
  %1029 = vmatmul.mubr.bf16.gmra.mrb[0].mxu0 %v463
  %v1030 = vpop.f32.mrb[0].mxu0
  %v1031 = vadd.f32 0.0, %v1030
  %v1032 = vpop.f32.mrb[0].mxu0
  %v1033 = vpop.f32.mrb[0].mxu0
  %v1034 = vadd.f32 0.0, %v1033
  %v1035 = vpop.f32.mrb[0].mxu0
  %1036 = vmatprep.mubr.bf16.mxu0 0
  %1037 = vmatmul.mubr.bf16.gmra.mrb[0].mxu0 %v464
  %v1038 = vpop.f32.mrb[0].mxu0
  %v1039 = vadd.f32 0.0, %v1038
  %v1040 = vpop.f32.mrb[0].mxu0
  %v1041 = vpop.f32.mrb[0].mxu0
  %v1042 = vadd.f32 0.0, %v1041
  %v1043 = vpop.f32.mrb[0].mxu0
  %1044 = vmatprep.mubr.bf16.mxu0 0
  %1045 = vmatmul.mubr.bf16.gmra.mrb[0].mxu0 %v465
  %v1046 = vpop.f32.mrb[0].mxu0
  %v1047 = vadd.f32 0.0, %v1046
  %v1048 = vpop.f32.mrb[0].mxu0
  %v1049 = vpop.f32.mrb[0].mxu0
  %v1050 = vadd.f32 0.0, %v1049
  %v1051 = vpop.f32.mrb[0].mxu0
  %1052 = vmatprep.mubr.bf16.mxu0 0
  %1053 = vmatmul.mubr.bf16.gmra.mrb[0].mxu0 %v466
  %v1054 = vpop.f32.mrb[0].mxu0
  %v1055 = vadd.f32 0.0, %v1054
  %v1056 = vpop.f32.mrb[0].mxu0
  %v1057 = vpop.f32.mrb[0].mxu0
  %v1058 = vadd.f32 0.0, %v1057
  %v1059 = vpop.f32.mrb[0].mxu0
  %1060 = vmatprep.mubr.bf16.mxu0 0
  %1061 = vmatmul.mubr.bf16.gmra.mrb[0].mxu0 %v467
  %v1062 = vpop.f32.mrb[0].mxu0
  %v1063 = vadd.f32 0.0, %v1062
  %v1064 = vpop.f32.mrb[0].mxu0
  %v1065 = vpop.f32.mrb[0].mxu0
  %v1066 = vadd.f32 0.0, %v1065
  %v1067 = vpop.f32.mrb[0].mxu0
  %1068 = vmatprep.mubr.bf16.mxu0 0
  %1069 = vmatmul.mubr.bf16.gmra.mrb[0].mxu0 %v468
  %v1070 = vpop.f32.mrb[0].mxu0
  %v1071 = vadd.f32 0.0, %v1070
  %v1072 = vpop.f32.mrb[0].mxu0
  %v1073 = vpop.f32.mrb[0].mxu0
  %v1074 = vadd.f32 0.0, %v1073
  %v1075 = vpop.f32.mrb[0].mxu0
  %1076 = vmatprep.mubr.bf16.mxu0 0
  %1077 = vmatmul.mubr.bf16.gmra.mrb[0].mxu0 %v469
  %v1078 = vpop.f32.mrb[0].mxu0
  %v1079 = vadd.f32 0.0, %v1078
  %v1080 = vpop.f32.mrb[0].mxu0
  %v1081 = vpop.f32.mrb[0].mxu0
  %v1082 = vadd.f32 0.0, %v1081
  %v1083 = vpop.f32.mrb[0].mxu0
  %1084 = vmatprep.mubr.bf16.mxu0 0
  %1085 = vmatmul.mubr.bf16.gmra.mrb[0].mxu0 %v470
  %v1086 = vpop.f32.mrb[0].mxu0
  %v1087 = vadd.f32 0.0, %v1086
  %v1088 = vpop.f32.mrb[0].mxu0
  %v1089 = vpop.f32.mrb[0].mxu0
  %v1090 = vadd.f32 0.0, %v1089
  %v1091 = vpop.f32.mrb[0].mxu0
  %1092 = vmatprep.mubr.bf16.mxu0 0
  %1093 = vmatmul.mubr.bf16.gmra.mrb[0].mxu0 %v471
  %v1094 = vpop.f32.mrb[0].mxu0
  %v1095 = vadd.f32 0.0, %v1094
  %v1096 = vpop.f32.mrb[0].mxu0
  %v1097 = vpop.f32.mrb[0].mxu0
  %v1098 = vadd.f32 0.0, %v1097
  %v1099 = vpop.f32.mrb[0].mxu0
  %1100 = vmatprep.mubr.bf16.mxu0 0
  %1101 = vmatmul.mubr.bf16.gmra.mrb[0].mxu0 %v472
  %v1102 = vpop.f32.mrb[0].mxu0
  %v1103 = vadd.f32 0.0, %v1102
  %v1104 = vpop.f32.mrb[0].mxu0
  %v1105 = vpop.f32.mrb[0].mxu0
  %v1106 = vadd.f32 0.0, %v1105
  %v1107 = vpop.f32.mrb[0].mxu0
  %1108 = vmatprep.mubr.bf16.mxu0 0
  %1109 = vmatmul.mubr.bf16.gmra.mrb[0].mxu0 %v473
  %v1110 = vpop.f32.mrb[0].mxu0
  %v1111 = vadd.f32 0.0, %v1110
  %v1112 = vpop.f32.mrb[0].mxu0
  %v1113 = vpop.f32.mrb[0].mxu0
  %v1114 = vadd.f32 0.0, %v1113
  %v1115 = vpop.f32.mrb[0].mxu0
  %1116 = vmatprep.mubr.bf16.mxu0 0
  %1117 = vmatmul.mubr.bf16.gmra.mrb[0].mxu0 %v474
  %v1118 = vpop.f32.mrb[0].mxu0
  %v1119 = vadd.f32 0.0, %v1118
  %v1120 = vpop.f32.mrb[0].mxu0
  %v1121 = vpop.f32.mrb[0].mxu0
  %v1122 = vadd.f32 0.0, %v1121
  %v1123 = vpop.f32.mrb[0].mxu0
  %1124 = vmatprep.mubr.bf16.mxu0 0
  %1125 = vmatmul.mubr.bf16.gmra.mrb[0].mxu0 %v475
  %v1126 = vpop.f32.mrb[0].mxu0
  %v1127 = vadd.f32 0.0, %v1126
  %v1128 = vpop.f32.mrb[0].mxu0
  %v1129 = vpop.f32.mrb[0].mxu0
  %v1130 = vadd.f32 0.0, %v1129
  %v1131 = vpop.f32.mrb[0].mxu0
  %1132 = vdwg.mxu0
  %v1133 = vadd.f32 %v623, %v626
  %v1134 = vadd.f32 %v1133, %v631
  %v1135 = vadd.f32 %v1134, %v634
  %v1136 = vadd.f32 %v1135, %v639
  %v1137 = vadd.f32 %v1136, %v642
  %v1138 = vadd.f32 %v1137, %v647
  %v1139 = vadd.f32 %v1138, %v650
  %v1140 = vadd.f32 %v1139, %v655
  %v1141 = vadd.f32 %v1140, %v658
  %v1142 = vadd.f32 %v1141, %v663
  %v1143 = vadd.f32 %v1142, %v666
  %v1144 = vadd.f32 %v1143, %v671
  %v1145 = vadd.f32 %v1144, %v674
  %v1146 = vadd.f32 %v1145, %v679
  %v1147 = vadd.f32 %v1146, %v682
  %v1148 = vadd.f32 %v1147, %v687
  %v1149 = vadd.f32 %v1148, %v690
  %v1150 = vadd.f32 %v1149, %v695
  %v1151 = vadd.f32 %v1150, %v698
  %v1152 = vadd.f32 %v1151, %v703
  %v1153 = vadd.f32 %v1152, %v706
  %v1154 = vadd.f32 %v1153, %v711
  %v1155 = vadd.f32 %v1154, %v714
  %v1156 = vadd.f32 %v1155, %v719
  %v1157 = vadd.f32 %v1156, %v722
  %v1158 = vadd.f32 %v1157, %v727
  %v1159 = vadd.f32 %v1158, %v730
  %v1160 = vadd.f32 %v1159, %v735
  %v1161 = vadd.f32 %v1160, %v738
  %v1162 = vadd.f32 %v1161, %v743
  %v1163 = vadd.f32 %v1162, %v746
  %v1164 = vadd.f32 %v1163, %v751
  %v1165 = vadd.f32 %v1164, %v754
  %v1166 = vadd.f32 %v1165, %v759
  %v1167 = vadd.f32 %v1166, %v762
  %v1168 = vadd.f32 %v1167, %v767
  %v1169 = vadd.f32 %v1168, %v770
  %v1170 = vadd.f32 %v1169, %v775
  %v1171 = vadd.f32 %v1170, %v778
  %v1172 = vadd.f32 %v1171, %v783
  %v1173 = vadd.f32 %v1172, %v786
  %v1174 = vadd.f32 %v1173, %v791
  %v1175 = vadd.f32 %v1174, %v794
  %v1176 = vadd.f32 %v1175, %v799
  %v1177 = vadd.f32 %v1176, %v802
  %v1178 = vadd.f32 %v1177, %v807
  %v1179 = vadd.f32 %v1178, %v810
  %v1180 = vadd.f32 %v1179, %v815
  %v1181 = vadd.f32 %v1180, %v818
  %v1182 = vadd.f32 %v1181, %v823
  %v1183 = vadd.f32 %v1182, %v826
  %v1184 = vadd.f32 %v1183, %v831
  %v1185 = vadd.f32 %v1184, %v834
  %v1186 = vadd.f32 %v1185, %v839
  %v1187 = vadd.f32 %v1186, %v842
  %v1188 = vadd.f32 %v1187, %v847
  %v1189 = vadd.f32 %v1188, %v850
  %v1190 = vadd.f32 %v1189, %v855
  %v1191 = vadd.f32 %v1190, %v858
  %v1192 = vadd.f32 %v1191, %v863
  %v1193 = vadd.f32 %v1192, %v866
  %v1194 = vadd.f32 %v1193, %v871
  %v1195 = vadd.f32 %v1194, %v874
  %v1196 = vadd.f32 %v1195, %v879
  %v1197 = vadd.f32 %v1196, %v882
  %v1198 = vadd.f32 %v1197, %v887
  %v1199 = vadd.f32 %v1198, %v890
  %v1200 = vadd.f32 %v1199, %v895
  %v1201 = vadd.f32 %v1200, %v898
  %v1202 = vadd.f32 %v1201, %v903
  %v1203 = vadd.f32 %v1202, %v906
  %v1204 = vadd.f32 %v1203, %v911
  %v1205 = vadd.f32 %v1204, %v914
  %v1206 = vadd.f32 %v1205, %v919
  %v1207 = vadd.f32 %v1206, %v922
  %v1208 = vadd.f32 %v1207, %v927
  %v1209 = vadd.f32 %v1208, %v930
  %v1210 = vadd.f32 %v1209, %v935
  %v1211 = vadd.f32 %v1210, %v938
  %v1212 = vadd.f32 %v1211, %v943
  %v1213 = vadd.f32 %v1212, %v946
  %v1214 = vadd.f32 %v1213, %v951
  %v1215 = vadd.f32 %v1214, %v954
  %v1216 = vadd.f32 %v1215, %v959
  %v1217 = vadd.f32 %v1216, %v962
  %v1218 = vadd.f32 %v1217, %v967
  %v1219 = vadd.f32 %v1218, %v970
  %v1220 = vadd.f32 %v1219, %v975
  %v1221 = vadd.f32 %v1220, %v978
  %v1222 = vadd.f32 %v1221, %v983
  %v1223 = vadd.f32 %v1222, %v986
  %v1224 = vadd.f32 %v1223, %v991
  %v1225 = vadd.f32 %v1224, %v994
  %v1226 = vadd.f32 %v1225, %v999
  %v1227 = vadd.f32 %v1226, %v1002
  %v1228 = vadd.f32 %v1227, %v1007
  %v1229 = vadd.f32 %v1228, %v1010
  %v1230 = vadd.f32 %v1229, %v1015
  %v1231 = vadd.f32 %v1230, %v1018
  %v1232 = vadd.f32 %v1231, %v1023
  %v1233 = vadd.f32 %v1232, %v1026
  %v1234 = vadd.f32 %v1233, %v1031
  %v1235 = vadd.f32 %v1234, %v1034
  %v1236 = vadd.f32 %v1235, %v1039
  %v1237 = vadd.f32 %v1236, %v1042
  %v1238 = vadd.f32 %v1237, %v1047
  %v1239 = vadd.f32 %v1238, %v1050
  %v1240 = vadd.f32 %v1239, %v1055
  %v1241 = vadd.f32 %v1240, %v1058
  %v1242 = vadd.f32 %v1241, %v1063
  %v1243 = vadd.f32 %v1242, %v1066
  %v1244 = vadd.f32 %v1243, %v1071
  %v1245 = vadd.f32 %v1244, %v1074
  %v1246 = vadd.f32 %v1245, %v1079
  %v1247 = vadd.f32 %v1246, %v1082
  %v1248 = vadd.f32 %v1247, %v1087
  %v1249 = vadd.f32 %v1248, %v1090
  %v1250 = vadd.f32 %v1249, %v1095
  %v1251 = vadd.f32 %v1250, %v1098
  %v1252 = vadd.f32 %v1251, %v1103
  %v1253 = vadd.f32 %v1252, %v1106
  %v1254 = vadd.f32 %v1253, %v1111
  %v1255 = vadd.f32 %v1254, %v1114
  %v1256 = vadd.f32 %v1255, %v1119
  %v1257 = vadd.f32 %v1256, %v1122
  %v1258 = vadd.f32 %v1257, %v1127
  %v1259 = vadd.f32 %v1258, %v1130
  %v1260 = vrot.slane %v1259, 4
  %v1261 = vadd.f32 %v1259, %v1260
  %v1262 = vrot.slane %v1261, 2
  %v1263 = vadd.f32 %v1261, %v1262
  %v1264 = vrot.slane %v1263, 1
  %v1265 = vadd.f32 %v1263, %v1264
  %1266 = vst [vmem:[%s2] sm:$0x1] %v1265
  %v1267 = vmul.f32 %v623, %v623
  %v1268 = vmul.f32 %v626, %v626
  %v1269 = vmul.f32 %v631, %v631
  %v1270 = vmul.f32 %v634, %v634
  %v1271 = vmul.f32 %v639, %v639
  %v1272 = vmul.f32 %v642, %v642
  %v1273 = vmul.f32 %v647, %v647
  %v1274 = vmul.f32 %v650, %v650
  %v1275 = vmul.f32 %v655, %v655
  %v1276 = vmul.f32 %v658, %v658
  %v1277 = vmul.f32 %v663, %v663
  %v1278 = vmul.f32 %v666, %v666
  %v1279 = vmul.f32 %v671, %v671
  %v1280 = vmul.f32 %v674, %v674
  %v1281 = vmul.f32 %v679, %v679
  %v1282 = vmul.f32 %v682, %v682
  %v1283 = vmul.f32 %v687, %v687
  %v1284 = vmul.f32 %v690, %v690
  %v1285 = vmul.f32 %v695, %v695
  %v1286 = vmul.f32 %v698, %v698
  %v1287 = vmul.f32 %v703, %v703
  %v1288 = vmul.f32 %v706, %v706
  %v1289 = vmul.f32 %v711, %v711
  %v1290 = vmul.f32 %v714, %v714
  %v1291 = vmul.f32 %v719, %v719
  %v1292 = vmul.f32 %v722, %v722
  %v1293 = vmul.f32 %v727, %v727
  %v1294 = vmul.f32 %v730, %v730
  %v1295 = vmul.f32 %v735, %v735
  %v1296 = vmul.f32 %v738, %v738
  %v1297 = vmul.f32 %v743, %v743
  %v1298 = vmul.f32 %v746, %v746
  %v1299 = vmul.f32 %v751, %v751
  %v1300 = vmul.f32 %v754, %v754
  %v1301 = vmul.f32 %v759, %v759
  %v1302 = vmul.f32 %v762, %v762
  %v1303 = vmul.f32 %v767, %v767
  %v1304 = vmul.f32 %v770, %v770
  %v1305 = vmul.f32 %v775, %v775
  %v1306 = vmul.f32 %v778, %v778
  %v1307 = vmul.f32 %v783, %v783
  %v1308 = vmul.f32 %v786, %v786
  %v1309 = vmul.f32 %v791, %v791
  %v1310 = vmul.f32 %v794, %v794
  %v1311 = vmul.f32 %v799, %v799
  %v1312 = vmul.f32 %v802, %v802
  %v1313 = vmul.f32 %v807, %v807
  %v1314 = vmul.f32 %v810, %v810
  %v1315 = vmul.f32 %v815, %v815
  %v1316 = vmul.f32 %v818, %v818
  %v1317 = vmul.f32 %v823, %v823
  %v1318 = vmul.f32 %v826, %v826
  %v1319 = vmul.f32 %v831, %v831
  %v1320 = vmul.f32 %v834, %v834
  %v1321 = vmul.f32 %v839, %v839
  %v1322 = vmul.f32 %v842, %v842
  %v1323 = vmul.f32 %v847, %v847
  %v1324 = vmul.f32 %v850, %v850
  %v1325 = vmul.f32 %v855, %v855
  %v1326 = vmul.f32 %v858, %v858
  %v1327 = vmul.f32 %v863, %v863
  %v1328 = vmul.f32 %v866, %v866
  %v1329 = vmul.f32 %v871, %v871
  %v1330 = vmul.f32 %v874, %v874
  %v1331 = vmul.f32 %v879, %v879
  %v1332 = vmul.f32 %v882, %v882
  %v1333 = vmul.f32 %v887, %v887
  %v1334 = vmul.f32 %v890, %v890
  %v1335 = vmul.f32 %v895, %v895
  %v1336 = vmul.f32 %v898, %v898
  %v1337 = vmul.f32 %v903, %v903
  %v1338 = vmul.f32 %v906, %v906
  %v1339 = vmul.f32 %v911, %v911
  %v1340 = vmul.f32 %v914, %v914
  %v1341 = vmul.f32 %v919, %v919
  %v1342 = vmul.f32 %v922, %v922
  %v1343 = vmul.f32 %v927, %v927
  %v1344 = vmul.f32 %v930, %v930
  %v1345 = vmul.f32 %v935, %v935
  %v1346 = vmul.f32 %v938, %v938
  %v1347 = vmul.f32 %v943, %v943
  %v1348 = vmul.f32 %v946, %v946
  %v1349 = vmul.f32 %v951, %v951
  %v1350 = vmul.f32 %v954, %v954
  %v1351 = vmul.f32 %v959, %v959
  %v1352 = vmul.f32 %v962, %v962
  %v1353 = vmul.f32 %v967, %v967
  %v1354 = vmul.f32 %v970, %v970
  %v1355 = vmul.f32 %v975, %v975
  %v1356 = vmul.f32 %v978, %v978
  %v1357 = vmul.f32 %v983, %v983
  %v1358 = vmul.f32 %v986, %v986
  %v1359 = vmul.f32 %v991, %v991
  %v1360 = vmul.f32 %v994, %v994
  %v1361 = vmul.f32 %v999, %v999
  %v1362 = vmul.f32 %v1002, %v1002
  %v1363 = vmul.f32 %v1007, %v1007
  %v1364 = vmul.f32 %v1010, %v1010
  %v1365 = vmul.f32 %v1015, %v1015
  %v1366 = vmul.f32 %v1018, %v1018
  %v1367 = vmul.f32 %v1023, %v1023
  %v1368 = vmul.f32 %v1026, %v1026
  %v1369 = vmul.f32 %v1031, %v1031
  %v1370 = vmul.f32 %v1034, %v1034
  %v1371 = vmul.f32 %v1039, %v1039
  %v1372 = vmul.f32 %v1042, %v1042
  %v1373 = vmul.f32 %v1047, %v1047
  %v1374 = vmul.f32 %v1050, %v1050
  %v1375 = vmul.f32 %v1055, %v1055
  %v1376 = vmul.f32 %v1058, %v1058
  %v1377 = vmul.f32 %v1063, %v1063
  %v1378 = vmul.f32 %v1066, %v1066
  %v1379 = vmul.f32 %v1071, %v1071
  %v1380 = vmul.f32 %v1074, %v1074
  %v1381 = vmul.f32 %v1079, %v1079
  %v1382 = vmul.f32 %v1082, %v1082
  %v1383 = vmul.f32 %v1087, %v1087
  %v1384 = vmul.f32 %v1090, %v1090
  %v1385 = vmul.f32 %v1095, %v1095
  %v1386 = vmul.f32 %v1098, %v1098
  %v1387 = vmul.f32 %v1103, %v1103
  %v1388 = vmul.f32 %v1106, %v1106
  %v1389 = vmul.f32 %v1111, %v1111
  %v1390 = vmul.f32 %v1114, %v1114
  %v1391 = vmul.f32 %v1119, %v1119
  %v1392 = vmul.f32 %v1122, %v1122
  %v1393 = vmul.f32 %v1127, %v1127
  %v1394 = vmul.f32 %v1130, %v1130
  %v1395 = vadd.f32 %v1267, %v1268
  %v1396 = vadd.f32 %v1395, %v1269
  %v1397 = vadd.f32 %v1396, %v1270
  %v1398 = vadd.f32 %v1397, %v1271
  %v1399 = vadd.f32 %v1398, %v1272
  %v1400 = vadd.f32 %v1399, %v1273
  %v1401 = vadd.f32 %v1400, %v1274
  %v1402 = vadd.f32 %v1401, %v1275
  %v1403 = vadd.f32 %v1402, %v1276
  %v1404 = vadd.f32 %v1403, %v1277
  %v1405 = vadd.f32 %v1404, %v1278
  %v1406 = vadd.f32 %v1405, %v1279
  %v1407 = vadd.f32 %v1406, %v1280
  %v1408 = vadd.f32 %v1407, %v1281
  %v1409 = vadd.f32 %v1408, %v1282
  %v1410 = vadd.f32 %v1409, %v1283
  %v1411 = vadd.f32 %v1410, %v1284
  %v1412 = vadd.f32 %v1411, %v1285
  %v1413 = vadd.f32 %v1412, %v1286
  %v1414 = vadd.f32 %v1413, %v1287
  %v1415 = vadd.f32 %v1414, %v1288
  %v1416 = vadd.f32 %v1415, %v1289
  %v1417 = vadd.f32 %v1416, %v1290
  %v1418 = vadd.f32 %v1417, %v1291
  %v1419 = vadd.f32 %v1418, %v1292
  %v1420 = vadd.f32 %v1419, %v1293
  %v1421 = vadd.f32 %v1420, %v1294
  %v1422 = vadd.f32 %v1421, %v1295
  %v1423 = vadd.f32 %v1422, %v1296
  %v1424 = vadd.f32 %v1423, %v1297
  %v1425 = vadd.f32 %v1424, %v1298
  %v1426 = vadd.f32 %v1425, %v1299
  %v1427 = vadd.f32 %v1426, %v1300
  %v1428 = vadd.f32 %v1427, %v1301
  %v1429 = vadd.f32 %v1428, %v1302
  %v1430 = vadd.f32 %v1429, %v1303
  %v1431 = vadd.f32 %v1430, %v1304
  %v1432 = vadd.f32 %v1431, %v1305
  %v1433 = vadd.f32 %v1432, %v1306
  %v1434 = vadd.f32 %v1433, %v1307
  %v1435 = vadd.f32 %v1434, %v1308
  %v1436 = vadd.f32 %v1435, %v1309
  %v1437 = vadd.f32 %v1436, %v1310
  %v1438 = vadd.f32 %v1437, %v1311
  %v1439 = vadd.f32 %v1438, %v1312
  %v1440 = vadd.f32 %v1439, %v1313
  %v1441 = vadd.f32 %v1440, %v1314
  %v1442 = vadd.f32 %v1441, %v1315
  %v1443 = vadd.f32 %v1442, %v1316
  %v1444 = vadd.f32 %v1443, %v1317
  %v1445 = vadd.f32 %v1444, %v1318
  %v1446 = vadd.f32 %v1445, %v1319
  %v1447 = vadd.f32 %v1446, %v1320
  %v1448 = vadd.f32 %v1447, %v1321
  %v1449 = vadd.f32 %v1448, %v1322
  %v1450 = vadd.f32 %v1449, %v1323
  %v1451 = vadd.f32 %v1450, %v1324
  %v1452 = vadd.f32 %v1451, %v1325
  %v1453 = vadd.f32 %v1452, %v1326
  %v1454 = vadd.f32 %v1453, %v1327
  %v1455 = vadd.f32 %v1454, %v1328
  %v1456 = vadd.f32 %v1455, %v1329
  %v1457 = vadd.f32 %v1456, %v1330
  %v1458 = vadd.f32 %v1457, %v1331
  %v1459 = vadd.f32 %v1458, %v1332
  %v1460 = vadd.f32 %v1459, %v1333
  %v1461 = vadd.f32 %v1460, %v1334
  %v1462 = vadd.f32 %v1461, %v1335
  %v1463 = vadd.f32 %v1462, %v1336
  %v1464 = vadd.f32 %v1463, %v1337
  %v1465 = vadd.f32 %v1464, %v1338
  %v1466 = vadd.f32 %v1465, %v1339
  %v1467 = vadd.f32 %v1466, %v1340
  %v1468 = vadd.f32 %v1467, %v1341
  %v1469 = vadd.f32 %v1468, %v1342
  %v1470 = vadd.f32 %v1469, %v1343
  %v1471 = vadd.f32 %v1470, %v1344
  %v1472 = vadd.f32 %v1471, %v1345
  %v1473 = vadd.f32 %v1472, %v1346
  %v1474 = vadd.f32 %v1473, %v1347
  %v1475 = vadd.f32 %v1474, %v1348
  %v1476 = vadd.f32 %v1475, %v1349
  %v1477 = vadd.f32 %v1476, %v1350
  %v1478 = vadd.f32 %v1477, %v1351
  %v1479 = vadd.f32 %v1478, %v1352
  %v1480 = vadd.f32 %v1479, %v1353
  %v1481 = vadd.f32 %v1480, %v1354
  %v1482 = vadd.f32 %v1481, %v1355
  %v1483 = vadd.f32 %v1482, %v1356
  %v1484 = vadd.f32 %v1483, %v1357
  %v1485 = vadd.f32 %v1484, %v1358
  %v1486 = vadd.f32 %v1485, %v1359
  %v1487 = vadd.f32 %v1486, %v1360
  %v1488 = vadd.f32 %v1487, %v1361
  %v1489 = vadd.f32 %v1488, %v1362
  %v1490 = vadd.f32 %v1489, %v1363
  %v1491 = vadd.f32 %v1490, %v1364
  %v1492 = vadd.f32 %v1491, %v1365
  %v1493 = vadd.f32 %v1492, %v1366
  %v1494 = vadd.f32 %v1493, %v1367
  %v1495 = vadd.f32 %v1494, %v1368
  %v1496 = vadd.f32 %v1495, %v1369
  %v1497 = vadd.f32 %v1496, %v1370
  %v1498 = vadd.f32 %v1497, %v1371
  %v1499 = vadd.f32 %v1498, %v1372
  %v1500 = vadd.f32 %v1499, %v1373
  %v1501 = vadd.f32 %v1500, %v1374
  %v1502 = vadd.f32 %v1501, %v1375
  %v1503 = vadd.f32 %v1502, %v1376
  %v1504 = vadd.f32 %v1503, %v1377
  %v1505 = vadd.f32 %v1504, %v1378
  %v1506 = vadd.f32 %v1505, %v1379
  %v1507 = vadd.f32 %v1506, %v1380
  %v1508 = vadd.f32 %v1507, %v1381
  %v1509 = vadd.f32 %v1508, %v1382
  %v1510 = vadd.f32 %v1509, %v1383
  %v1511 = vadd.f32 %v1510, %v1384
  %v1512 = vadd.f32 %v1511, %v1385
  %v1513 = vadd.f32 %v1512, %v1386
  %v1514 = vadd.f32 %v1513, %v1387
  %v1515 = vadd.f32 %v1514, %v1388
  %v1516 = vadd.f32 %v1515, %v1389
  %v1517 = vadd.f32 %v1516, %v1390
  %v1518 = vadd.f32 %v1517, %v1391
  %v1519 = vadd.f32 %v1518, %v1392
  %v1520 = vadd.f32 %v1519, %v1393
  %v1521 = vadd.f32 %v1520, %v1394
  %v1522 = vrot.slane %v1521, 4
  %v1523 = vadd.f32 %v1521, %v1522
  %v1524 = vrot.slane %v1523, 2
  %v1525 = vadd.f32 %v1523, %v1524
  %v1526 = vrot.slane %v1525, 1
  %v1527 = vadd.f32 %v1525, %v1526
  %1528 = vst [vmem:[%s2 + $0x1] sm:$0x1] %v1527
  // Predicated region
  $region10: #{up_conv_forward.2} parent=0 // pred_check
    _
  $region11: #{up_conv_forward.2} parent=0 // pred_check_branch
    %1530 = sbr.rel (0) target = $region13
  $region12: #{up_conv_forward.2} parent=0 // pred_region
    _
  $region13: #{up_conv_forward.2} parent=0 // pred_fallthru
    _
  // Predicated region
  $region14: #{up_conv_forward.2} parent=0 // pred_check
    _
  $region15: #{up_conv_forward.2} parent=0 // pred_check_branch
    %1532 = sbr.rel (0) target = $region17
  $region16: #{up_conv_forward.2} parent=0 // pred_region
    _
  $region17: #{up_conv_forward.2} parent=0 // pred_fallthru
    _

// kernel: up_conv_forward.3
$region0: #{up_conv_forward.3}
  #allocation0 [shape = 'u32[]', space=smem, size = 0x4, offset = 0x4, fixed_abs, tag = 'smem constant byte address 0x4 - core index']
  #allocation1 [shape = 'u32[144,128]{1,0:T(1,128)}', space=vmem, size = 0x12000, scoped, tag = 'internal scratch']
  %s0 = inlined_call_operand.vmem [shape: bf16[1024,128], index: 0, kind: input, shape index: {}]
  %s1 = inlined_call_operand.vmem [shape: bf16[128,128], index: 1, kind: input, shape index: {}]
  %s2 = inlined_call_operand.vmem [shape: f32[1,128], index: 2, kind: input, shape index: {}]
  %s3 = inlined_call_operand.vmem [shape: f32[1,128], index: 3, kind: input, shape index: {}]
  %s4 = inlined_call_operand.vmem [shape: bf16[1024,128], index: 4, kind: output, shape index: {}]
  %s5 = sld [smem:[#allocation0]]
  $region26: #{up_conv_forward.3} parent=0
    _
  %s7 = ssub.s32 1, %s5
  %s8 = scalar_select 0, %s7, %s5
  // Predicated region
  $region2: #{up_conv_forward.3} parent=0 // pred_check
    _
  $region3: #{up_conv_forward.3} parent=0 // pred_check_branch
    %10 = sbr.rel (0) target = $region5
  $region4: #{up_conv_forward.3} parent=0 // pred_region
    _
  $region5: #{up_conv_forward.3} parent=0 // pred_fallthru
    _
  // Predicated region
  $region6: #{up_conv_forward.3} parent=0 // pred_check
    _
  $region7: #{up_conv_forward.3} parent=0 // pred_check_branch
    %12 = sbr.rel (0) target = $region9
  $region8: #{up_conv_forward.3} parent=0 // pred_region
    _
  $region9: #{up_conv_forward.3} parent=0 // pred_fallthru
    _
  // Predicated region
  $region10: #{up_conv_forward.3} parent=0 // pred_check
    _
  $region11: #{up_conv_forward.3} parent=0 // pred_check_branch
    %14 = sbr.rel (0) target = $region13
  $region12: #{up_conv_forward.3} parent=0 // pred_region
    _
  $region13: #{up_conv_forward.3} parent=0 // pred_fallthru
    _
  // Predicated region
  $region14: #{up_conv_forward.3} parent=0 // pred_check
    _
  $region15: #{up_conv_forward.3} parent=0 // pred_check_branch
    %16 = sbr.rel (0) target = $region17
  $region16: #{up_conv_forward.3} parent=0 // pred_region
    _
  $region17: #{up_conv_forward.3} parent=0 // pred_fallthru
    _
  %v18 = vld [vmem:[%s0] sm:$0xf]
  %v19 = vld [vmem:[%s0 + $0x4] sm:$0xf]
  %v20 = vld [vmem:[%s0 + $0x8] sm:$0xf]
  %v21 = vld [vmem:[%s0 + $0xc] sm:$0xf]
  %v22 = vld [vmem:[%s0 + $0x10] sm:$0xf]
  %v23 = vld [vmem:[%s0 + $0x14] sm:$0xf]
  %v24 = vld [vmem:[%s0 + $0x18] sm:$0xf]
  %v25 = vld [vmem:[%s0 + $0x1c] sm:$0xf]
  %v26 = vld [vmem:[%s0 + $0x20] sm:$0xf]
  %v27 = vld [vmem:[%s0 + $0x24] sm:$0xf]
  %v28 = vld [vmem:[%s0 + $0x28] sm:$0xf]
  %v29 = vld [vmem:[%s0 + $0x2c] sm:$0xf]
  %v30 = vld [vmem:[%s0 + $0x30] sm:$0xf]
  %v31 = vld [vmem:[%s0 + $0x34] sm:$0xf]
  %v32 = vld [vmem:[%s0 + $0x38] sm:$0xf]
  %v33 = vld [vmem:[%s0 + $0x3c] sm:$0xf]
  %v34 = vld [vmem:[%s0 + $0x40] sm:$0xf]
  %v35 = vld [vmem:[%s0 + $0x44] sm:$0xf]
  %v36 = vld [vmem:[%s0 + $0x48] sm:$0xf]
  %v37 = vld [vmem:[%s0 + $0x4c] sm:$0xf]
  %v38 = vld [vmem:[%s0 + $0x50] sm:$0xf]
  %v39 = vld [vmem:[%s0 + $0x54] sm:$0xf]
  %v40 = vld [vmem:[%s0 + $0x58] sm:$0xf]
  %v41 = vld [vmem:[%s0 + $0x5c] sm:$0xf]
  %v42 = vld [vmem:[%s0 + $0x60] sm:$0xf]
  %v43 = vld [vmem:[%s0 + $0x64] sm:$0xf]
  %v44 = vld [vmem:[%s0 + $0x68] sm:$0xf]
  %v45 = vld [vmem:[%s0 + $0x6c] sm:$0xf]
  %v46 = vld [vmem:[%s0 + $0x70] sm:$0xf]
  %v47 = vld [vmem:[%s0 + $0x74] sm:$0xf]
  %v48 = vld [vmem:[%s0 + $0x78] sm:$0xf]
  %v49 = vld [vmem:[%s0 + $0x7c] sm:$0xf]
  %v50 = vld [vmem:[%s0 + $0x80] sm:$0xf]
  %v51 = vld [vmem:[%s0 + $0x84] sm:$0xf]
  %v52 = vld [vmem:[%s0 + $0x88] sm:$0xf]
  %v53 = vld [vmem:[%s0 + $0x8c] sm:$0xf]
  %v54 = vld [vmem:[%s0 + $0x90] sm:$0xf]
  %v55 = vld [vmem:[%s0 + $0x94] sm:$0xf]
  %v56 = vld [vmem:[%s0 + $0x98] sm:$0xf]
  %v57 = vld [vmem:[%s0 + $0x9c] sm:$0xf]
  %v58 = vld [vmem:[%s0 + $0xa0] sm:$0xf]
  %v59 = vld [vmem:[%s0 + $0xa4] sm:$0xf]
  %v60 = vld [vmem:[%s0 + $0xa8] sm:$0xf]
  %v61 = vld [vmem:[%s0 + $0xac] sm:$0xf]
  %v62 = vld [vmem:[%s0 + $0xb0] sm:$0xf]
  %v63 = vld [vmem:[%s0 + $0xb4] sm:$0xf]
  %v64 = vld [vmem:[%s0 + $0xb8] sm:$0xf]
  %v65 = vld [vmem:[%s0 + $0xbc] sm:$0xf]
  %v66 = vld [vmem:[%s0 + $0xc0] sm:$0xf]
  %v67 = vld [vmem:[%s0 + $0xc4] sm:$0xf]
  %v68 = vld [vmem:[%s0 + $0xc8] sm:$0xf]
  %v69 = vld [vmem:[%s0 + $0xcc] sm:$0xf]
  %v70 = vld [vmem:[%s0 + $0xd0] sm:$0xf]
  %v71 = vld [vmem:[%s0 + $0xd4] sm:$0xf]
  %v72 = vld [vmem:[%s0 + $0xd8] sm:$0xf]
  %v73 = vld [vmem:[%s0 + $0xdc] sm:$0xf]
  %v74 = vld [vmem:[%s0 + $0xe0] sm:$0xf]
  %v75 = vld [vmem:[%s0 + $0xe4] sm:$0xf]
  %v76 = vld [vmem:[%s0 + $0xe8] sm:$0xf]
  %v77 = vld [vmem:[%s0 + $0xec] sm:$0xf]
  %v78 = vld [vmem:[%s0 + $0xf0] sm:$0xf]
  %v79 = vld [vmem:[%s0 + $0xf4] sm:$0xf]
  %v80 = vld [vmem:[%s0 + $0xf8] sm:$0xf]
  %v81 = vld [vmem:[%s0 + $0xfc] sm:$0xf]
  %v82 = vld [vmem:[%s0 + $0x100] sm:$0xf]
  %v83 = vld [vmem:[%s0 + $0x104] sm:$0xf]
  %v84 = vld [vmem:[%s0 + $0x108] sm:$0xf]
  %v85 = vld [vmem:[%s0 + $0x10c] sm:$0xf]
  %v86 = vld [vmem:[%s0 + $0x110] sm:$0xf]
  %v87 = vld [vmem:[%s0 + $0x114] sm:$0xf]
  %v88 = vld [vmem:[%s0 + $0x118] sm:$0xf]
  %v89 = vld [vmem:[%s0 + $0x11c] sm:$0xf]
  %v90 = vld [vmem:[%s0 + $0x120] sm:$0xf]
  %v91 = vld [vmem:[%s0 + $0x124] sm:$0xf]
  %v92 = vld [vmem:[%s0 + $0x128] sm:$0xf]
  %v93 = vld [vmem:[%s0 + $0x12c] sm:$0xf]
  %v94 = vld [vmem:[%s0 + $0x130] sm:$0xf]
  %v95 = vld [vmem:[%s0 + $0x134] sm:$0xf]
  %v96 = vld [vmem:[%s0 + $0x138] sm:$0xf]
  %v97 = vld [vmem:[%s0 + $0x13c] sm:$0xf]
  %v98 = vld [vmem:[%s0 + $0x140] sm:$0xf]
  %v99 = vld [vmem:[%s0 + $0x144] sm:$0xf]
  %v100 = vld [vmem:[%s0 + $0x148] sm:$0xf]
  %v101 = vld [vmem:[%s0 + $0x14c] sm:$0xf]
  %v102 = vld [vmem:[%s0 + $0x150] sm:$0xf]
  %v103 = vld [vmem:[%s0 + $0x154] sm:$0xf]
  %v104 = vld [vmem:[%s0 + $0x158] sm:$0xf]
  %v105 = vld [vmem:[%s0 + $0x15c] sm:$0xf]
  %v106 = vld [vmem:[%s0 + $0x160] sm:$0xf]
  %v107 = vld [vmem:[%s0 + $0x164] sm:$0xf]
  %v108 = vld [vmem:[%s0 + $0x168] sm:$0xf]
  %v109 = vld [vmem:[%s0 + $0x16c] sm:$0xf]
  %v110 = vld [vmem:[%s0 + $0x170] sm:$0xf]
  %v111 = vld [vmem:[%s0 + $0x174] sm:$0xf]
  %v112 = vld [vmem:[%s0 + $0x178] sm:$0xf]
  %v113 = vld [vmem:[%s0 + $0x17c] sm:$0xf]
  %v114 = vld [vmem:[%s0 + $0x180] sm:$0xf]
  %v115 = vld [vmem:[%s0 + $0x184] sm:$0xf]
  %v116 = vld [vmem:[%s0 + $0x188] sm:$0xf]
  %v117 = vld [vmem:[%s0 + $0x18c] sm:$0xf]
  %v118 = vld [vmem:[%s0 + $0x190] sm:$0xf]
  %v119 = vld [vmem:[%s0 + $0x194] sm:$0xf]
  %v120 = vld [vmem:[%s0 + $0x198] sm:$0xf]
  %v121 = vld [vmem:[%s0 + $0x19c] sm:$0xf]
  %v122 = vld [vmem:[%s0 + $0x1a0] sm:$0xf]
  %v123 = vld [vmem:[%s0 + $0x1a4] sm:$0xf]
  %v124 = vld [vmem:[%s0 + $0x1a8] sm:$0xf]
  %v125 = vld [vmem:[%s0 + $0x1ac] sm:$0xf]
  %v126 = vld [vmem:[%s0 + $0x1b0] sm:$0xf]
  %v127 = vld [vmem:[%s0 + $0x1b4] sm:$0xf]
  %v128 = vld [vmem:[%s0 + $0x1b8] sm:$0xf]
  %v129 = vld [vmem:[%s0 + $0x1bc] sm:$0xf]
  %v130 = vld [vmem:[%s0 + $0x1c0] sm:$0xf]
  %v131 = vld [vmem:[%s0 + $0x1c4] sm:$0xf]
  %v132 = vld [vmem:[%s0 + $0x1c8] sm:$0xf]
  %v133 = vld [vmem:[%s0 + $0x1cc] sm:$0xf]
  %v134 = vld [vmem:[%s0 + $0x1d0] sm:$0xf]
  %v135 = vld [vmem:[%s0 + $0x1d4] sm:$0xf]
  %v136 = vld [vmem:[%s0 + $0x1d8] sm:$0xf]
  %v137 = vld [vmem:[%s0 + $0x1dc] sm:$0xf]
  %v138 = vld [vmem:[%s0 + $0x1e0] sm:$0xf]
  %v139 = vld [vmem:[%s0 + $0x1e4] sm:$0xf]
  %v140 = vld [vmem:[%s0 + $0x1e8] sm:$0xf]
  %v141 = vld [vmem:[%s0 + $0x1ec] sm:$0xf]
  %v142 = vld [vmem:[%s0 + $0x1f0] sm:$0xf]
  %v143 = vld [vmem:[%s0 + $0x1f4] sm:$0xf]
  %v144 = vld [vmem:[%s0 + $0x1f8] sm:$0xf]
  %v145 = vld [vmem:[%s0 + $0x1fc] sm:$0xf]
  %v146 = vld [vmem:[%s1] sm:$0xf]
  %v147 = vld [vmem:[%s1 + $0x4] sm:$0xf]
  %v148 = vld [vmem:[%s1 + $0x8] sm:$0xf]
  %v149 = vld [vmem:[%s1 + $0xc] sm:$0xf]
  %v150 = vld [vmem:[%s1 + $0x10] sm:$0xf]
  %v151 = vld [vmem:[%s1 + $0x14] sm:$0xf]
  %v152 = vld [vmem:[%s1 + $0x18] sm:$0xf]
  %v153 = vld [vmem:[%s1 + $0x1c] sm:$0xf]
  %v154 = vld [vmem:[%s1 + $0x20] sm:$0xf]
  %v155 = vld [vmem:[%s1 + $0x24] sm:$0xf]
  %v156 = vld [vmem:[%s1 + $0x28] sm:$0xf]
  %v157 = vld [vmem:[%s1 + $0x2c] sm:$0xf]
  %v158 = vld [vmem:[%s1 + $0x30] sm:$0xf]
  %v159 = vld [vmem:[%s1 + $0x34] sm:$0xf]
  %v160 = vld [vmem:[%s1 + $0x38] sm:$0xf]
  %v161 = vld [vmem:[%s1 + $0x3c] sm:$0xf]
  %v290 = vunpack.c.l.b16 %v18
  %v291 = vunpack.c.l.b16 %v19
  %v292 = vunpack.c.l.b16 %v20
  %v293 = vunpack.c.l.b16 %v21
  %v294 = vunpack.c.l.b16 %v22
  %v295 = vunpack.c.l.b16 %v23
  %v296 = vunpack.c.l.b16 %v24
  %v297 = vunpack.c.l.b16 %v25
  %v298 = vunpack.c.l.b16 %v26
  %v299 = vunpack.c.l.b16 %v27
  %v300 = vunpack.c.l.b16 %v28
  %v301 = vunpack.c.l.b16 %v29
  %v302 = vunpack.c.l.b16 %v30
  %v303 = vunpack.c.l.b16 %v31
  %v304 = vunpack.c.l.b16 %v32
  %v305 = vunpack.c.l.b16 %v33
  %v306 = vunpack.c.l.b16 %v34
  %v307 = vunpack.c.l.b16 %v35
  %v308 = vunpack.c.l.b16 %v36
  %v309 = vunpack.c.l.b16 %v37
  %v310 = vunpack.c.l.b16 %v38
  %v311 = vunpack.c.l.b16 %v39
  %v312 = vunpack.c.l.b16 %v40
  %v313 = vunpack.c.l.b16 %v41
  %v314 = vunpack.c.l.b16 %v42
  %v315 = vunpack.c.l.b16 %v43
  %v316 = vunpack.c.l.b16 %v44
  %v317 = vunpack.c.l.b16 %v45
  %v318 = vunpack.c.l.b16 %v46
  %v319 = vunpack.c.l.b16 %v47
  %v320 = vunpack.c.l.b16 %v48
  %v321 = vunpack.c.l.b16 %v49
  %v322 = vunpack.c.l.b16 %v50
  %v323 = vunpack.c.l.b16 %v51
  %v324 = vunpack.c.l.b16 %v52
  %v325 = vunpack.c.l.b16 %v53
  %v326 = vunpack.c.l.b16 %v54
  %v327 = vunpack.c.l.b16 %v55
  %v328 = vunpack.c.l.b16 %v56
  %v329 = vunpack.c.l.b16 %v57
  %v330 = vunpack.c.l.b16 %v58
  %v331 = vunpack.c.l.b16 %v59
  %v332 = vunpack.c.l.b16 %v60
  %v333 = vunpack.c.l.b16 %v61
  %v334 = vunpack.c.l.b16 %v62
  %v335 = vunpack.c.l.b16 %v63
  %v336 = vunpack.c.l.b16 %v64
  %v337 = vunpack.c.l.b16 %v65
  %v338 = vunpack.c.l.b16 %v66
  %v339 = vunpack.c.l.b16 %v67
  %v340 = vunpack.c.l.b16 %v68
  %v341 = vunpack.c.l.b16 %v69
  %v342 = vunpack.c.l.b16 %v70
  %v343 = vunpack.c.l.b16 %v71
  %v344 = vunpack.c.l.b16 %v72
  %v345 = vunpack.c.l.b16 %v73
  %v346 = vunpack.c.l.b16 %v74
  %v347 = vunpack.c.l.b16 %v75
  %v348 = vunpack.c.l.b16 %v76
  %v349 = vunpack.c.l.b16 %v77
  %v350 = vunpack.c.l.b16 %v78
  %v351 = vunpack.c.l.b16 %v79
  %v352 = vunpack.c.l.b16 %v80
  %v353 = vunpack.c.l.b16 %v81
  %v354 = vunpack.c.l.b16 %v82
  %v355 = vunpack.c.l.b16 %v83
  %v356 = vunpack.c.l.b16 %v84
  %v357 = vunpack.c.l.b16 %v85
  %v358 = vunpack.c.l.b16 %v86
  %v359 = vunpack.c.l.b16 %v87
  %v360 = vunpack.c.l.b16 %v88
  %v361 = vunpack.c.l.b16 %v89
  %v362 = vunpack.c.l.b16 %v90
  %v363 = vunpack.c.l.b16 %v91
  %v364 = vunpack.c.l.b16 %v92
  %v365 = vunpack.c.l.b16 %v93
  %v366 = vunpack.c.l.b16 %v94
  %v367 = vunpack.c.l.b16 %v95
  %v368 = vunpack.c.l.b16 %v96
  %v369 = vunpack.c.l.b16 %v97
  %v370 = vunpack.c.l.b16 %v98
  %v371 = vunpack.c.l.b16 %v99
  %v372 = vunpack.c.l.b16 %v100
  %v373 = vunpack.c.l.b16 %v101
  %v374 = vunpack.c.l.b16 %v102
  %v375 = vunpack.c.l.b16 %v103
  %v376 = vunpack.c.l.b16 %v104
  %v377 = vunpack.c.l.b16 %v105
  %v378 = vunpack.c.l.b16 %v106
  %v379 = vunpack.c.l.b16 %v107
  %v380 = vunpack.c.l.b16 %v108
  %v381 = vunpack.c.l.b16 %v109
  %v382 = vunpack.c.l.b16 %v110
  %v383 = vunpack.c.l.b16 %v111
  %v384 = vunpack.c.l.b16 %v112
  %v385 = vunpack.c.l.b16 %v113
  %v386 = vunpack.c.l.b16 %v114
  %v387 = vunpack.c.l.b16 %v115
  %v388 = vunpack.c.l.b16 %v116
  %v389 = vunpack.c.l.b16 %v117
  %v390 = vunpack.c.l.b16 %v118
  %v391 = vunpack.c.l.b16 %v119
  %v392 = vunpack.c.l.b16 %v120
  %v393 = vunpack.c.l.b16 %v121
  %v394 = vunpack.c.l.b16 %v122
  %v395 = vunpack.c.l.b16 %v123
  %v396 = vunpack.c.l.b16 %v124
  %v397 = vunpack.c.l.b16 %v125
  %v398 = vunpack.c.l.b16 %v126
  %v399 = vunpack.c.l.b16 %v127
  %v400 = vunpack.c.l.b16 %v128
  %v401 = vunpack.c.l.b16 %v129
  %v402 = vunpack.c.l.b16 %v130
  %v403 = vunpack.c.l.b16 %v131
  %v404 = vunpack.c.l.b16 %v132
  %v405 = vunpack.c.l.b16 %v133
  %v406 = vunpack.c.l.b16 %v134
  %v407 = vunpack.c.l.b16 %v135
  %v408 = vunpack.c.l.b16 %v136
  %v409 = vunpack.c.l.b16 %v137
  %v410 = vunpack.c.l.b16 %v138
  %v411 = vunpack.c.l.b16 %v139
  %v412 = vunpack.c.l.b16 %v140
  %v413 = vunpack.c.l.b16 %v141
  %v414 = vunpack.c.l.b16 %v142
  %v415 = vunpack.c.l.b16 %v143
  %v416 = vunpack.c.l.b16 %v144
  %v417 = vunpack.c.l.b16 %v145
  %v418 = vpack.c.b16 %v291, %v290
  %v419 = vpack.c.b16 %v293, %v292
  %v420 = vpack.c.b16 %v295, %v294
  %v421 = vpack.c.b16 %v297, %v296
  %v422 = vpack.c.b16 %v299, %v298
  %v423 = vpack.c.b16 %v301, %v300
  %v424 = vpack.c.b16 %v303, %v302
  %v425 = vpack.c.b16 %v305, %v304
  %v426 = vpack.c.b16 %v307, %v306
  %v427 = vpack.c.b16 %v309, %v308
  %v428 = vpack.c.b16 %v311, %v310
  %v429 = vpack.c.b16 %v313, %v312
  %v430 = vpack.c.b16 %v315, %v314
  %v431 = vpack.c.b16 %v317, %v316
  %v432 = vpack.c.b16 %v319, %v318
  %v433 = vpack.c.b16 %v321, %v320
  %v434 = vpack.c.b16 %v323, %v322
  %v435 = vpack.c.b16 %v325, %v324
  %v436 = vpack.c.b16 %v327, %v326
  %v437 = vpack.c.b16 %v329, %v328
  %v438 = vpack.c.b16 %v331, %v330
  %v439 = vpack.c.b16 %v333, %v332
  %v440 = vpack.c.b16 %v335, %v334
  %v441 = vpack.c.b16 %v337, %v336
  %v442 = vpack.c.b16 %v339, %v338
  %v443 = vpack.c.b16 %v341, %v340
  %v444 = vpack.c.b16 %v343, %v342
  %v445 = vpack.c.b16 %v345, %v344
  %v446 = vpack.c.b16 %v347, %v346
  %v447 = vpack.c.b16 %v349, %v348
  %v448 = vpack.c.b16 %v351, %v350
  %v449 = vpack.c.b16 %v353, %v352
  %v450 = vpack.c.b16 %v355, %v354
  %v451 = vpack.c.b16 %v357, %v356
  %v452 = vpack.c.b16 %v359, %v358
  %v453 = vpack.c.b16 %v361, %v360
  %v454 = vpack.c.b16 %v363, %v362
  %v455 = vpack.c.b16 %v365, %v364
  %v456 = vpack.c.b16 %v367, %v366
  %v457 = vpack.c.b16 %v369, %v368
  %v458 = vpack.c.b16 %v371, %v370
  %v459 = vpack.c.b16 %v373, %v372
  %v460 = vpack.c.b16 %v375, %v374
  %v461 = vpack.c.b16 %v377, %v376
  %v462 = vpack.c.b16 %v379, %v378
  %v463 = vpack.c.b16 %v381, %v380
  %v464 = vpack.c.b16 %v383, %v382
  %v465 = vpack.c.b16 %v385, %v384
  %v466 = vpack.c.b16 %v387, %v386
  %v467 = vpack.c.b16 %v389, %v388
  %v468 = vpack.c.b16 %v391, %v390
  %v469 = vpack.c.b16 %v393, %v392
  %v470 = vpack.c.b16 %v395, %v394
  %v471 = vpack.c.b16 %v397, %v396
  %v472 = vpack.c.b16 %v399, %v398
  %v473 = vpack.c.b16 %v401, %v400
  %v474 = vpack.c.b16 %v403, %v402
  %v475 = vpack.c.b16 %v405, %v404
  %v476 = vpack.c.b16 %v407, %v406
  %v477 = vpack.c.b16 %v409, %v408
  %v478 = vpack.c.b16 %v411, %v410
  %v479 = vpack.c.b16 %v413, %v412
  %v480 = vpack.c.b16 %v415, %v414
  %v481 = vpack.c.b16 %v417, %v416
  %v562 = vunpack.c.l.b16 %v146
  %v563 = vunpack.c.l.b16 %v147
  %v564 = vunpack.c.l.b16 %v148
  %v565 = vunpack.c.l.b16 %v149
  %v566 = vunpack.c.l.b16 %v150
  %v567 = vunpack.c.l.b16 %v151
  %v568 = vunpack.c.l.b16 %v152
  %v569 = vunpack.c.l.b16 %v153
  %v570 = vunpack.c.l.b16 %v154
  %v571 = vunpack.c.l.b16 %v155
  %v572 = vunpack.c.l.b16 %v156
  %v573 = vunpack.c.l.b16 %v157
  %v574 = vunpack.c.l.b16 %v158
  %v575 = vunpack.c.l.b16 %v159
  %v576 = vunpack.c.l.b16 %v160
  %v577 = vunpack.c.l.b16 %v161
  %v578 = vpack.c.b16 %v563, %v562
  %v579 = vpack.c.b16 %v565, %v564
  %v580 = vpack.c.b16 %v567, %v566
  %v581 = vpack.c.b16 %v569, %v568
  %v582 = vpack.c.b16 %v571, %v570
  %v583 = vpack.c.b16 %v573, %v572
  %v584 = vpack.c.b16 %v575, %v574
  %v585 = vpack.c.b16 %v577, %v576
  %594 = vmatprep.subr.bf16.mxu0 0
  %595 = vmatpush1.bf16.msra.mxu0 %v578
  %596 = vmatprep.subr.bf16.mxu0 0
  %597 = vmatpush1.bf16.msra.mxu0 %v579
  %598 = vmatprep.subr.bf16.mxu0 0
  %599 = vmatpush1.bf16.msra.mxu0 %v580
  %600 = vmatprep.subr.bf16.mxu0 0
  %601 = vmatpush1.bf16.msra.mxu0 %v581
  %602 = vmatprep.subr.bf16.mxu0 0
  %603 = vmatpush1.bf16.msra.mxu0 %v582
  %604 = vmatprep.subr.bf16.mxu0 0
  %605 = vmatpush1.bf16.msra.mxu0 %v583
  %606 = vmatprep.subr.bf16.mxu0 0
  %607 = vmatpush1.bf16.msra.mxu0 %v584
  %608 = vmatprep.subr.bf16.mxu0 0
  %609 = vmatpush1.bf16.msra.mxu0 %v585
  %610 = vmatprep.subr.bf16.mxu0 0
  %611 = vmatpush1.bf16.msra.mxu0 0
  %612 = vmatprep.subr.bf16.mxu0 0
  %613 = vmatpush1.bf16.msra.mxu0 0
  %614 = vmatprep.subr.bf16.mxu0 0
  %615 = vmatpush1.bf16.msra.mxu0 0
  %616 = vmatprep.subr.bf16.mxu0 0
  %617 = vmatpush1.bf16.msra.mxu0 0
  %618 = vmatprep.subr.bf16.mxu0 0
  %619 = vmatpush1.bf16.msra.mxu0 0
  %620 = vmatprep.subr.bf16.mxu0 0
  %621 = vmatpush1.bf16.msra.mxu0 0
  %622 = vmatprep.subr.bf16.mxu0 0
  %623 = vmatpush1.bf16.msra.mxu0 0
  %624 = vmatprep.subr.bf16.mxu0 0
  %625 = vmatpush1.bf16.msra.mxu0 0
  %626 = vmatprep.mubr.bf16.mxu0 0
  %627 = vmatmul.mubr.bf16.gmra.mrb[0].mxu0 %v418
  %v628 = vpop.f32.mrb[0].mxu0
  %v629 = vadd.f32 0.0, %v628
  %v630 = vpop.f32.mrb[0].mxu0
  %v631 = vpop.f32.mrb[0].mxu0
  %v632 = vadd.f32 0.0, %v631
  %v633 = vpop.f32.mrb[0].mxu0
  %634 = vmatprep.mubr.bf16.mxu0 0
  %635 = vmatmul.mubr.bf16.gmra.mrb[0].mxu0 %v419
  %v636 = vpop.f32.mrb[0].mxu0
  %v637 = vadd.f32 0.0, %v636
  %v638 = vpop.f32.mrb[0].mxu0
  %v639 = vpop.f32.mrb[0].mxu0
  %v640 = vadd.f32 0.0, %v639
  %v641 = vpop.f32.mrb[0].mxu0
  %642 = vmatprep.mubr.bf16.mxu0 0
  %643 = vmatmul.mubr.bf16.gmra.mrb[0].mxu0 %v420
  %v644 = vpop.f32.mrb[0].mxu0
  %v645 = vadd.f32 0.0, %v644
  %v646 = vpop.f32.mrb[0].mxu0
  %v647 = vpop.f32.mrb[0].mxu0
  %v648 = vadd.f32 0.0, %v647
  %v649 = vpop.f32.mrb[0].mxu0
  %650 = vmatprep.mubr.bf16.mxu0 0
  %651 = vmatmul.mubr.bf16.gmra.mrb[0].mxu0 %v421
  %v652 = vpop.f32.mrb[0].mxu0
  %v653 = vadd.f32 0.0, %v652
  %v654 = vpop.f32.mrb[0].mxu0
  %v655 = vpop.f32.mrb[0].mxu0
  %v656 = vadd.f32 0.0, %v655
  %v657 = vpop.f32.mrb[0].mxu0
  %658 = vmatprep.mubr.bf16.mxu0 0
  %659 = vmatmul.mubr.bf16.gmra.mrb[0].mxu0 %v422
  %v660 = vpop.f32.mrb[0].mxu0
  %v661 = vadd.f32 0.0, %v660
  %v662 = vpop.f32.mrb[0].mxu0
  %v663 = vpop.f32.mrb[0].mxu0
  %v664 = vadd.f32 0.0, %v663
  %v665 = vpop.f32.mrb[0].mxu0
  %666 = vmatprep.mubr.bf16.mxu0 0
  %667 = vmatmul.mubr.bf16.gmra.mrb[0].mxu0 %v423
  %v668 = vpop.f32.mrb[0].mxu0
  %v669 = vadd.f32 0.0, %v668
  %v670 = vpop.f32.mrb[0].mxu0
  %v671 = vpop.f32.mrb[0].mxu0
  %v672 = vadd.f32 0.0, %v671
  %v673 = vpop.f32.mrb[0].mxu0
  %674 = vmatprep.mubr.bf16.mxu0 0
  %675 = vmatmul.mubr.bf16.gmra.mrb[0].mxu0 %v424
  %v676 = vpop.f32.mrb[0].mxu0
  %v677 = vadd.f32 0.0, %v676
  %v678 = vpop.f32.mrb[0].mxu0
  %v679 = vpop.f32.mrb[0].mxu0
  %v680 = vadd.f32 0.0, %v679
  %v681 = vpop.f32.mrb[0].mxu0
  %682 = vmatprep.mubr.bf16.mxu0 0
  %683 = vmatmul.mubr.bf16.gmra.mrb[0].mxu0 %v425
  %v684 = vpop.f32.mrb[0].mxu0
  %v685 = vadd.f32 0.0, %v684
  %v686 = vpop.f32.mrb[0].mxu0
  %v687 = vpop.f32.mrb[0].mxu0
  %v688 = vadd.f32 0.0, %v687
  %v689 = vpop.f32.mrb[0].mxu0
  %690 = vmatprep.mubr.bf16.mxu0 0
  %691 = vmatmul.mubr.bf16.gmra.mrb[0].mxu0 %v426
  %v692 = vpop.f32.mrb[0].mxu0
  %v693 = vadd.f32 0.0, %v692
  %v694 = vpop.f32.mrb[0].mxu0
  %v695 = vpop.f32.mrb[0].mxu0
  %v696 = vadd.f32 0.0, %v695
  %v697 = vpop.f32.mrb[0].mxu0
  %698 = vmatprep.mubr.bf16.mxu0 0
  %699 = vmatmul.mubr.bf16.gmra.mrb[0].mxu0 %v427
  %v700 = vpop.f32.mrb[0].mxu0
  %v701 = vadd.f32 0.0, %v700
  %v702 = vpop.f32.mrb[0].mxu0
  %v703 = vpop.f32.mrb[0].mxu0
  %v704 = vadd.f32 0.0, %v703
  %v705 = vpop.f32.mrb[0].mxu0
  %706 = vmatprep.mubr.bf16.mxu0 0
  %707 = vmatmul.mubr.bf16.gmra.mrb[0].mxu0 %v428
  %v708 = vpop.f32.mrb[0].mxu0
  %v709 = vadd.f32 0.0, %v708
  %v710 = vpop.f32.mrb[0].mxu0
  %v711 = vpop.f32.mrb[0].mxu0
  %v712 = vadd.f32 0.0, %v711
  %v713 = vpop.f32.mrb[0].mxu0
  %714 = vmatprep.mubr.bf16.mxu0 0
  %715 = vmatmul.mubr.bf16.gmra.mrb[0].mxu0 %v429
  %v716 = vpop.f32.mrb[0].mxu0
  %v717 = vadd.f32 0.0, %v716
  %v718 = vpop.f32.mrb[0].mxu0
  %v719 = vpop.f32.mrb[0].mxu0
  %v720 = vadd.f32 0.0, %v719
  %v721 = vpop.f32.mrb[0].mxu0
  %722 = vmatprep.mubr.bf16.mxu0 0
  %723 = vmatmul.mubr.bf16.gmra.mrb[0].mxu0 %v430
  %v724 = vpop.f32.mrb[0].mxu0
  %v725 = vadd.f32 0.0, %v724
  %v726 = vpop.f32.mrb[0].mxu0
  %v727 = vpop.f32.mrb[0].mxu0
  %v728 = vadd.f32 0.0, %v727
  %v729 = vpop.f32.mrb[0].mxu0
  %730 = vmatprep.mubr.bf16.mxu0 0
  %731 = vmatmul.mubr.bf16.gmra.mrb[0].mxu0 %v431
  %v732 = vpop.f32.mrb[0].mxu0
  %v733 = vadd.f32 0.0, %v732
  %v734 = vpop.f32.mrb[0].mxu0
  %v735 = vpop.f32.mrb[0].mxu0
  %v736 = vadd.f32 0.0, %v735
  %v737 = vpop.f32.mrb[0].mxu0
  %738 = vmatprep.mubr.bf16.mxu0 0
  %739 = vmatmul.mubr.bf16.gmra.mrb[0].mxu0 %v432
  %v740 = vpop.f32.mrb[0].mxu0
  %v741 = vadd.f32 0.0, %v740
  %v742 = vpop.f32.mrb[0].mxu0
  %v743 = vpop.f32.mrb[0].mxu0
  %v744 = vadd.f32 0.0, %v743
  %v745 = vpop.f32.mrb[0].mxu0
  %746 = vmatprep.mubr.bf16.mxu0 0
  %747 = vmatmul.mubr.bf16.gmra.mrb[0].mxu0 %v433
  %v748 = vpop.f32.mrb[0].mxu0
  %v749 = vadd.f32 0.0, %v748
  %v750 = vpop.f32.mrb[0].mxu0
  %v751 = vpop.f32.mrb[0].mxu0
  %v752 = vadd.f32 0.0, %v751
  %v753 = vpop.f32.mrb[0].mxu0
  %754 = vmatprep.mubr.bf16.mxu0 0
  %755 = vmatmul.mubr.bf16.gmra.mrb[0].mxu0 %v434
  %v756 = vpop.f32.mrb[0].mxu0
  %v757 = vadd.f32 0.0, %v756
  %v758 = vpop.f32.mrb[0].mxu0
  %v759 = vpop.f32.mrb[0].mxu0
  %v760 = vadd.f32 0.0, %v759
  %v761 = vpop.f32.mrb[0].mxu0
  %762 = vmatprep.mubr.bf16.mxu0 0
  %763 = vmatmul.mubr.bf16.gmra.mrb[0].mxu0 %v435
  %v764 = vpop.f32.mrb[0].mxu0
  %v765 = vadd.f32 0.0, %v764
  %v766 = vpop.f32.mrb[0].mxu0
  %v767 = vpop.f32.mrb[0].mxu0
  %v768 = vadd.f32 0.0, %v767
  %v769 = vpop.f32.mrb[0].mxu0
  %770 = vmatprep.mubr.bf16.mxu0 0
  %771 = vmatmul.mubr.bf16.gmra.mrb[0].mxu0 %v436
  %v772 = vpop.f32.mrb[0].mxu0
  %v773 = vadd.f32 0.0, %v772
  %v774 = vpop.f32.mrb[0].mxu0
  %v775 = vpop.f32.mrb[0].mxu0
  %v776 = vadd.f32 0.0, %v775
  %v777 = vpop.f32.mrb[0].mxu0
  %778 = vmatprep.mubr.bf16.mxu0 0
  %779 = vmatmul.mubr.bf16.gmra.mrb[0].mxu0 %v437
  %v780 = vpop.f32.mrb[0].mxu0
  %v781 = vadd.f32 0.0, %v780
  %v782 = vpop.f32.mrb[0].mxu0
  %v783 = vpop.f32.mrb[0].mxu0
  %v784 = vadd.f32 0.0, %v783
  %v785 = vpop.f32.mrb[0].mxu0
  %786 = vmatprep.mubr.bf16.mxu0 0
  %787 = vmatmul.mubr.bf16.gmra.mrb[0].mxu0 %v438
  %v788 = vpop.f32.mrb[0].mxu0
  %v789 = vadd.f32 0.0, %v788
  %v790 = vpop.f32.mrb[0].mxu0
  %v791 = vpop.f32.mrb[0].mxu0
  %v792 = vadd.f32 0.0, %v791
  %v793 = vpop.f32.mrb[0].mxu0
  %794 = vmatprep.mubr.bf16.mxu0 0
  %795 = vmatmul.mubr.bf16.gmra.mrb[0].mxu0 %v439
  %v796 = vpop.f32.mrb[0].mxu0
  %v797 = vadd.f32 0.0, %v796
  %v798 = vpop.f32.mrb[0].mxu0
  %v799 = vpop.f32.mrb[0].mxu0
  %v800 = vadd.f32 0.0, %v799
  %v801 = vpop.f32.mrb[0].mxu0
  %802 = vmatprep.mubr.bf16.mxu0 0
  %803 = vmatmul.mubr.bf16.gmra.mrb[0].mxu0 %v440
  %v804 = vpop.f32.mrb[0].mxu0
  %v805 = vadd.f32 0.0, %v804
  %v806 = vpop.f32.mrb[0].mxu0
  %v807 = vpop.f32.mrb[0].mxu0
  %v808 = vadd.f32 0.0, %v807
  %v809 = vpop.f32.mrb[0].mxu0
  %810 = vmatprep.mubr.bf16.mxu0 0
  %811 = vmatmul.mubr.bf16.gmra.mrb[0].mxu0 %v441
  %v812 = vpop.f32.mrb[0].mxu0
  %v813 = vadd.f32 0.0, %v812
  %v814 = vpop.f32.mrb[0].mxu0
  %v815 = vpop.f32.mrb[0].mxu0
  %v816 = vadd.f32 0.0, %v815
  %v817 = vpop.f32.mrb[0].mxu0
  %818 = vmatprep.mubr.bf16.mxu0 0
  %819 = vmatmul.mubr.bf16.gmra.mrb[0].mxu0 %v442
  %v820 = vpop.f32.mrb[0].mxu0
  %v821 = vadd.f32 0.0, %v820
  %v822 = vpop.f32.mrb[0].mxu0
  %v823 = vpop.f32.mrb[0].mxu0
  %v824 = vadd.f32 0.0, %v823
  %v825 = vpop.f32.mrb[0].mxu0
  %826 = vmatprep.mubr.bf16.mxu0 0
  %827 = vmatmul.mubr.bf16.gmra.mrb[0].mxu0 %v443
  %v828 = vpop.f32.mrb[0].mxu0
  %v829 = vadd.f32 0.0, %v828
  %v830 = vpop.f32.mrb[0].mxu0
  %v831 = vpop.f32.mrb[0].mxu0
  %v832 = vadd.f32 0.0, %v831
  %v833 = vpop.f32.mrb[0].mxu0
  %834 = vmatprep.mubr.bf16.mxu0 0
  %835 = vmatmul.mubr.bf16.gmra.mrb[0].mxu0 %v444
  %v836 = vpop.f32.mrb[0].mxu0
  %v837 = vadd.f32 0.0, %v836
  %v838 = vpop.f32.mrb[0].mxu0
  %v839 = vpop.f32.mrb[0].mxu0
  %v840 = vadd.f32 0.0, %v839
  %v841 = vpop.f32.mrb[0].mxu0
  %842 = vmatprep.mubr.bf16.mxu0 0
  %843 = vmatmul.mubr.bf16.gmra.mrb[0].mxu0 %v445
  %v844 = vpop.f32.mrb[0].mxu0
  %v845 = vadd.f32 0.0, %v844
  %v846 = vpop.f32.mrb[0].mxu0
  %v847 = vpop.f32.mrb[0].mxu0
  %v848 = vadd.f32 0.0, %v847
  %v849 = vpop.f32.mrb[0].mxu0
  %850 = vmatprep.mubr.bf16.mxu0 0
  %851 = vmatmul.mubr.bf16.gmra.mrb[0].mxu0 %v446
  %v852 = vpop.f32.mrb[0].mxu0
  %v853 = vadd.f32 0.0, %v852
  %v854 = vpop.f32.mrb[0].mxu0
  %v855 = vpop.f32.mrb[0].mxu0
  %v856 = vadd.f32 0.0, %v855
  %v857 = vpop.f32.mrb[0].mxu0
  %858 = vmatprep.mubr.bf16.mxu0 0
  %859 = vmatmul.mubr.bf16.gmra.mrb[0].mxu0 %v447
  %v860 = vpop.f32.mrb[0].mxu0
  %v861 = vadd.f32 0.0, %v860
  %v862 = vpop.f32.mrb[0].mxu0
  %v863 = vpop.f32.mrb[0].mxu0
  %v864 = vadd.f32 0.0, %v863
  %v865 = vpop.f32.mrb[0].mxu0
  %866 = vmatprep.mubr.bf16.mxu0 0
  %867 = vmatmul.mubr.bf16.gmra.mrb[0].mxu0 %v448
  %v868 = vpop.f32.mrb[0].mxu0
  %v869 = vadd.f32 0.0, %v868
  %v870 = vpop.f32.mrb[0].mxu0
  %v871 = vpop.f32.mrb[0].mxu0
  %v872 = vadd.f32 0.0, %v871
  %v873 = vpop.f32.mrb[0].mxu0
  %874 = vmatprep.mubr.bf16.mxu0 0
  %875 = vmatmul.mubr.bf16.gmra.mrb[0].mxu0 %v449
  %v876 = vpop.f32.mrb[0].mxu0
  %v877 = vadd.f32 0.0, %v876
  %v878 = vpop.f32.mrb[0].mxu0
  %v879 = vpop.f32.mrb[0].mxu0
  %v880 = vadd.f32 0.0, %v879
  %v881 = vpop.f32.mrb[0].mxu0
  %882 = vmatprep.mubr.bf16.mxu0 0
  %883 = vmatmul.mubr.bf16.gmra.mrb[0].mxu0 %v450
  %v884 = vpop.f32.mrb[0].mxu0
  %v885 = vadd.f32 0.0, %v884
  %v886 = vpop.f32.mrb[0].mxu0
  %v887 = vpop.f32.mrb[0].mxu0
  %v888 = vadd.f32 0.0, %v887
  %v889 = vpop.f32.mrb[0].mxu0
  %890 = vmatprep.mubr.bf16.mxu0 0
  %891 = vmatmul.mubr.bf16.gmra.mrb[0].mxu0 %v451
  %v892 = vpop.f32.mrb[0].mxu0
  %v893 = vadd.f32 0.0, %v892
  %v894 = vpop.f32.mrb[0].mxu0
  %v895 = vpop.f32.mrb[0].mxu0
  %v896 = vadd.f32 0.0, %v895
  %v897 = vpop.f32.mrb[0].mxu0
  %898 = vmatprep.mubr.bf16.mxu0 0
  %899 = vmatmul.mubr.bf16.gmra.mrb[0].mxu0 %v452
  %v900 = vpop.f32.mrb[0].mxu0
  %v901 = vadd.f32 0.0, %v900
  %v902 = vpop.f32.mrb[0].mxu0
  %v903 = vpop.f32.mrb[0].mxu0
  %v904 = vadd.f32 0.0, %v903
  %v905 = vpop.f32.mrb[0].mxu0
  %906 = vmatprep.mubr.bf16.mxu0 0
  %907 = vmatmul.mubr.bf16.gmra.mrb[0].mxu0 %v453
  %v908 = vpop.f32.mrb[0].mxu0
  %v909 = vadd.f32 0.0, %v908
  %v910 = vpop.f32.mrb[0].mxu0
  %v911 = vpop.f32.mrb[0].mxu0
  %v912 = vadd.f32 0.0, %v911
  %v913 = vpop.f32.mrb[0].mxu0
  %914 = vmatprep.mubr.bf16.mxu0 0
  %915 = vmatmul.mubr.bf16.gmra.mrb[0].mxu0 %v454
  %v916 = vpop.f32.mrb[0].mxu0
  %v917 = vadd.f32 0.0, %v916
  %v918 = vpop.f32.mrb[0].mxu0
  %v919 = vpop.f32.mrb[0].mxu0
  %v920 = vadd.f32 0.0, %v919
  %v921 = vpop.f32.mrb[0].mxu0
  %922 = vmatprep.mubr.bf16.mxu0 0
  %923 = vmatmul.mubr.bf16.gmra.mrb[0].mxu0 %v455
  %v924 = vpop.f32.mrb[0].mxu0
  %v925 = vadd.f32 0.0, %v924
  %v926 = vpop.f32.mrb[0].mxu0
  %v927 = vpop.f32.mrb[0].mxu0
  %v928 = vadd.f32 0.0, %v927
  %v929 = vpop.f32.mrb[0].mxu0
  %930 = vmatprep.mubr.bf16.mxu0 0
  %931 = vmatmul.mubr.bf16.gmra.mrb[0].mxu0 %v456
  %v932 = vpop.f32.mrb[0].mxu0
  %v933 = vadd.f32 0.0, %v932
  %v934 = vpop.f32.mrb[0].mxu0
  %v935 = vpop.f32.mrb[0].mxu0
  %v936 = vadd.f32 0.0, %v935
  %v937 = vpop.f32.mrb[0].mxu0
  %938 = vmatprep.mubr.bf16.mxu0 0
  %939 = vmatmul.mubr.bf16.gmra.mrb[0].mxu0 %v457
  %v940 = vpop.f32.mrb[0].mxu0
  %v941 = vadd.f32 0.0, %v940
  %v942 = vpop.f32.mrb[0].mxu0
  %v943 = vpop.f32.mrb[0].mxu0
  %v944 = vadd.f32 0.0, %v943
  %v945 = vpop.f32.mrb[0].mxu0
  %946 = vmatprep.mubr.bf16.mxu0 0
  %947 = vmatmul.mubr.bf16.gmra.mrb[0].mxu0 %v458
  %v948 = vpop.f32.mrb[0].mxu0
  %v949 = vadd.f32 0.0, %v948
  %v950 = vpop.f32.mrb[0].mxu0
  %v951 = vpop.f32.mrb[0].mxu0
  %v952 = vadd.f32 0.0, %v951
  %v953 = vpop.f32.mrb[0].mxu0
  %954 = vmatprep.mubr.bf16.mxu0 0
  %955 = vmatmul.mubr.bf16.gmra.mrb[0].mxu0 %v459
  %v956 = vpop.f32.mrb[0].mxu0
  %v957 = vadd.f32 0.0, %v956
  %v958 = vpop.f32.mrb[0].mxu0
  %v959 = vpop.f32.mrb[0].mxu0
  %v960 = vadd.f32 0.0, %v959
  %v961 = vpop.f32.mrb[0].mxu0
  %962 = vmatprep.mubr.bf16.mxu0 0
  %963 = vmatmul.mubr.bf16.gmra.mrb[0].mxu0 %v460
  %v964 = vpop.f32.mrb[0].mxu0
  %v965 = vadd.f32 0.0, %v964
  %v966 = vpop.f32.mrb[0].mxu0
  %v967 = vpop.f32.mrb[0].mxu0
  %v968 = vadd.f32 0.0, %v967
  %v969 = vpop.f32.mrb[0].mxu0
  %970 = vmatprep.mubr.bf16.mxu0 0
  %971 = vmatmul.mubr.bf16.gmra.mrb[0].mxu0 %v461
  %v972 = vpop.f32.mrb[0].mxu0
  %v973 = vadd.f32 0.0, %v972
  %v974 = vpop.f32.mrb[0].mxu0
  %v975 = vpop.f32.mrb[0].mxu0
  %v976 = vadd.f32 0.0, %v975
  %v977 = vpop.f32.mrb[0].mxu0
  %978 = vmatprep.mubr.bf16.mxu0 0
  %979 = vmatmul.mubr.bf16.gmra.mrb[0].mxu0 %v462
  %v980 = vpop.f32.mrb[0].mxu0
  %v981 = vadd.f32 0.0, %v980
  %v982 = vpop.f32.mrb[0].mxu0
  %v983 = vpop.f32.mrb[0].mxu0
  %v984 = vadd.f32 0.0, %v983
  %v985 = vpop.f32.mrb[0].mxu0
  %986 = vmatprep.mubr.bf16.mxu0 0
  %987 = vmatmul.mubr.bf16.gmra.mrb[0].mxu0 %v463
  %v988 = vpop.f32.mrb[0].mxu0
  %v989 = vadd.f32 0.0, %v988
  %v990 = vpop.f32.mrb[0].mxu0
  %v991 = vpop.f32.mrb[0].mxu0
  %v992 = vadd.f32 0.0, %v991
  %v993 = vpop.f32.mrb[0].mxu0
  %994 = vmatprep.mubr.bf16.mxu0 0
  %995 = vmatmul.mubr.bf16.gmra.mrb[0].mxu0 %v464
  %v996 = vpop.f32.mrb[0].mxu0
  %v997 = vadd.f32 0.0, %v996
  %v998 = vpop.f32.mrb[0].mxu0
  %v999 = vpop.f32.mrb[0].mxu0
  %v1000 = vadd.f32 0.0, %v999
  %v1001 = vpop.f32.mrb[0].mxu0
  %1002 = vmatprep.mubr.bf16.mxu0 0
  %1003 = vmatmul.mubr.bf16.gmra.mrb[0].mxu0 %v465
  %v1004 = vpop.f32.mrb[0].mxu0
  %v1005 = vadd.f32 0.0, %v1004
  %v1006 = vpop.f32.mrb[0].mxu0
  %v1007 = vpop.f32.mrb[0].mxu0
  %v1008 = vadd.f32 0.0, %v1007
  %v1009 = vpop.f32.mrb[0].mxu0
  %1010 = vmatprep.mubr.bf16.mxu0 0
  %1011 = vmatmul.mubr.bf16.gmra.mrb[0].mxu0 %v466
  %v1012 = vpop.f32.mrb[0].mxu0
  %v1013 = vadd.f32 0.0, %v1012
  %v1014 = vpop.f32.mrb[0].mxu0
  %v1015 = vpop.f32.mrb[0].mxu0
  %v1016 = vadd.f32 0.0, %v1015
  %v1017 = vpop.f32.mrb[0].mxu0
  %1018 = vmatprep.mubr.bf16.mxu0 0
  %1019 = vmatmul.mubr.bf16.gmra.mrb[0].mxu0 %v467
  %v1020 = vpop.f32.mrb[0].mxu0
  %v1021 = vadd.f32 0.0, %v1020
  %v1022 = vpop.f32.mrb[0].mxu0
  %v1023 = vpop.f32.mrb[0].mxu0
  %v1024 = vadd.f32 0.0, %v1023
  %v1025 = vpop.f32.mrb[0].mxu0
  %1026 = vmatprep.mubr.bf16.mxu0 0
  %1027 = vmatmul.mubr.bf16.gmra.mrb[0].mxu0 %v468
  %v1028 = vpop.f32.mrb[0].mxu0
  %v1029 = vadd.f32 0.0, %v1028
  %v1030 = vpop.f32.mrb[0].mxu0
  %v1031 = vpop.f32.mrb[0].mxu0
  %v1032 = vadd.f32 0.0, %v1031
  %v1033 = vpop.f32.mrb[0].mxu0
  %1034 = vmatprep.mubr.bf16.mxu0 0
  %1035 = vmatmul.mubr.bf16.gmra.mrb[0].mxu0 %v469
  %v1036 = vpop.f32.mrb[0].mxu0
  %v1037 = vadd.f32 0.0, %v1036
  %v1038 = vpop.f32.mrb[0].mxu0
  %v1039 = vpop.f32.mrb[0].mxu0
  %v1040 = vadd.f32 0.0, %v1039
  %v1041 = vpop.f32.mrb[0].mxu0
  %1042 = vmatprep.mubr.bf16.mxu0 0
  %1043 = vmatmul.mubr.bf16.gmra.mrb[0].mxu0 %v470
  %v1044 = vpop.f32.mrb[0].mxu0
  %v1045 = vadd.f32 0.0, %v1044
  %v1046 = vpop.f32.mrb[0].mxu0
  %v1047 = vpop.f32.mrb[0].mxu0
  %v1048 = vadd.f32 0.0, %v1047
  %v1049 = vpop.f32.mrb[0].mxu0
  %1050 = vmatprep.mubr.bf16.mxu0 0
  %1051 = vmatmul.mubr.bf16.gmra.mrb[0].mxu0 %v471
  %v1052 = vpop.f32.mrb[0].mxu0
  %v1053 = vadd.f32 0.0, %v1052
  %v1054 = vpop.f32.mrb[0].mxu0
  %v1055 = vpop.f32.mrb[0].mxu0
  %v1056 = vadd.f32 0.0, %v1055
  %v1057 = vpop.f32.mrb[0].mxu0
  %1058 = vmatprep.mubr.bf16.mxu0 0
  %1059 = vmatmul.mubr.bf16.gmra.mrb[0].mxu0 %v472
  %v1060 = vpop.f32.mrb[0].mxu0
  %v1061 = vadd.f32 0.0, %v1060
  %v1062 = vpop.f32.mrb[0].mxu0
  %v1063 = vpop.f32.mrb[0].mxu0
  %v1064 = vadd.f32 0.0, %v1063
  %v1065 = vpop.f32.mrb[0].mxu0
  %1066 = vmatprep.mubr.bf16.mxu0 0
  %1067 = vmatmul.mubr.bf16.gmra.mrb[0].mxu0 %v473
  %v1068 = vpop.f32.mrb[0].mxu0
  %v1069 = vadd.f32 0.0, %v1068
  %v1070 = vpop.f32.mrb[0].mxu0
  %v1071 = vpop.f32.mrb[0].mxu0
  %v1072 = vadd.f32 0.0, %v1071
  %v1073 = vpop.f32.mrb[0].mxu0
  %1074 = vmatprep.mubr.bf16.mxu0 0
  %1075 = vmatmul.mubr.bf16.gmra.mrb[0].mxu0 %v474
  %v1076 = vpop.f32.mrb[0].mxu0
  %v1077 = vadd.f32 0.0, %v1076
  %v1078 = vpop.f32.mrb[0].mxu0
  %v1079 = vpop.f32.mrb[0].mxu0
  %v1080 = vadd.f32 0.0, %v1079
  %v1081 = vpop.f32.mrb[0].mxu0
  %1082 = vmatprep.mubr.bf16.mxu0 0
  %1083 = vmatmul.mubr.bf16.gmra.mrb[0].mxu0 %v475
  %v1084 = vpop.f32.mrb[0].mxu0
  %v1085 = vadd.f32 0.0, %v1084
  %v1086 = vpop.f32.mrb[0].mxu0
  %v1087 = vpop.f32.mrb[0].mxu0
  %v1088 = vadd.f32 0.0, %v1087
  %v1089 = vpop.f32.mrb[0].mxu0
  %1090 = vmatprep.mubr.bf16.mxu0 0
  %1091 = vmatmul.mubr.bf16.gmra.mrb[0].mxu0 %v476
  %v1092 = vpop.f32.mrb[0].mxu0
  %v1093 = vadd.f32 0.0, %v1092
  %v1094 = vpop.f32.mrb[0].mxu0
  %v1095 = vpop.f32.mrb[0].mxu0
  %v1096 = vadd.f32 0.0, %v1095
  %v1097 = vpop.f32.mrb[0].mxu0
  %1098 = vmatprep.mubr.bf16.mxu0 0
  %1099 = vmatmul.mubr.bf16.gmra.mrb[0].mxu0 %v477
  %v1100 = vpop.f32.mrb[0].mxu0
  %v1101 = vadd.f32 0.0, %v1100
  %v1102 = vpop.f32.mrb[0].mxu0
  %v1103 = vpop.f32.mrb[0].mxu0
  %v1104 = vadd.f32 0.0, %v1103
  %v1105 = vpop.f32.mrb[0].mxu0
  %1106 = vmatprep.mubr.bf16.mxu0 0
  %1107 = vmatmul.mubr.bf16.gmra.mrb[0].mxu0 %v478
  %v1108 = vpop.f32.mrb[0].mxu0
  %v1109 = vadd.f32 0.0, %v1108
  %v1110 = vpop.f32.mrb[0].mxu0
  %v1111 = vpop.f32.mrb[0].mxu0
  %v1112 = vadd.f32 0.0, %v1111
  %v1113 = vpop.f32.mrb[0].mxu0
  %1114 = vmatprep.mubr.bf16.mxu0 0
  %1115 = vmatmul.mubr.bf16.gmra.mrb[0].mxu0 %v479
  %v1116 = vpop.f32.mrb[0].mxu0
  %v1117 = vadd.f32 0.0, %v1116
  %v1118 = vpop.f32.mrb[0].mxu0
  %v1119 = vpop.f32.mrb[0].mxu0
  %v1120 = vadd.f32 0.0, %v1119
  %v1121 = vpop.f32.mrb[0].mxu0
  %1122 = vmatprep.mubr.bf16.mxu0 0
  %1123 = vmatmul.mubr.bf16.gmra.mrb[0].mxu0 %v480
  %v1124 = vpop.f32.mrb[0].mxu0
  %v1125 = vadd.f32 0.0, %v1124
  %v1126 = vpop.f32.mrb[0].mxu0
  %v1127 = vpop.f32.mrb[0].mxu0
  %v1128 = vadd.f32 0.0, %v1127
  %v1129 = vpop.f32.mrb[0].mxu0
  %1130 = vmatprep.mubr.bf16.mxu0 0
  %1131 = vmatmul.mubr.bf16.gmra.mrb[0].mxu0 %v481
  %v1132 = vpop.f32.mrb[0].mxu0
  %v1133 = vadd.f32 0.0, %v1132
  %v1134 = vpop.f32.mrb[0].mxu0
  %v1135 = vpop.f32.mrb[0].mxu0
  %v1136 = vadd.f32 0.0, %v1135
  %v1137 = vpop.f32.mrb[0].mxu0
  %1138 = vdwg.mxu0
  %v1139 = vld [vmem:[%s2] sm:$0x1]
  %v1141 = vlaneseq
  %v1142 = vshrl.u32 %v1141, 7
  %v1143 = vsub.s32 0, %v1142
  %v1144 = vrot.slane %v1139, %v1143
  %v1146 = vmul.f32 %v629, %v1144
  %v1147 = vmul.f32 %v632, %v1144
  %v1148 = vmul.f32 %v637, %v1144
  %v1149 = vmul.f32 %v640, %v1144
  %v1150 = vmul.f32 %v645, %v1144
  %v1151 = vmul.f32 %v648, %v1144
  %v1152 = vmul.f32 %v653, %v1144
  %v1153 = vmul.f32 %v656, %v1144
  %v1154 = vmul.f32 %v661, %v1144
  %v1155 = vmul.f32 %v664, %v1144
  %v1156 = vmul.f32 %v669, %v1144
  %v1157 = vmul.f32 %v672, %v1144
  %v1158 = vmul.f32 %v677, %v1144
  %v1159 = vmul.f32 %v680, %v1144
  %v1160 = vmul.f32 %v685, %v1144
  %v1161 = vmul.f32 %v688, %v1144
  %v1162 = vmul.f32 %v693, %v1144
  %v1163 = vmul.f32 %v696, %v1144
  %v1164 = vmul.f32 %v701, %v1144
  %v1165 = vmul.f32 %v704, %v1144
  %v1166 = vmul.f32 %v709, %v1144
  %v1167 = vmul.f32 %v712, %v1144
  %v1168 = vmul.f32 %v717, %v1144
  %v1169 = vmul.f32 %v720, %v1144
  %v1170 = vmul.f32 %v725, %v1144
  %v1171 = vmul.f32 %v728, %v1144
  %v1172 = vmul.f32 %v733, %v1144
  %v1173 = vmul.f32 %v736, %v1144
  %v1174 = vmul.f32 %v741, %v1144
  %v1175 = vmul.f32 %v744, %v1144
  %v1176 = vmul.f32 %v749, %v1144
  %v1177 = vmul.f32 %v752, %v1144
  %v1178 = vmul.f32 %v757, %v1144
  %v1179 = vmul.f32 %v760, %v1144
  %v1180 = vmul.f32 %v765, %v1144
  %v1181 = vmul.f32 %v768, %v1144
  %v1182 = vmul.f32 %v773, %v1144
  %v1183 = vmul.f32 %v776, %v1144
  %v1184 = vmul.f32 %v781, %v1144
  %v1185 = vmul.f32 %v784, %v1144
  %v1186 = vmul.f32 %v789, %v1144
  %v1187 = vmul.f32 %v792, %v1144
  %v1188 = vmul.f32 %v797, %v1144
  %v1189 = vmul.f32 %v800, %v1144
  %v1190 = vmul.f32 %v805, %v1144
  %v1191 = vmul.f32 %v808, %v1144
  %v1192 = vmul.f32 %v813, %v1144
  %v1193 = vmul.f32 %v816, %v1144
  %v1194 = vmul.f32 %v821, %v1144
  %v1195 = vmul.f32 %v824, %v1144
  %v1196 = vmul.f32 %v829, %v1144
  %v1197 = vmul.f32 %v832, %v1144
  %v1198 = vmul.f32 %v837, %v1144
  %v1199 = vmul.f32 %v840, %v1144
  %v1200 = vmul.f32 %v845, %v1144
  %v1201 = vmul.f32 %v848, %v1144
  %v1202 = vmul.f32 %v853, %v1144
  %v1203 = vmul.f32 %v856, %v1144
  %v1204 = vmul.f32 %v861, %v1144
  %v1205 = vmul.f32 %v864, %v1144
  %v1206 = vmul.f32 %v869, %v1144
  %v1207 = vmul.f32 %v872, %v1144
  %v1208 = vmul.f32 %v877, %v1144
  %v1209 = vmul.f32 %v880, %v1144
  %v1210 = vmul.f32 %v885, %v1144
  %v1211 = vmul.f32 %v888, %v1144
  %v1212 = vmul.f32 %v893, %v1144
  %v1213 = vmul.f32 %v896, %v1144
  %v1214 = vmul.f32 %v901, %v1144
  %v1215 = vmul.f32 %v904, %v1144
  %v1216 = vmul.f32 %v909, %v1144
  %v1217 = vmul.f32 %v912, %v1144
  %v1218 = vmul.f32 %v917, %v1144
  %v1219 = vmul.f32 %v920, %v1144
  %v1220 = vmul.f32 %v925, %v1144
  %v1221 = vmul.f32 %v928, %v1144
  %v1222 = vmul.f32 %v933, %v1144
  %v1223 = vmul.f32 %v936, %v1144
  %v1224 = vmul.f32 %v941, %v1144
  %v1225 = vmul.f32 %v944, %v1144
  %v1226 = vmul.f32 %v949, %v1144
  %v1227 = vmul.f32 %v952, %v1144
  %v1228 = vmul.f32 %v957, %v1144
  %v1229 = vmul.f32 %v960, %v1144
  %v1230 = vmul.f32 %v965, %v1144
  %v1231 = vmul.f32 %v968, %v1144
  %v1232 = vmul.f32 %v973, %v1144
  %v1233 = vmul.f32 %v976, %v1144
  %v1234 = vmul.f32 %v981, %v1144
  %v1235 = vmul.f32 %v984, %v1144
  %v1236 = vmul.f32 %v989, %v1144
  %v1237 = vmul.f32 %v992, %v1144
  %v1238 = vmul.f32 %v997, %v1144
  %v1239 = vmul.f32 %v1000, %v1144
  %v1240 = vmul.f32 %v1005, %v1144
  %v1241 = vmul.f32 %v1008, %v1144
  %v1242 = vmul.f32 %v1013, %v1144
  %v1243 = vmul.f32 %v1016, %v1144
  %v1244 = vmul.f32 %v1021, %v1144
  %v1245 = vmul.f32 %v1024, %v1144
  %v1246 = vmul.f32 %v1029, %v1144
  %v1247 = vmul.f32 %v1032, %v1144
  %v1248 = vmul.f32 %v1037, %v1144
  %v1249 = vmul.f32 %v1040, %v1144
  %v1250 = vmul.f32 %v1045, %v1144
  %v1251 = vmul.f32 %v1048, %v1144
  %v1252 = vmul.f32 %v1053, %v1144
  %v1253 = vmul.f32 %v1056, %v1144
  %v1254 = vmul.f32 %v1061, %v1144
  %v1255 = vmul.f32 %v1064, %v1144
  %v1256 = vmul.f32 %v1069, %v1144
  %v1257 = vmul.f32 %v1072, %v1144
  %v1258 = vmul.f32 %v1077, %v1144
  %v1259 = vmul.f32 %v1080, %v1144
  %v1260 = vmul.f32 %v1085, %v1144
  %v1261 = vmul.f32 %v1088, %v1144
  %v1262 = vmul.f32 %v1093, %v1144
  %v1263 = vmul.f32 %v1096, %v1144
  %v1264 = vmul.f32 %v1101, %v1144
  %v1265 = vmul.f32 %v1104, %v1144
  %v1266 = vmul.f32 %v1109, %v1144
  %v1267 = vmul.f32 %v1112, %v1144
  %v1268 = vmul.f32 %v1117, %v1144
  %v1269 = vmul.f32 %v1120, %v1144
  %v1270 = vmul.f32 %v1125, %v1144
  %v1271 = vmul.f32 %v1128, %v1144
  %v1272 = vmul.f32 %v1133, %v1144
  %v1273 = vmul.f32 %v1136, %v1144
  %v1274 = vld [vmem:[%s3] sm:$0x1]
  %v1276 = vlaneseq
  %v1277 = vshrl.u32 %v1276, 7
  %v1278 = vsub.s32 0, %v1277
  %v1279 = vrot.slane %v1274, %v1278
  %v1281 = vadd.f32 %v1146, %v1279
  %v1282 = vadd.f32 %v1147, %v1279
  %v1283 = vadd.f32 %v1148, %v1279
  %v1284 = vadd.f32 %v1149, %v1279
  %v1285 = vadd.f32 %v1150, %v1279
  %v1286 = vadd.f32 %v1151, %v1279
  %v1287 = vadd.f32 %v1152, %v1279
  %v1288 = vadd.f32 %v1153, %v1279
  %v1289 = vadd.f32 %v1154, %v1279
  %v1290 = vadd.f32 %v1155, %v1279
  %v1291 = vadd.f32 %v1156, %v1279
  %v1292 = vadd.f32 %v1157, %v1279
  %v1293 = vadd.f32 %v1158, %v1279
  %v1294 = vadd.f32 %v1159, %v1279
  %v1295 = vadd.f32 %v1160, %v1279
  %v1296 = vadd.f32 %v1161, %v1279
  %v1297 = vadd.f32 %v1162, %v1279
  %v1298 = vadd.f32 %v1163, %v1279
  %v1299 = vadd.f32 %v1164, %v1279
  %v1300 = vadd.f32 %v1165, %v1279
  %v1301 = vadd.f32 %v1166, %v1279
  %v1302 = vadd.f32 %v1167, %v1279
  %v1303 = vadd.f32 %v1168, %v1279
  %v1304 = vadd.f32 %v1169, %v1279
  %v1305 = vadd.f32 %v1170, %v1279
  %v1306 = vadd.f32 %v1171, %v1279
  %v1307 = vadd.f32 %v1172, %v1279
  %v1308 = vadd.f32 %v1173, %v1279
  %v1309 = vadd.f32 %v1174, %v1279
  %v1310 = vadd.f32 %v1175, %v1279
  %v1311 = vadd.f32 %v1176, %v1279
  %v1312 = vadd.f32 %v1177, %v1279
  %v1313 = vadd.f32 %v1178, %v1279
  %v1314 = vadd.f32 %v1179, %v1279
  %v1315 = vadd.f32 %v1180, %v1279
  %v1316 = vadd.f32 %v1181, %v1279
  %v1317 = vadd.f32 %v1182, %v1279
  %v1318 = vadd.f32 %v1183, %v1279
  %v1319 = vadd.f32 %v1184, %v1279
  %v1320 = vadd.f32 %v1185, %v1279
  %v1321 = vadd.f32 %v1186, %v1279
  %v1322 = vadd.f32 %v1187, %v1279
  %v1323 = vadd.f32 %v1188, %v1279
  %v1324 = vadd.f32 %v1189, %v1279
  %v1325 = vadd.f32 %v1190, %v1279
  %v1326 = vadd.f32 %v1191, %v1279
  %v1327 = vadd.f32 %v1192, %v1279
  %v1328 = vadd.f32 %v1193, %v1279
  %v1329 = vadd.f32 %v1194, %v1279
  %v1330 = vadd.f32 %v1195, %v1279
  %v1331 = vadd.f32 %v1196, %v1279
  %v1332 = vadd.f32 %v1197, %v1279
  %v1333 = vadd.f32 %v1198, %v1279
  %v1334 = vadd.f32 %v1199, %v1279
  %v1335 = vadd.f32 %v1200, %v1279
  %v1336 = vadd.f32 %v1201, %v1279
  %v1337 = vadd.f32 %v1202, %v1279
  %v1338 = vadd.f32 %v1203, %v1279
  %v1339 = vadd.f32 %v1204, %v1279
  %v1340 = vadd.f32 %v1205, %v1279
  %v1341 = vadd.f32 %v1206, %v1279
  %v1342 = vadd.f32 %v1207, %v1279
  %v1343 = vadd.f32 %v1208, %v1279
  %v1344 = vadd.f32 %v1209, %v1279
  %v1345 = vadd.f32 %v1210, %v1279
  %v1346 = vadd.f32 %v1211, %v1279
  %v1347 = vadd.f32 %v1212, %v1279
  %v1348 = vadd.f32 %v1213, %v1279
  %v1349 = vadd.f32 %v1214, %v1279
  %v1350 = vadd.f32 %v1215, %v1279
  %v1351 = vadd.f32 %v1216, %v1279
  %v1352 = vadd.f32 %v1217, %v1279
  %v1353 = vadd.f32 %v1218, %v1279
  %v1354 = vadd.f32 %v1219, %v1279
  %v1355 = vadd.f32 %v1220, %v1279
  %v1356 = vadd.f32 %v1221, %v1279
  %v1357 = vadd.f32 %v1222, %v1279
  %v1358 = vadd.f32 %v1223, %v1279
  %v1359 = vadd.f32 %v1224, %v1279
  %v1360 = vadd.f32 %v1225, %v1279
  %v1361 = vadd.f32 %v1226, %v1279
  %v1362 = vadd.f32 %v1227, %v1279
  %v1363 = vadd.f32 %v1228, %v1279
  %v1364 = vadd.f32 %v1229, %v1279
  %v1365 = vadd.f32 %v1230, %v1279
  %v1366 = vadd.f32 %v1231, %v1279
  %v1367 = vadd.f32 %v1232, %v1279
  %v1368 = vadd.f32 %v1233, %v1279
  %v1369 = vadd.f32 %v1234, %v1279
  %v1370 = vadd.f32 %v1235, %v1279
  %v1371 = vadd.f32 %v1236, %v1279
  %v1372 = vadd.f32 %v1237, %v1279
  %v1373 = vadd.f32 %v1238, %v1279
  %v1374 = vadd.f32 %v1239, %v1279
  %v1375 = vadd.f32 %v1240, %v1279
  %v1376 = vadd.f32 %v1241, %v1279
  %v1377 = vadd.f32 %v1242, %v1279
  %v1378 = vadd.f32 %v1243, %v1279
  %v1379 = vadd.f32 %v1244, %v1279
  %v1380 = vadd.f32 %v1245, %v1279
  %v1381 = vadd.f32 %v1246, %v1279
  %v1382 = vadd.f32 %v1247, %v1279
  %v1383 = vadd.f32 %v1248, %v1279
  %v1384 = vadd.f32 %v1249, %v1279
  %v1385 = vadd.f32 %v1250, %v1279
  %v1386 = vadd.f32 %v1251, %v1279
  %v1387 = vadd.f32 %v1252, %v1279
  %v1388 = vadd.f32 %v1253, %v1279
  %v1389 = vadd.f32 %v1254, %v1279
  %v1390 = vadd.f32 %v1255, %v1279
  %v1391 = vadd.f32 %v1256, %v1279
  %v1392 = vadd.f32 %v1257, %v1279
  %v1393 = vadd.f32 %v1258, %v1279
  %v1394 = vadd.f32 %v1259, %v1279
  %v1395 = vadd.f32 %v1260, %v1279
  %v1396 = vadd.f32 %v1261, %v1279
  %v1397 = vadd.f32 %v1262, %v1279
  %v1398 = vadd.f32 %v1263, %v1279
  %v1399 = vadd.f32 %v1264, %v1279
  %v1400 = vadd.f32 %v1265, %v1279
  %v1401 = vadd.f32 %v1266, %v1279
  %v1402 = vadd.f32 %v1267, %v1279
  %v1403 = vadd.f32 %v1268, %v1279
  %v1404 = vadd.f32 %v1269, %v1279
  %v1405 = vadd.f32 %v1270, %v1279
  %v1406 = vadd.f32 %v1271, %v1279
  %v1407 = vadd.f32 %v1272, %v1279
  %v1408 = vadd.f32 %v1273, %v1279
  %v1409 = vmax.f32 %v1281, 0.0
  %v1410 = vmax.f32 %v1282, 0.0
  %v1411 = vmax.f32 %v1283, 0.0
  %v1412 = vmax.f32 %v1284, 0.0
  %v1413 = vmax.f32 %v1285, 0.0
  %v1414 = vmax.f32 %v1286, 0.0
  %v1415 = vmax.f32 %v1287, 0.0
  %v1416 = vmax.f32 %v1288, 0.0
  %v1417 = vmax.f32 %v1289, 0.0
  %v1418 = vmax.f32 %v1290, 0.0
  %v1419 = vmax.f32 %v1291, 0.0
  %v1420 = vmax.f32 %v1292, 0.0
  %v1421 = vmax.f32 %v1293, 0.0
  %v1422 = vmax.f32 %v1294, 0.0
  %v1423 = vmax.f32 %v1295, 0.0
  %v1424 = vmax.f32 %v1296, 0.0
  %v1425 = vmax.f32 %v1297, 0.0
  %v1426 = vmax.f32 %v1298, 0.0
  %v1427 = vmax.f32 %v1299, 0.0
  %v1428 = vmax.f32 %v1300, 0.0
  %v1429 = vmax.f32 %v1301, 0.0
  %v1430 = vmax.f32 %v1302, 0.0
  %v1431 = vmax.f32 %v1303, 0.0
  %v1432 = vmax.f32 %v1304, 0.0
  %v1433 = vmax.f32 %v1305, 0.0
  %v1434 = vmax.f32 %v1306, 0.0
  %v1435 = vmax.f32 %v1307, 0.0
  %v1436 = vmax.f32 %v1308, 0.0
  %v1437 = vmax.f32 %v1309, 0.0
  %v1438 = vmax.f32 %v1310, 0.0
  %v1439 = vmax.f32 %v1311, 0.0
  %v1440 = vmax.f32 %v1312, 0.0
  %v1441 = vmax.f32 %v1313, 0.0
  %v1442 = vmax.f32 %v1314, 0.0
  %v1443 = vmax.f32 %v1315, 0.0
  %v1444 = vmax.f32 %v1316, 0.0
  %v1445 = vmax.f32 %v1317, 0.0
  %v1446 = vmax.f32 %v1318, 0.0
  %v1447 = vmax.f32 %v1319, 0.0
  %v1448 = vmax.f32 %v1320, 0.0
  %v1449 = vmax.f32 %v1321, 0.0
  %v1450 = vmax.f32 %v1322, 0.0
  %v1451 = vmax.f32 %v1323, 0.0
  %v1452 = vmax.f32 %v1324, 0.0
  %v1453 = vmax.f32 %v1325, 0.0
  %v1454 = vmax.f32 %v1326, 0.0
  %v1455 = vmax.f32 %v1327, 0.0
  %v1456 = vmax.f32 %v1328, 0.0
  %v1457 = vmax.f32 %v1329, 0.0
  %v1458 = vmax.f32 %v1330, 0.0
  %v1459 = vmax.f32 %v1331, 0.0
  %v1460 = vmax.f32 %v1332, 0.0
  %v1461 = vmax.f32 %v1333, 0.0
  %v1462 = vmax.f32 %v1334, 0.0
  %v1463 = vmax.f32 %v1335, 0.0
  %v1464 = vmax.f32 %v1336, 0.0
  %v1465 = vmax.f32 %v1337, 0.0
  %v1466 = vmax.f32 %v1338, 0.0
  %v1467 = vmax.f32 %v1339, 0.0
  %v1468 = vmax.f32 %v1340, 0.0
  %v1469 = vmax.f32 %v1341, 0.0
  %v1470 = vmax.f32 %v1342, 0.0
  %v1471 = vmax.f32 %v1343, 0.0
  %v1472 = vmax.f32 %v1344, 0.0
  %v1473 = vmax.f32 %v1345, 0.0
  %v1474 = vmax.f32 %v1346, 0.0
  %v1475 = vmax.f32 %v1347, 0.0
  %v1476 = vmax.f32 %v1348, 0.0
  %v1477 = vmax.f32 %v1349, 0.0
  %v1478 = vmax.f32 %v1350, 0.0
  %v1479 = vmax.f32 %v1351, 0.0
  %v1480 = vmax.f32 %v1352, 0.0
  %v1481 = vmax.f32 %v1353, 0.0
  %v1482 = vmax.f32 %v1354, 0.0
  %v1483 = vmax.f32 %v1355, 0.0
  %v1484 = vmax.f32 %v1356, 0.0
  %v1485 = vmax.f32 %v1357, 0.0
  %v1486 = vmax.f32 %v1358, 0.0
  %v1487 = vmax.f32 %v1359, 0.0
  %v1488 = vmax.f32 %v1360, 0.0
  %v1489 = vmax.f32 %v1361, 0.0
  %v1490 = vmax.f32 %v1362, 0.0
  %v1491 = vmax.f32 %v1363, 0.0
  %v1492 = vmax.f32 %v1364, 0.0
  %v1493 = vmax.f32 %v1365, 0.0
  %v1494 = vmax.f32 %v1366, 0.0
  %v1495 = vmax.f32 %v1367, 0.0
  %v1496 = vmax.f32 %v1368, 0.0
  %v1497 = vmax.f32 %v1369, 0.0
  %v1498 = vmax.f32 %v1370, 0.0
  %v1499 = vmax.f32 %v1371, 0.0
  %v1500 = vmax.f32 %v1372, 0.0
  %v1501 = vmax.f32 %v1373, 0.0
  %v1502 = vmax.f32 %v1374, 0.0
  %v1503 = vmax.f32 %v1375, 0.0
  %v1504 = vmax.f32 %v1376, 0.0
  %v1505 = vmax.f32 %v1377, 0.0
  %v1506 = vmax.f32 %v1378, 0.0
  %v1507 = vmax.f32 %v1379, 0.0
  %v1508 = vmax.f32 %v1380, 0.0
  %v1509 = vmax.f32 %v1381, 0.0
  %v1510 = vmax.f32 %v1382, 0.0
  %v1511 = vmax.f32 %v1383, 0.0
  %v1512 = vmax.f32 %v1384, 0.0
  %v1513 = vmax.f32 %v1385, 0.0
  %v1514 = vmax.f32 %v1386, 0.0
  %v1515 = vmax.f32 %v1387, 0.0
  %v1516 = vmax.f32 %v1388, 0.0
  %v1517 = vmax.f32 %v1389, 0.0
  %v1518 = vmax.f32 %v1390, 0.0
  %v1519 = vmax.f32 %v1391, 0.0
  %v1520 = vmax.f32 %v1392, 0.0
  %v1521 = vmax.f32 %v1393, 0.0
  %v1522 = vmax.f32 %v1394, 0.0
  %v1523 = vmax.f32 %v1395, 0.0
  %v1524 = vmax.f32 %v1396, 0.0
  %v1525 = vmax.f32 %v1397, 0.0
  %v1526 = vmax.f32 %v1398, 0.0
  %v1527 = vmax.f32 %v1399, 0.0
  %v1528 = vmax.f32 %v1400, 0.0
  %v1529 = vmax.f32 %v1401, 0.0
  %v1530 = vmax.f32 %v1402, 0.0
  %v1531 = vmax.f32 %v1403, 0.0
  %v1532 = vmax.f32 %v1404, 0.0
  %v1533 = vmax.f32 %v1405, 0.0
  %v1534 = vmax.f32 %v1406, 0.0
  %v1535 = vmax.f32 %v1407, 0.0
  %v1536 = vmax.f32 %v1408, 0.0
  %v1537 = vpack.c.bf16 %v1410, %v1409
  %v1538 = vpack.c.bf16 %v1412, %v1411
  %v1539 = vpack.c.bf16 %v1414, %v1413
  %v1540 = vpack.c.bf16 %v1416, %v1415
  %v1541 = vpack.c.bf16 %v1418, %v1417
  %v1542 = vpack.c.bf16 %v1420, %v1419
  %v1543 = vpack.c.bf16 %v1422, %v1421
  %v1544 = vpack.c.bf16 %v1424, %v1423
  %v1545 = vpack.c.bf16 %v1426, %v1425
  %v1546 = vpack.c.bf16 %v1428, %v1427
  %v1547 = vpack.c.bf16 %v1430, %v1429
  %v1548 = vpack.c.bf16 %v1432, %v1431
  %v1549 = vpack.c.bf16 %v1434, %v1433
  %v1550 = vpack.c.bf16 %v1436, %v1435
  %v1551 = vpack.c.bf16 %v1438, %v1437
  %v1552 = vpack.c.bf16 %v1440, %v1439
  %v1553 = vpack.c.bf16 %v1442, %v1441
  %v1554 = vpack.c.bf16 %v1444, %v1443
  %v1555 = vpack.c.bf16 %v1446, %v1445
  %v1556 = vpack.c.bf16 %v1448, %v1447
  %v1557 = vpack.c.bf16 %v1450, %v1449
  %v1558 = vpack.c.bf16 %v1452, %v1451
  %v1559 = vpack.c.bf16 %v1454, %v1453
  %v1560 = vpack.c.bf16 %v1456, %v1455
  %v1561 = vpack.c.bf16 %v1458, %v1457
  %v1562 = vpack.c.bf16 %v1460, %v1459
  %v1563 = vpack.c.bf16 %v1462, %v1461
  %v1564 = vpack.c.bf16 %v1464, %v1463
  %v1565 = vpack.c.bf16 %v1466, %v1465
  %v1566 = vpack.c.bf16 %v1468, %v1467
  %v1567 = vpack.c.bf16 %v1470, %v1469
  %v1568 = vpack.c.bf16 %v1472, %v1471
  %v1569 = vpack.c.bf16 %v1474, %v1473
  %v1570 = vpack.c.bf16 %v1476, %v1475
  %v1571 = vpack.c.bf16 %v1478, %v1477
  %v1572 = vpack.c.bf16 %v1480, %v1479
  %v1573 = vpack.c.bf16 %v1482, %v1481
  %v1574 = vpack.c.bf16 %v1484, %v1483
  %v1575 = vpack.c.bf16 %v1486, %v1485
  %v1576 = vpack.c.bf16 %v1488, %v1487
  %v1577 = vpack.c.bf16 %v1490, %v1489
  %v1578 = vpack.c.bf16 %v1492, %v1491
  %v1579 = vpack.c.bf16 %v1494, %v1493
  %v1580 = vpack.c.bf16 %v1496, %v1495
  %v1581 = vpack.c.bf16 %v1498, %v1497
  %v1582 = vpack.c.bf16 %v1500, %v1499
  %v1583 = vpack.c.bf16 %v1502, %v1501
  %v1584 = vpack.c.bf16 %v1504, %v1503
  %v1585 = vpack.c.bf16 %v1506, %v1505
  %v1586 = vpack.c.bf16 %v1508, %v1507
  %v1587 = vpack.c.bf16 %v1510, %v1509
  %v1588 = vpack.c.bf16 %v1512, %v1511
  %v1589 = vpack.c.bf16 %v1514, %v1513
  %v1590 = vpack.c.bf16 %v1516, %v1515
  %v1591 = vpack.c.bf16 %v1518, %v1517
  %v1592 = vpack.c.bf16 %v1520, %v1519
  %v1593 = vpack.c.bf16 %v1522, %v1521
  %v1594 = vpack.c.bf16 %v1524, %v1523
  %v1595 = vpack.c.bf16 %v1526, %v1525
  %v1596 = vpack.c.bf16 %v1528, %v1527
  %v1597 = vpack.c.bf16 %v1530, %v1529
  %v1598 = vpack.c.bf16 %v1532, %v1531
  %v1599 = vpack.c.bf16 %v1534, %v1533
  %v1600 = vpack.c.bf16 %v1536, %v1535
  %v1665 = vunpack.c.l.b16 %v1537
  %v1666 = vunpack.c.h.b16 %v1537
  %v1667 = vunpack.c.l.b16 %v1538
  %v1668 = vunpack.c.h.b16 %v1538
  %v1669 = vunpack.c.l.b16 %v1539
  %v1670 = vunpack.c.h.b16 %v1539
  %v1671 = vunpack.c.l.b16 %v1540
  %v1672 = vunpack.c.h.b16 %v1540
  %v1673 = vunpack.c.l.b16 %v1541
  %v1674 = vunpack.c.h.b16 %v1541
  %v1675 = vunpack.c.l.b16 %v1542
  %v1676 = vunpack.c.h.b16 %v1542
  %v1677 = vunpack.c.l.b16 %v1543
  %v1678 = vunpack.c.h.b16 %v1543
  %v1679 = vunpack.c.l.b16 %v1544
  %v1680 = vunpack.c.h.b16 %v1544
  %v1681 = vunpack.c.l.b16 %v1545
  %v1682 = vunpack.c.h.b16 %v1545
  %v1683 = vunpack.c.l.b16 %v1546
  %v1684 = vunpack.c.h.b16 %v1546
  %v1685 = vunpack.c.l.b16 %v1547
  %v1686 = vunpack.c.h.b16 %v1547
  %v1687 = vunpack.c.l.b16 %v1548
  %v1688 = vunpack.c.h.b16 %v1548
  %v1689 = vunpack.c.l.b16 %v1549
  %v1690 = vunpack.c.h.b16 %v1549
  %v1691 = vunpack.c.l.b16 %v1550
  %v1692 = vunpack.c.h.b16 %v1550
  %v1693 = vunpack.c.l.b16 %v1551
  %v1694 = vunpack.c.h.b16 %v1551
  %v1695 = vunpack.c.l.b16 %v1552
  %v1696 = vunpack.c.h.b16 %v1552
  %v1697 = vunpack.c.l.b16 %v1553
  %v1698 = vunpack.c.h.b16 %v1553
  %v1699 = vunpack.c.l.b16 %v1554
  %v1700 = vunpack.c.h.b16 %v1554
  %v1701 = vunpack.c.l.b16 %v1555
  %v1702 = vunpack.c.h.b16 %v1555
  %v1703 = vunpack.c.l.b16 %v1556
  %v1704 = vunpack.c.h.b16 %v1556
  %v1705 = vunpack.c.l.b16 %v1557
  %v1706 = vunpack.c.h.b16 %v1557
  %v1707 = vunpack.c.l.b16 %v1558
  %v1708 = vunpack.c.h.b16 %v1558
  %v1709 = vunpack.c.l.b16 %v1559
  %v1710 = vunpack.c.h.b16 %v1559
  %v1711 = vunpack.c.l.b16 %v1560
  %v1712 = vunpack.c.h.b16 %v1560
  %v1713 = vunpack.c.l.b16 %v1561
  %v1714 = vunpack.c.h.b16 %v1561
  %v1715 = vunpack.c.l.b16 %v1562
  %v1716 = vunpack.c.h.b16 %v1562
  %v1717 = vunpack.c.l.b16 %v1563
  %v1718 = vunpack.c.h.b16 %v1563
  %v1719 = vunpack.c.l.b16 %v1564
  %v1720 = vunpack.c.h.b16 %v1564
  %v1721 = vunpack.c.l.b16 %v1565
  %v1722 = vunpack.c.h.b16 %v1565
  %v1723 = vunpack.c.l.b16 %v1566
  %v1724 = vunpack.c.h.b16 %v1566
  %v1725 = vunpack.c.l.b16 %v1567
  %v1726 = vunpack.c.h.b16 %v1567
  %v1727 = vunpack.c.l.b16 %v1568
  %v1728 = vunpack.c.h.b16 %v1568
  %v1729 = vunpack.c.l.b16 %v1569
  %v1730 = vunpack.c.h.b16 %v1569
  %v1731 = vunpack.c.l.b16 %v1570
  %v1732 = vunpack.c.h.b16 %v1570
  %v1733 = vunpack.c.l.b16 %v1571
  %v1734 = vunpack.c.h.b16 %v1571
  %v1735 = vunpack.c.l.b16 %v1572
  %v1736 = vunpack.c.h.b16 %v1572
  %v1737 = vunpack.c.l.b16 %v1573
  %v1738 = vunpack.c.h.b16 %v1573
  %v1739 = vunpack.c.l.b16 %v1574
  %v1740 = vunpack.c.h.b16 %v1574
  %v1741 = vunpack.c.l.b16 %v1575
  %v1742 = vunpack.c.h.b16 %v1575
  %v1743 = vunpack.c.l.b16 %v1576
  %v1744 = vunpack.c.h.b16 %v1576
  %v1745 = vunpack.c.l.b16 %v1577
  %v1746 = vunpack.c.h.b16 %v1577
  %v1747 = vunpack.c.l.b16 %v1578
  %v1748 = vunpack.c.h.b16 %v1578
  %v1749 = vunpack.c.l.b16 %v1579
  %v1750 = vunpack.c.h.b16 %v1579
  %v1751 = vunpack.c.l.b16 %v1580
  %v1752 = vunpack.c.h.b16 %v1580
  %v1753 = vunpack.c.l.b16 %v1581
  %v1754 = vunpack.c.h.b16 %v1581
  %v1755 = vunpack.c.l.b16 %v1582
  %v1756 = vunpack.c.h.b16 %v1582
  %v1757 = vunpack.c.l.b16 %v1583
  %v1758 = vunpack.c.h.b16 %v1583
  %v1759 = vunpack.c.l.b16 %v1584
  %v1760 = vunpack.c.h.b16 %v1584
  %v1761 = vunpack.c.l.b16 %v1585
  %v1762 = vunpack.c.h.b16 %v1585
  %v1763 = vunpack.c.l.b16 %v1586
  %v1764 = vunpack.c.h.b16 %v1586
  %v1765 = vunpack.c.l.b16 %v1587
  %v1766 = vunpack.c.h.b16 %v1587
  %v1767 = vunpack.c.l.b16 %v1588
  %v1768 = vunpack.c.h.b16 %v1588
  %v1769 = vunpack.c.l.b16 %v1589
  %v1770 = vunpack.c.h.b16 %v1589
  %v1771 = vunpack.c.l.b16 %v1590
  %v1772 = vunpack.c.h.b16 %v1590
  %v1773 = vunpack.c.l.b16 %v1591
  %v1774 = vunpack.c.h.b16 %v1591
  %v1775 = vunpack.c.l.b16 %v1592
  %v1776 = vunpack.c.h.b16 %v1592
  %v1777 = vunpack.c.l.b16 %v1593
  %v1778 = vunpack.c.h.b16 %v1593
  %v1779 = vunpack.c.l.b16 %v1594
  %v1780 = vunpack.c.h.b16 %v1594
  %v1781 = vunpack.c.l.b16 %v1595
  %v1782 = vunpack.c.h.b16 %v1595
  %v1783 = vunpack.c.l.b16 %v1596
  %v1784 = vunpack.c.h.b16 %v1596
  %v1785 = vunpack.c.l.b16 %v1597
  %v1786 = vunpack.c.h.b16 %v1597
  %v1787 = vunpack.c.l.b16 %v1598
  %v1788 = vunpack.c.h.b16 %v1598
  %v1789 = vunpack.c.l.b16 %v1599
  %v1790 = vunpack.c.h.b16 %v1599
  %v1791 = vunpack.c.l.b16 %v1600
  %v1792 = vunpack.c.h.b16 %v1600
  %v1793 = vpack.c.b16 %v1665, %v1665
  %v1794 = vpack.c.b16 %v1666, %v1666
  %v1795 = vpack.c.b16 %v1667, %v1667
  %v1796 = vpack.c.b16 %v1668, %v1668
  %v1797 = vpack.c.b16 %v1669, %v1669
  %v1798 = vpack.c.b16 %v1670, %v1670
  %v1799 = vpack.c.b16 %v1671, %v1671
  %v1800 = vpack.c.b16 %v1672, %v1672
  %v1801 = vpack.c.b16 %v1673, %v1673
  %v1802 = vpack.c.b16 %v1674, %v1674
  %v1803 = vpack.c.b16 %v1675, %v1675
  %v1804 = vpack.c.b16 %v1676, %v1676
  %v1805 = vpack.c.b16 %v1677, %v1677
  %v1806 = vpack.c.b16 %v1678, %v1678
  %v1807 = vpack.c.b16 %v1679, %v1679
  %v1808 = vpack.c.b16 %v1680, %v1680
  %v1809 = vpack.c.b16 %v1681, %v1681
  %v1810 = vpack.c.b16 %v1682, %v1682
  %v1811 = vpack.c.b16 %v1683, %v1683
  %v1812 = vpack.c.b16 %v1684, %v1684
  %v1813 = vpack.c.b16 %v1685, %v1685
  %v1814 = vpack.c.b16 %v1686, %v1686
  %v1815 = vpack.c.b16 %v1687, %v1687
  %v1816 = vpack.c.b16 %v1688, %v1688
  %v1817 = vpack.c.b16 %v1689, %v1689
  %v1818 = vpack.c.b16 %v1690, %v1690
  %v1819 = vpack.c.b16 %v1691, %v1691
  %v1820 = vpack.c.b16 %v1692, %v1692
  %v1821 = vpack.c.b16 %v1693, %v1693
  %v1822 = vpack.c.b16 %v1694, %v1694
  %v1823 = vpack.c.b16 %v1695, %v1695
  %v1824 = vpack.c.b16 %v1696, %v1696
  %v1825 = vpack.c.b16 %v1697, %v1697
  %v1826 = vpack.c.b16 %v1698, %v1698
  %v1827 = vpack.c.b16 %v1699, %v1699
  %v1828 = vpack.c.b16 %v1700, %v1700
  %v1829 = vpack.c.b16 %v1701, %v1701
  %v1830 = vpack.c.b16 %v1702, %v1702
  %v1831 = vpack.c.b16 %v1703, %v1703
  %v1832 = vpack.c.b16 %v1704, %v1704
  %v1833 = vpack.c.b16 %v1705, %v1705
  %v1834 = vpack.c.b16 %v1706, %v1706
  %v1835 = vpack.c.b16 %v1707, %v1707
  %v1836 = vpack.c.b16 %v1708, %v1708
  %v1837 = vpack.c.b16 %v1709, %v1709
  %v1838 = vpack.c.b16 %v1710, %v1710
  %v1839 = vpack.c.b16 %v1711, %v1711
  %v1840 = vpack.c.b16 %v1712, %v1712
  %v1841 = vpack.c.b16 %v1713, %v1713
  %v1842 = vpack.c.b16 %v1714, %v1714
  %v1843 = vpack.c.b16 %v1715, %v1715
  %v1844 = vpack.c.b16 %v1716, %v1716
  %v1845 = vpack.c.b16 %v1717, %v1717
  %v1846 = vpack.c.b16 %v1718, %v1718
  %v1847 = vpack.c.b16 %v1719, %v1719
  %v1848 = vpack.c.b16 %v1720, %v1720
  %v1849 = vpack.c.b16 %v1721, %v1721
  %v1850 = vpack.c.b16 %v1722, %v1722
  %v1851 = vpack.c.b16 %v1723, %v1723
  %v1852 = vpack.c.b16 %v1724, %v1724
  %v1853 = vpack.c.b16 %v1725, %v1725
  %v1854 = vpack.c.b16 %v1726, %v1726
  %v1855 = vpack.c.b16 %v1727, %v1727
  %v1856 = vpack.c.b16 %v1728, %v1728
  %v1857 = vpack.c.b16 %v1729, %v1729
  %v1858 = vpack.c.b16 %v1730, %v1730
  %v1859 = vpack.c.b16 %v1731, %v1731
  %v1860 = vpack.c.b16 %v1732, %v1732
  %v1861 = vpack.c.b16 %v1733, %v1733
  %v1862 = vpack.c.b16 %v1734, %v1734
  %v1863 = vpack.c.b16 %v1735, %v1735
  %v1864 = vpack.c.b16 %v1736, %v1736
  %v1865 = vpack.c.b16 %v1737, %v1737
  %v1866 = vpack.c.b16 %v1738, %v1738
  %v1867 = vpack.c.b16 %v1739, %v1739
  %v1868 = vpack.c.b16 %v1740, %v1740
  %v1869 = vpack.c.b16 %v1741, %v1741
  %v1870 = vpack.c.b16 %v1742, %v1742
  %v1871 = vpack.c.b16 %v1743, %v1743
  %v1872 = vpack.c.b16 %v1744, %v1744
  %v1873 = vpack.c.b16 %v1745, %v1745
  %v1874 = vpack.c.b16 %v1746, %v1746
  %v1875 = vpack.c.b16 %v1747, %v1747
  %v1876 = vpack.c.b16 %v1748, %v1748
  %v1877 = vpack.c.b16 %v1749, %v1749
  %v1878 = vpack.c.b16 %v1750, %v1750
  %v1879 = vpack.c.b16 %v1751, %v1751
  %v1880 = vpack.c.b16 %v1752, %v1752
  %v1881 = vpack.c.b16 %v1753, %v1753
  %v1882 = vpack.c.b16 %v1754, %v1754
  %v1883 = vpack.c.b16 %v1755, %v1755
  %v1884 = vpack.c.b16 %v1756, %v1756
  %v1885 = vpack.c.b16 %v1757, %v1757
  %v1886 = vpack.c.b16 %v1758, %v1758
  %v1887 = vpack.c.b16 %v1759, %v1759
  %v1888 = vpack.c.b16 %v1760, %v1760
  %v1889 = vpack.c.b16 %v1761, %v1761
  %v1890 = vpack.c.b16 %v1762, %v1762
  %v1891 = vpack.c.b16 %v1763, %v1763
  %v1892 = vpack.c.b16 %v1764, %v1764
  %v1893 = vpack.c.b16 %v1765, %v1765
  %v1894 = vpack.c.b16 %v1766, %v1766
  %v1895 = vpack.c.b16 %v1767, %v1767
  %v1896 = vpack.c.b16 %v1768, %v1768
  %v1897 = vpack.c.b16 %v1769, %v1769
  %v1898 = vpack.c.b16 %v1770, %v1770
  %v1899 = vpack.c.b16 %v1771, %v1771
  %v1900 = vpack.c.b16 %v1772, %v1772
  %v1901 = vpack.c.b16 %v1773, %v1773
  %v1902 = vpack.c.b16 %v1774, %v1774
  %v1903 = vpack.c.b16 %v1775, %v1775
  %v1904 = vpack.c.b16 %v1776, %v1776
  %v1905 = vpack.c.b16 %v1777, %v1777
  %v1906 = vpack.c.b16 %v1778, %v1778
  %v1907 = vpack.c.b16 %v1779, %v1779
  %v1908 = vpack.c.b16 %v1780, %v1780
  %v1909 = vpack.c.b16 %v1781, %v1781
  %v1910 = vpack.c.b16 %v1782, %v1782
  %v1911 = vpack.c.b16 %v1783, %v1783
  %v1912 = vpack.c.b16 %v1784, %v1784
  %v1913 = vpack.c.b16 %v1785, %v1785
  %v1914 = vpack.c.b16 %v1786, %v1786
  %v1915 = vpack.c.b16 %v1787, %v1787
  %v1916 = vpack.c.b16 %v1788, %v1788
  %v1917 = vpack.c.b16 %v1789, %v1789
  %v1918 = vpack.c.b16 %v1790, %v1790
  %v1919 = vpack.c.b16 %v1791, %v1791
  %v1920 = vpack.c.b16 %v1792, %v1792
  %2049 = vst [vmem:[%s4] sm:$0xf] %v1793
  %2050 = vst [vmem:[%s4 + $0x4] sm:$0xf] %v1794
  %2051 = vst [vmem:[%s4 + $0x8] sm:$0xf] %v1795
  %2052 = vst [vmem:[%s4 + $0xc] sm:$0xf] %v1796
  %2053 = vst [vmem:[%s4 + $0x10] sm:$0xf] %v1797
  %2054 = vst [vmem:[%s4 + $0x14] sm:$0xf] %v1798
  %2055 = vst [vmem:[%s4 + $0x18] sm:$0xf] %v1799
  %2056 = vst [vmem:[%s4 + $0x1c] sm:$0xf] %v1800
  %2057 = vst [vmem:[%s4 + $0x20] sm:$0xf] %v1801
  %2058 = vst [vmem:[%s4 + $0x24] sm:$0xf] %v1802
  %2059 = vst [vmem:[%s4 + $0x28] sm:$0xf] %v1803
  %2060 = vst [vmem:[%s4 + $0x2c] sm:$0xf] %v1804
  %2061 = vst [vmem:[%s4 + $0x30] sm:$0xf] %v1805
  %2062 = vst [vmem:[%s4 + $0x34] sm:$0xf] %v1806
  %2063 = vst [vmem:[%s4 + $0x38] sm:$0xf] %v1807
  %2064 = vst [vmem:[%s4 + $0x3c] sm:$0xf] %v1808
  %2065 = vst [vmem:[%s4 + $0x40] sm:$0xf] %v1809
  %2066 = vst [vmem:[%s4 + $0x44] sm:$0xf] %v1810
  %2067 = vst [vmem:[%s4 + $0x48] sm:$0xf] %v1811
  %2068 = vst [vmem:[%s4 + $0x4c] sm:$0xf] %v1812
  %2069 = vst [vmem:[%s4 + $0x50] sm:$0xf] %v1813
  %2070 = vst [vmem:[%s4 + $0x54] sm:$0xf] %v1814
  %2071 = vst [vmem:[%s4 + $0x58] sm:$0xf] %v1815
  %2072 = vst [vmem:[%s4 + $0x5c] sm:$0xf] %v1816
  %2073 = vst [vmem:[%s4 + $0x60] sm:$0xf] %v1817
  %2074 = vst [vmem:[%s4 + $0x64] sm:$0xf] %v1818
  %2075 = vst [vmem:[%s4 + $0x68] sm:$0xf] %v1819
  %2076 = vst [vmem:[%s4 + $0x6c] sm:$0xf] %v1820
  %2077 = vst [vmem:[%s4 + $0x70] sm:$0xf] %v1821
  %2078 = vst [vmem:[%s4 + $0x74] sm:$0xf] %v1822
  %2079 = vst [vmem:[%s4 + $0x78] sm:$0xf] %v1823
  %2080 = vst [vmem:[%s4 + $0x7c] sm:$0xf] %v1824
  %2081 = vst [vmem:[%s4 + $0x80] sm:$0xf] %v1825
  %2082 = vst [vmem:[%s4 + $0x84] sm:$0xf] %v1826
  %2083 = vst [vmem:[%s4 + $0x88] sm:$0xf] %v1827
  %2084 = vst [vmem:[%s4 + $0x8c] sm:$0xf] %v1828
  %2085 = vst [vmem:[%s4 + $0x90] sm:$0xf] %v1829
  %2086 = vst [vmem:[%s4 + $0x94] sm:$0xf] %v1830
  %2087 = vst [vmem:[%s4 + $0x98] sm:$0xf] %v1831
  %2088 = vst [vmem:[%s4 + $0x9c] sm:$0xf] %v1832
  %2089 = vst [vmem:[%s4 + $0xa0] sm:$0xf] %v1833
  %2090 = vst [vmem:[%s4 + $0xa4] sm:$0xf] %v1834
  %2091 = vst [vmem:[%s4 + $0xa8] sm:$0xf] %v1835
  %2092 = vst [vmem:[%s4 + $0xac] sm:$0xf] %v1836
  %2093 = vst [vmem:[%s4 + $0xb0] sm:$0xf] %v1837
  %2094 = vst [vmem:[%s4 + $0xb4] sm:$0xf] %v1838
  %2095 = vst [vmem:[%s4 + $0xb8] sm:$0xf] %v1839
  %2096 = vst [vmem:[%s4 + $0xbc] sm:$0xf] %v1840
  %2097 = vst [vmem:[%s4 + $0xc0] sm:$0xf] %v1841
  %2098 = vst [vmem:[%s4 + $0xc4] sm:$0xf] %v1842
  %2099 = vst [vmem:[%s4 + $0xc8] sm:$0xf] %v1843
  %2100 = vst [vmem:[%s4 + $0xcc] sm:$0xf] %v1844
  %2101 = vst [vmem:[%s4 + $0xd0] sm:$0xf] %v1845
  %2102 = vst [vmem:[%s4 + $0xd4] sm:$0xf] %v1846
  %2103 = vst [vmem:[%s4 + $0xd8] sm:$0xf] %v1847
  %2104 = vst [vmem:[%s4 + $0xdc] sm:$0xf] %v1848
  %2105 = vst [vmem:[%s4 + $0xe0] sm:$0xf] %v1849
  %2106 = vst [vmem:[%s4 + $0xe4] sm:$0xf] %v1850
  %2107 = vst [vmem:[%s4 + $0xe8] sm:$0xf] %v1851
  %2108 = vst [vmem:[%s4 + $0xec] sm:$0xf] %v1852
  %2109 = vst [vmem:[%s4 + $0xf0] sm:$0xf] %v1853
  %2110 = vst [vmem:[%s4 + $0xf4] sm:$0xf] %v1854
  %2111 = vst [vmem:[%s4 + $0xf8] sm:$0xf] %v1855
  %2112 = vst [vmem:[%s4 + $0xfc] sm:$0xf] %v1856
  %2113 = vst [vmem:[%s4 + $0x100] sm:$0xf] %v1857
  %2114 = vst [vmem:[%s4 + $0x104] sm:$0xf] %v1858
  %2115 = vst [vmem:[%s4 + $0x108] sm:$0xf] %v1859
  %2116 = vst [vmem:[%s4 + $0x10c] sm:$0xf] %v1860
  %2117 = vst [vmem:[%s4 + $0x110] sm:$0xf] %v1861
  %2118 = vst [vmem:[%s4 + $0x114] sm:$0xf] %v1862
  %2119 = vst [vmem:[%s4 + $0x118] sm:$0xf] %v1863
  %2120 = vst [vmem:[%s4 + $0x11c] sm:$0xf] %v1864
  %2121 = vst [vmem:[%s4 + $0x120] sm:$0xf] %v1865
  %2122 = vst [vmem:[%s4 + $0x124] sm:$0xf] %v1866
  %2123 = vst [vmem:[%s4 + $0x128] sm:$0xf] %v1867
  %2124 = vst [vmem:[%s4 + $0x12c] sm:$0xf] %v1868
  %2125 = vst [vmem:[%s4 + $0x130] sm:$0xf] %v1869
  %2126 = vst [vmem:[%s4 + $0x134] sm:$0xf] %v1870
  %2127 = vst [vmem:[%s4 + $0x138] sm:$0xf] %v1871
  %2128 = vst [vmem:[%s4 + $0x13c] sm:$0xf] %v1872
  %2129 = vst [vmem:[%s4 + $0x140] sm:$0xf] %v1873
  %2130 = vst [vmem:[%s4 + $0x144] sm:$0xf] %v1874
  %2131 = vst [vmem:[%s4 + $0x148] sm:$0xf] %v1875
  %2132 = vst [vmem:[%s4 + $0x14c] sm:$0xf] %v1876
  %2133 = vst [vmem:[%s4 + $0x150] sm:$0xf] %v1877
  %2134 = vst [vmem:[%s4 + $0x154] sm:$0xf] %v1878
  %2135 = vst [vmem:[%s4 + $0x158] sm:$0xf] %v1879
  %2136 = vst [vmem:[%s4 + $0x15c] sm:$0xf] %v1880
  %2137 = vst [vmem:[%s4 + $0x160] sm:$0xf] %v1881
  %2138 = vst [vmem:[%s4 + $0x164] sm:$0xf] %v1882
  %2139 = vst [vmem:[%s4 + $0x168] sm:$0xf] %v1883
  %2140 = vst [vmem:[%s4 + $0x16c] sm:$0xf] %v1884
  %2141 = vst [vmem:[%s4 + $0x170] sm:$0xf] %v1885
  %2142 = vst [vmem:[%s4 + $0x174] sm:$0xf] %v1886
  %2143 = vst [vmem:[%s4 + $0x178] sm:$0xf] %v1887
  %2144 = vst [vmem:[%s4 + $0x17c] sm:$0xf] %v1888
  %2145 = vst [vmem:[%s4 + $0x180] sm:$0xf] %v1889
  %2146 = vst [vmem:[%s4 + $0x184] sm:$0xf] %v1890
  %2147 = vst [vmem:[%s4 + $0x188] sm:$0xf] %v1891
  %2148 = vst [vmem:[%s4 + $0x18c] sm:$0xf] %v1892
  %2149 = vst [vmem:[%s4 + $0x190] sm:$0xf] %v1893
  %2150 = vst [vmem:[%s4 + $0x194] sm:$0xf] %v1894
  %2151 = vst [vmem:[%s4 + $0x198] sm:$0xf] %v1895
  %2152 = vst [vmem:[%s4 + $0x19c] sm:$0xf] %v1896
  %2153 = vst [vmem:[%s4 + $0x1a0] sm:$0xf] %v1897
  %2154 = vst [vmem:[%s4 + $0x1a4] sm:$0xf] %v1898
  %2155 = vst [vmem:[%s4 + $0x1a8] sm:$0xf] %v1899
  %2156 = vst [vmem:[%s4 + $0x1ac] sm:$0xf] %v1900
  %2157 = vst [vmem:[%s4 + $0x1b0] sm:$0xf] %v1901
  %2158 = vst [vmem:[%s4 + $0x1b4] sm:$0xf] %v1902
  %2159 = vst [vmem:[%s4 + $0x1b8] sm:$0xf] %v1903
  %2160 = vst [vmem:[%s4 + $0x1bc] sm:$0xf] %v1904
  %2161 = vst [vmem:[%s4 + $0x1c0] sm:$0xf] %v1905
  %2162 = vst [vmem:[%s4 + $0x1c4] sm:$0xf] %v1906
  %2163 = vst [vmem:[%s4 + $0x1c8] sm:$0xf] %v1907
  %2164 = vst [vmem:[%s4 + $0x1cc] sm:$0xf] %v1908
  %2165 = vst [vmem:[%s4 + $0x1d0] sm:$0xf] %v1909
  %2166 = vst [vmem:[%s4 + $0x1d4] sm:$0xf] %v1910
  %2167 = vst [vmem:[%s4 + $0x1d8] sm:$0xf] %v1911
  %2168 = vst [vmem:[%s4 + $0x1dc] sm:$0xf] %v1912
  %2169 = vst [vmem:[%s4 + $0x1e0] sm:$0xf] %v1913
  %2170 = vst [vmem:[%s4 + $0x1e4] sm:$0xf] %v1914
  %2171 = vst [vmem:[%s4 + $0x1e8] sm:$0xf] %v1915
  %2172 = vst [vmem:[%s4 + $0x1ec] sm:$0xf] %v1916
  %2173 = vst [vmem:[%s4 + $0x1f0] sm:$0xf] %v1917
  %2174 = vst [vmem:[%s4 + $0x1f4] sm:$0xf] %v1918
  %2175 = vst [vmem:[%s4 + $0x1f8] sm:$0xf] %v1919
  %2176 = vst [vmem:[%s4 + $0x1fc] sm:$0xf] %v1920
  // Predicated region
  $region18: #{up_conv_forward.3} parent=0 // pred_check
    _
  $region19: #{up_conv_forward.3} parent=0 // pred_check_branch
    %2178 = sbr.rel (0) target = $region21
  $region20: #{up_conv_forward.3} parent=0 // pred_region
    _
  $region21: #{up_conv_forward.3} parent=0 // pred_fallthru
    _
  // Predicated region
  $region22: #{up_conv_forward.3} parent=0 // pred_check
    _
  $region23: #{up_conv_forward.3} parent=0 // pred_check_branch
    %2180 = sbr.rel (0) target = $region25
  $region24: #{up_conv_forward.3} parent=0 // pred_region
    _
  $region25: #{up_conv_forward.3} parent=0 // pred_fallthru
    _

</llo_original>
